<compile_context>
chip_gen: v6e
topology: v6e:2x2x1
jax: 0.10.0
libtpu: 0.0.40
codegen_flags: <defaults>
</compile_context>

<pallas_src>
import jax
import jax.numpy as jnp
from jax import lax
from jax.experimental import pallas as pl
from jax.experimental.pallas import tpu as pltpu


# ----------------------------------------------------------------------------
# Fused kernel: proj 3x3 conv -> (B,R)-stacked depthwise 3x3 -> block-diagonal
# pointwise 1x1, emitting both branch outputs in channels-first layout.
# ----------------------------------------------------------------------------
def _fused_patch_embed_kernel(xp_ref, w27_ref, dww_ref, pw_ref, pwb_ref,
                              ob_ref, or_ref, xfp_ref):
    # xp_ref : (1, H+2, W+2, Cin)   zero-padded input, NHWC
    # w27_ref: (9*Cin, E)           proj conv weight in im2col layout
    # dww_ref: (9, 2E)              stacked depthwise weights [B | R]
    # pw_ref : (2E, 2E)             block-diagonal pointwise weight
    # pwb_ref: (2E, 1)              fused bias (pw^T @ dw_b + pw_b), column vec
    # ob_ref : (1, E, H*W)          branch-B output, channels-first (lane-dense)
    # or_ref : (1, E, H*W)          branch-R output, channels-first (lane-dense)
    # xfp_ref: (H+2, W+2, 2E)       VMEM scratch: zero-padded, channel-stacked x_fea
    _, E, HW = ob_ref.shape
    _, Hp2, Wp2, Cin = xp_ref.shape
    H, W = Hp2 - 2, Wp2 - 2
    C2 = 2 * E

    # ---- proj: 3x3 conv as ONE im2col matmul (K = 9*Cin) on the MXU ---------
    xp = xp_ref[0]                                            # (H+2, W+2, Cin)
    taps = [xp[kh:kh + H, kw:kw + W, :] for kh in range(3) for kw in range(3)]
    patches = jnp.concatenate(taps, axis=-1)                  # (H, W, 9*Cin)
    patches = patches.reshape(H * W, 9 * Cin)                 # single relayout
    x_fea = jnp.dot(patches.astype(jnp.bfloat16),
                    w27_ref[...].astype(jnp.bfloat16),
                    preferred_element_type=jnp.float32)       # (H*W, E) f32
    x_fea = x_fea.reshape(H, W, E)

    # ---- stage x_fea (duplicated for the B/R branches) into padded scratch --
    # Re-zero every step (tiny VMEM memset, ~30 vst) so the kernel stays
    # correct under megacore grid sharding ("parallel" batch axis).
    xfp_ref[...] = jnp.zeros_like(xfp_ref)
    xfp_ref[1:H + 1, 1:W + 1, :] = jnp.concatenate([x_fea, x_fea], axis=-1)

    # ---- stacked depthwise 3x3: 3 aligned band loads + 9 f32 VPU MACs -------
    # Per kernel row kh, load the full-width halo band once (aligned, no mask)
    # and take the three kw windows from the in-register band.
    dwv = dww_ref[...].reshape(9, 1, 1, C2)                   # hoisted broadcasts
    acc = jnp.zeros((H, W, C2), jnp.float32)
    for kh in range(3):
        band = xfp_ref[kh:kh + H, :, :]                       # (H, W+2, 2E)
        for kw in range(3):
            acc = acc + band[:, kw:kw + W, :] * dwv[kh * 3 + kw]
    # (depthwise bias is folded into pwb_ref in the wrapper)

    # ---- block-diagonal pointwise 1x1 on the MXU, transposed output ---------
    # yt[c_out, n] = sum_c pw[c, c_out] * acc[n, c]   -> (2E, H*W) directly,
    # so the store is lane-dense (H*W lanes) and already channels-first (NCHW).
    yt = lax.dot_general(pw_ref[...].astype(jnp.bfloat16),
                         acc.reshape(H * W, C2).astype(jnp.bfloat16),
                         dimension_numbers=(((0,), (1,)), ((), ())),
                         preferred_element_type=jnp.float32)  # (2E, H*W)
    yt = yt + pwb_ref[...]                                    # (2E, 1) broadcast

    ob_ref[0] = yt[:E, :].astype(ob_ref.dtype)
    or_ref[0] = yt[E:, :].astype(or_ref.dtype)


def patch_embed_forward(x_nchw, p):
    """PatchEmbed forward. Returns [b_fea, r_fea], each NCHW like PyTorch."""
    B, Cin, H, W = x_nchw.shape
    E = p["proj_w"].shape[-1]
    C2 = 2 * E

    # Layout glue on the tiny Cin-channel input: NCHW -> NHWC plus 3x3 halo pad.
    x = jnp.transpose(x_nchw, (0, 2, 3, 1))
    xp = jnp.pad(x, ((0, 0), (1, 1), (1, 1), (0, 0)))

    # Parameter packing (tiny, done in plain JAX): im2col proj weight, stacked
    # depthwise weights, block-diagonal pointwise weight, and the depthwise
    # bias folded through the linear pointwise conv into its bias.
    w27 = p["proj_w"].reshape(9 * Cin, E)
    dww2 = jnp.concatenate([p["B_dw_w"].reshape(9, E),
                            p["R_dw_w"].reshape(9, E)], axis=-1)        # (9, 2E)
    pw2 = jnp.zeros((C2, C2), p["B_pw_w"].dtype)
    pw2 = pw2.at[:E, :E].set(p["B_pw_w"]).at[E:, E:].set(p["R_pw_w"])
    fb_B = p["B_pw_w"].T @ p["B_dw_b"] + p["B_pw_b"]                     # (E,)
    fb_R = p["R_pw_w"].T @ p["R_dw_b"] + p["R_pw_b"]                     # (E,)
    pwb2 = jnp.concatenate([fb_B, fb_R]).reshape(C2, 1)

    out_shape = (jax.ShapeDtypeStruct((B, E, H * W), x_nchw.dtype),
                 jax.ShapeDtypeStruct((B, E, H * W), x_nchw.dtype))

    b_flat, r_flat = pl.pallas_call(
        _fused_patch_embed_kernel,
        out_shape=out_shape,
        grid=(B,),
        in_specs=[
            pl.BlockSpec((1, H + 2, W + 2, Cin), lambda b: (b, 0, 0, 0)),
            pl.BlockSpec((9 * Cin, E), lambda b: (0, 0)),
            pl.BlockSpec((9, C2), lambda b: (0, 0)),
            pl.BlockSpec((C2, C2), lambda b: (0, 0)),
            pl.BlockSpec((C2, 1), lambda b: (0, 0)),
        ],
        out_specs=(
            pl.BlockSpec((1, E, H * W), lambda b: (b, 0, 0)),
            pl.BlockSpec((1, E, H * W), lambda b: (b, 0, 0)),
        ),
        scratch_shapes=[pltpu.VMEM((H + 2, W + 2, C2), jnp.float32)],
        compiler_params=pltpu.CompilerParams(dimension_semantics=("parallel",)),
    )(xp, w27, dww2, pw2, pwb2)

    # (B, E, H*W) -> (B, E, H, W): contiguous split of the last dim, free.
    return [b_flat.reshape(B, E, H, W), r_flat.reshape(B, E, H, W)]


# ----------------------------------------------------------------------------
# Parameters (deterministic synthetic init; PyTorch shapes noted in comments).
# ----------------------------------------------------------------------------
def init_params(key, in_c=3, embed_dim=48, dtype=jnp.float32):
    ks = jax.random.split(key, 9)
    s = 0.05
    p = {}
    # proj: Conv2d(in_c, embed_dim, 3, pad=1, bias=False) -> HWIO (3,3,in_c,E)
    p["proj_w"] = s * jax.random.normal(ks[0], (3, 3, in_c, embed_dim), dtype)
    for i, name in enumerate(["B", "R"]):
        base = 1 + 4 * i
        # depth_conv: Conv2d(E, E, 3, pad=1, groups=E) -> per-channel (3,3,E)+bias(E)
        p[f"{name}_dw_w"] = s * jax.random.normal(ks[base + 0], (3, 3, embed_dim), dtype)
        p[f"{name}_dw_b"] = s * jax.random.normal(ks[base + 1], (embed_dim,), dtype)
        # point_conv: Conv2d(E, E, 1) -> (E_in, E_out) + bias(E_out)
        p[f"{name}_pw_w"] = s * jax.random.normal(ks[base + 2], (embed_dim, embed_dim), dtype)
        p[f"{name}_pw_b"] = s * jax.random.normal(ks[base + 3], (embed_dim,), dtype)
    return p


# ----------------------------------------------------------------------------
# Pure-JAX reference (lax conv, all f32) for a correctness sanity check.
# ----------------------------------------------------------------------------
def reference_forward(x_nchw, p):
    x = jnp.transpose(x_nchw, (0, 2, 3, 1))
    dn = ("NHWC", "HWIO", "NHWC")
    E = p["proj_w"].shape[-1]
    x_fea = lax.conv_general_dilated(x, p["proj_w"], (1, 1), "SAME",
                                     dimension_numbers=dn)
    outs = []
    for name in ["B", "R"]:
        dw_w = p[f"{name}_dw_w"].reshape(3, 3, 1, E)              # HWIO, groups=E
        dw = lax.conv_general_dilated(x_fea, dw_w, (1, 1), "SAME",
                                      dimension_numbers=dn, feature_group_count=E)
        dw = dw + p[f"{name}_dw_b"][None, None, None, :]
        pw = lax.conv_general_dilated(dw, p[f"{name}_pw_w"].reshape(1, 1, E, E),
                                      (1, 1), "SAME", dimension_numbers=dn)
        pw = pw + p[f"{name}_pw_b"][None, None, None, :]
        outs.append(jnp.transpose(pw, (0, 3, 1, 2)))
    return outs


if __name__ == "__main__":
    B, C_IN, H, W = 2, 3, 16, 16
    EMBED = 48

    key = jax.random.PRNGKey(0)
    k_x, k_p = jax.random.split(key)
    x = jax.random.normal(k_x, (B, C_IN, H, W), jnp.float32)      # NCHW like PyTorch
    params = init_params(k_p, in_c=C_IN, embed_dim=EMBED)

    b_fea, r_fea = patch_embed_forward(x, params)
    jax.block_until_ready(b_fea)
    jax.block_until_ready(r_fea)

    # Sanity check against the all-f32 lax reference.  The kernel uses bf16 MXU
    # operands with f32 accumulation, hence the 2e-2 tolerance.
    b_ref, r_ref = reference_forward(x, params)
    assert b_fea.shape == (B, EMBED, H, W) and r_fea.shape == (B, EMBED, H, W)
    assert jnp.allclose(b_fea, b_ref, rtol=2e-2, atol=2e-2)
    assert jnp.allclose(r_fea, r_ref, rtol=2e-2, atol=2e-2)

    print("KERNEL_OK")
</pallas_src>

<mosaic_0001>
module attributes {stable_mosaic.version = 11 : i64} {
  func.func @_fused_patch_embed_kernel(%arg0: i32, %arg1: memref<1x18x18x3xf32, #tpu.memory_space<vmem>>, %arg2: memref<27x48xf32, #tpu.memory_space<vmem>>, %arg3: memref<9x96xf32, #tpu.memory_space<vmem>>, %arg4: memref<96x96xf32, #tpu.memory_space<vmem>>, %arg5: memref<96x1xf32, #tpu.memory_space<vmem>>, %arg6: memref<1x48x256xf32, #tpu.memory_space<vmem>>, %arg7: memref<1x48x256xf32, #tpu.memory_space<vmem>>, %arg8: memref<18x18x96xf32, #tpu.memory_space<vmem>>) attributes {dimension_semantics = [#tpu.dimension_semantics<parallel>], iteration_bounds = array<i64: 2>, scalar_prefetch = 0 : i64, scratch_operands = 1 : i64, tpu.core_type = #tpu.core_type<tc>, window_params = [{transform_indices = @transform_0, window_bounds = array<i64: 1, 18, 18, 3>}, {pipeline_mode = #tpu.pipeline_mode<synchronous>, transform_indices = @transform_1, window_bounds = array<i64: 27, 48>}, {pipeline_mode = #tpu.pipeline_mode<synchronous>, transform_indices = @transform_2, window_bounds = array<i64: 9, 96>}, {pipeline_mode = #tpu.pipeline_mode<synchronous>, transform_indices = @transform_3, window_bounds = array<i64: 96, 96>}, {pipeline_mode = #tpu.pipeline_mode<synchronous>, transform_indices = @transform_4, window_bounds = array<i64: 96, 1>}, {transform_indices = @transform_5, window_bounds = array<i64: 1, 48, 256>}, {transform_indices = @transform_6, window_bounds = array<i64: 1, 48, 256>}]} {
    %c0 = arith.constant 0 : index
    %c0_0 = arith.constant 0 : index
    %c0_1 = arith.constant 0 : index
    %c0_2 = arith.constant 0 : index
    %0 = vector.load %arg1[%c0, %c0_0, %c0_1, %c0_2] : memref<1x18x18x3xf32, #tpu.memory_space<vmem>>, vector<1x18x18x3xf32>
    %1 = vector.shape_cast %0 : vector<1x18x18x3xf32> to vector<18x18x3xf32>
    %2 = vector.extract_strided_slice %1 {offsets = [0, 0, 0], sizes = [16, 16, 3], strides = [1, 1, 1]} : vector<18x18x3xf32> to vector<16x16x3xf32>
    %3 = vector.extract_strided_slice %1 {offsets = [0, 1, 0], sizes = [16, 16, 3], strides = [1, 1, 1]} : vector<18x18x3xf32> to vector<16x16x3xf32>
    %4 = vector.extract_strided_slice %1 {offsets = [0, 2, 0], sizes = [16, 16, 3], strides = [1, 1, 1]} : vector<18x18x3xf32> to vector<16x16x3xf32>
    %5 = vector.extract_strided_slice %1 {offsets = [1, 0, 0], sizes = [16, 16, 3], strides = [1, 1, 1]} : vector<18x18x3xf32> to vector<16x16x3xf32>
    %6 = vector.extract_strided_slice %1 {offsets = [1, 1, 0], sizes = [16, 16, 3], strides = [1, 1, 1]} : vector<18x18x3xf32> to vector<16x16x3xf32>
    %7 = vector.extract_strided_slice %1 {offsets = [1, 2, 0], sizes = [16, 16, 3], strides = [1, 1, 1]} : vector<18x18x3xf32> to vector<16x16x3xf32>
    %8 = vector.extract_strided_slice %1 {offsets = [2, 0, 0], sizes = [16, 16, 3], strides = [1, 1, 1]} : vector<18x18x3xf32> to vector<16x16x3xf32>
    %9 = vector.extract_strided_slice %1 {offsets = [2, 1, 0], sizes = [16, 16, 3], strides = [1, 1, 1]} : vector<18x18x3xf32> to vector<16x16x3xf32>
    %10 = vector.extract_strided_slice %1 {offsets = [2, 2, 0], sizes = [16, 16, 3], strides = [1, 1, 1]} : vector<18x18x3xf32> to vector<16x16x3xf32>
    %11 = tpu.concatenate %2, %3, %4, %5, %6, %7, %8, %9, %10 in 2 : vector<16x16x3xf32>, vector<16x16x3xf32>, vector<16x16x3xf32>, vector<16x16x3xf32>, vector<16x16x3xf32>, vector<16x16x3xf32>, vector<16x16x3xf32>, vector<16x16x3xf32>, vector<16x16x3xf32> -> vector<16x16x27xf32>
    %12 = vector.shape_cast %11 : vector<16x16x27xf32> to vector<256x27xf32>
    %13 = arith.truncf %12 : vector<256x27xf32> to vector<256x27xbf16>
    %c0_3 = arith.constant 0 : index
    %c0_4 = arith.constant 0 : index
    %14 = vector.load %arg2[%c0_3, %c0_4] : memref<27x48xf32, #tpu.memory_space<vmem>>, vector<27x48xf32>
    %15 = arith.truncf %14 : vector<27x48xf32> to vector<27x48xbf16>
    %cst = arith.constant dense<0.000000e+00> : vector<256x48xf32>
    %16 = tpu.matmul %13, %15, %cst {dimension_numbers = #tpu.dot_dimension_numbers<[1], [0], [0], [1], [0, 0, 1, 1], [], []>} : vector<256x27xbf16>, vector<27x48xbf16>, vector<256x48xf32> -> vector<256x48xf32>
    %17 = vector.shape_cast %16 : vector<256x48xf32> to vector<16x16x48xf32>
    %cst_5 = arith.constant 0.000000e+00 : f32
    %18 = vector.broadcast %cst_5 : f32 to vector<18x18x96xf32>
    %c0_6 = arith.constant 0 : index
    %c0_7 = arith.constant 0 : index
    %c0_8 = arith.constant 0 : index
    %19 = vector.load %arg8[%c0_6, %c0_7, %c0_8] : memref<18x18x96xf32, #tpu.memory_space<vmem>>, vector<18x18x96xf32>
    tpu.vector_store %arg8[%c0_6, %c0_7, %c0_8], %18 {strides = array<i32>} : memref<18x18x96xf32, #tpu.memory_space<vmem>>, vector<18x18x96xf32>,
    %20 = tpu.concatenate %17, %17 in 2 : vector<16x16x48xf32>, vector<16x16x48xf32> -> vector<16x16x96xf32>
    %c1 = arith.constant 1 : index
    %c1_9 = arith.constant 1 : index
    %c0_10 = arith.constant 0 : index
    %21 = vector.load %arg8[%c1, %c1_9, %c0_10] : memref<18x18x96xf32, #tpu.memory_space<vmem>>, vector<16x16x96xf32>
    tpu.vector_store %arg8[%c1, %c1_9, %c0_10], %20 {strides = array<i32>} : memref<18x18x96xf32, #tpu.memory_space<vmem>>, vector<16x16x96xf32>,
    %c0_11 = arith.constant 0 : index
    %c0_12 = arith.constant 0 : index
    %22 = vector.load %arg3[%c0_11, %c0_12] : memref<9x96xf32, #tpu.memory_space<vmem>>, vector<9x96xf32>
    %23 = vector.shape_cast %22 : vector<9x96xf32> to vector<9x1x1x96xf32>
    %cst_13 = arith.constant 0.000000e+00 : f32
    %24 = vector.broadcast %cst_13 : f32 to vector<16x16x96xf32>
    %c0_14 = arith.constant 0 : index
    %c0_15 = arith.constant 0 : index
    %c0_16 = arith.constant 0 : index
    %25 = vector.load %arg8[%c0_14, %c0_15, %c0_16] : memref<18x18x96xf32, #tpu.memory_space<vmem>>, vector<16x18x96xf32>
    %26 = vector.extract_strided_slice %25 {offsets = [0, 0, 0], sizes = [16, 16, 96], strides = [1, 1, 1]} : vector<16x18x96xf32> to vector<16x16x96xf32>
    %27 = vector.extract_strided_slice %23 {offsets = [0, 0, 0, 0], sizes = [1, 1, 1, 96], strides = [1, 1, 1, 1]} : vector<9x1x1x96xf32> to vector<1x1x1x96xf32>
    %28 = vector.shape_cast %27 : vector<1x1x1x96xf32> to vector<1x1x96xf32>
    %29 = vector.broadcast %28 : vector<1x1x96xf32> to vector<16x16x96xf32>
    %30 = arith.mulf %26, %29 : vector<16x16x96xf32>
    %31 = arith.addf %24, %30 : vector<16x16x96xf32>
    %32 = vector.extract_strided_slice %25 {offsets = [0, 1, 0], sizes = [16, 16, 96], strides = [1, 1, 1]} : vector<16x18x96xf32> to vector<16x16x96xf32>
    %33 = vector.extract_strided_slice %23 {offsets = [1, 0, 0, 0], sizes = [1, 1, 1, 96], strides = [1, 1, 1, 1]} : vector<9x1x1x96xf32> to vector<1x1x1x96xf32>
    %34 = vector.shape_cast %33 : vector<1x1x1x96xf32> to vector<1x1x96xf32>
    %35 = vector.broadcast %34 : vector<1x1x96xf32> to vector<16x16x96xf32>
    %36 = arith.mulf %32, %35 : vector<16x16x96xf32>
    %37 = arith.addf %31, %36 : vector<16x16x96xf32>
    %38 = vector.extract_strided_slice %25 {offsets = [0, 2, 0], sizes = [16, 16, 96], strides = [1, 1, 1]} : vector<16x18x96xf32> to vector<16x16x96xf32>
    %39 = vector.extract_strided_slice %23 {offsets = [2, 0, 0, 0], sizes = [1, 1, 1, 96], strides = [1, 1, 1, 1]} : vector<9x1x1x96xf32> to vector<1x1x1x96xf32>
    %40 = vector.shape_cast %39 : vector<1x1x1x96xf32> to vector<1x1x96xf32>
    %41 = vector.broadcast %40 : vector<1x1x96xf32> to vector<16x16x96xf32>
    %42 = arith.mulf %38, %41 : vector<16x16x96xf32>
    %43 = arith.addf %37, %42 : vector<16x16x96xf32>
    %c1_17 = arith.constant 1 : index
    %c0_18 = arith.constant 0 : index
    %c0_19 = arith.constant 0 : index
    %44 = vector.load %arg8[%c1_17, %c0_18, %c0_19] : memref<18x18x96xf32, #tpu.memory_space<vmem>>, vector<16x18x96xf32>
    %45 = vector.extract_strided_slice %44 {offsets = [0, 0, 0], sizes = [16, 16, 96], strides = [1, 1, 1]} : vector<16x18x96xf32> to vector<16x16x96xf32>
    %46 = vector.extract_strided_slice %23 {offsets = [3, 0, 0, 0], sizes = [1, 1, 1, 96], strides = [1, 1, 1, 1]} : vector<9x1x1x96xf32> to vector<1x1x1x96xf32>
    %47 = vector.shape_cast %46 : vector<1x1x1x96xf32> to vector<1x1x96xf32>
    %48 = vector.broadcast %47 : vector<1x1x96xf32> to vector<16x16x96xf32>
    %49 = arith.mulf %45, %48 : vector<16x16x96xf32>
    %50 = arith.addf %43, %49 : vector<16x16x96xf32>
    %51 = vector.extract_strided_slice %44 {offsets = [0, 1, 0], sizes = [16, 16, 96], strides = [1, 1, 1]} : vector<16x18x96xf32> to vector<16x16x96xf32>
    %52 = vector.extract_strided_slice %23 {offsets = [4, 0, 0, 0], sizes = [1, 1, 1, 96], strides = [1, 1, 1, 1]} : vector<9x1x1x96xf32> to vector<1x1x1x96xf32>
    %53 = vector.shape_cast %52 : vector<1x1x1x96xf32> to vector<1x1x96xf32>
    %54 = vector.broadcast %53 : vector<1x1x96xf32> to vector<16x16x96xf32>
    %55 = arith.mulf %51, %54 : vector<16x16x96xf32>
    %56 = arith.addf %50, %55 : vector<16x16x96xf32>
    %57 = vector.extract_strided_slice %44 {offsets = [0, 2, 0], sizes = [16, 16, 96], strides = [1, 1, 1]} : vector<16x18x96xf32> to vector<16x16x96xf32>
    %58 = vector.extract_strided_slice %23 {offsets = [5, 0, 0, 0], sizes = [1, 1, 1, 96], strides = [1, 1, 1, 1]} : vector<9x1x1x96xf32> to vector<1x1x1x96xf32>
    %59 = vector.shape_cast %58 : vector<1x1x1x96xf32> to vector<1x1x96xf32>
    %60 = vector.broadcast %59 : vector<1x1x96xf32> to vector<16x16x96xf32>
    %61 = arith.mulf %57, %60 : vector<16x16x96xf32>
    %62 = arith.addf %56, %61 : vector<16x16x96xf32>
    %c2 = arith.constant 2 : index
    %c0_20 = arith.constant 0 : index
    %c0_21 = arith.constant 0 : index
    %63 = vector.load %arg8[%c2, %c0_20, %c0_21] : memref<18x18x96xf32, #tpu.memory_space<vmem>>, vector<16x18x96xf32>
    %64 = vector.extract_strided_slice %63 {offsets = [0, 0, 0], sizes = [16, 16, 96], strides = [1, 1, 1]} : vector<16x18x96xf32> to vector<16x16x96xf32>
    %65 = vector.extract_strided_slice %23 {offsets = [6, 0, 0, 0], sizes = [1, 1, 1, 96], strides = [1, 1, 1, 1]} : vector<9x1x1x96xf32> to vector<1x1x1x96xf32>
    %66 = vector.shape_cast %65 : vector<1x1x1x96xf32> to vector<1x1x96xf32>
    %67 = vector.broadcast %66 : vector<1x1x96xf32> to vector<16x16x96xf32>
    %68 = arith.mulf %64, %67 : vector<16x16x96xf32>
    %69 = arith.addf %62, %68 : vector<16x16x96xf32>
    %70 = vector.extract_strided_slice %63 {offsets = [0, 1, 0], sizes = [16, 16, 96], strides = [1, 1, 1]} : vector<16x18x96xf32> to vector<16x16x96xf32>
    %71 = vector.extract_strided_slice %23 {offsets = [7, 0, 0, 0], sizes = [1, 1, 1, 96], strides = [1, 1, 1, 1]} : vector<9x1x1x96xf32> to vector<1x1x1x96xf32>
    %72 = vector.shape_cast %71 : vector<1x1x1x96xf32> to vector<1x1x96xf32>
    %73 = vector.broadcast %72 : vector<1x1x96xf32> to vector<16x16x96xf32>
    %74 = arith.mulf %70, %73 : vector<16x16x96xf32>
    %75 = arith.addf %69, %74 : vector<16x16x96xf32>
    %76 = vector.extract_strided_slice %63 {offsets = [0, 2, 0], sizes = [16, 16, 96], strides = [1, 1, 1]} : vector<16x18x96xf32> to vector<16x16x96xf32>
    %77 = vector.extract_strided_slice %23 {offsets = [8, 0, 0, 0], sizes = [1, 1, 1, 96], strides = [1, 1, 1, 1]} : vector<9x1x1x96xf32> to vector<1x1x1x96xf32>
    %78 = vector.shape_cast %77 : vector<1x1x1x96xf32> to vector<1x1x96xf32>
    %79 = vector.broadcast %78 : vector<1x1x96xf32> to vector<16x16x96xf32>
    %80 = arith.mulf %76, %79 : vector<16x16x96xf32>
    %81 = arith.addf %75, %80 : vector<16x16x96xf32>
    %c0_22 = arith.constant 0 : index
    %c0_23 = arith.constant 0 : index
    %82 = vector.load %arg4[%c0_22, %c0_23] : memref<96x96xf32, #tpu.memory_space<vmem>>, vector<96x96xf32>
    %83 = arith.truncf %82 : vector<96x96xf32> to vector<96x96xbf16>
    %84 = vector.shape_cast %81 : vector<16x16x96xf32> to vector<256x96xf32>
    %85 = arith.truncf %84 : vector<256x96xf32> to vector<256x96xbf16>
    %cst_24 = arith.constant dense<0.000000e+00> : vector<96x256xf32>
    %86 = tpu.matmul %83, %85, %cst_24 {dimension_numbers = #tpu.dot_dimension_numbers<[0], [1], [1], [0], [0, 1, 1, 0], [], []>} : vector<96x96xbf16>, vector<256x96xbf16>, vector<96x256xf32> -> vector<96x256xf32>
    %c0_25 = arith.constant 0 : index
    %c0_26 = arith.constant 0 : index
    %87 = vector.load %arg5[%c0_25, %c0_26] : memref<96x1xf32, #tpu.memory_space<vmem>>, vector<96x1xf32>
    %88 = vector.broadcast %87 : vector<96x1xf32> to vector<96x256xf32>
    %89 = arith.addf %86, %88 : vector<96x256xf32>
    %90 = vector.extract_strided_slice %89 {offsets = [0, 0], sizes = [48, 256], strides = [1, 1]} : vector<96x256xf32> to vector<48x256xf32>
    %c0_27 = arith.constant 0 : index
    %c0_28 = arith.constant 0 : index
    %c0_29 = arith.constant 0 : index
    %91 = vector.load %arg6[%c0_27, %c0_28, %c0_29] : memref<1x48x256xf32, #tpu.memory_space<vmem>>, vector<1x48x256xf32>
    %92 = vector.shape_cast %91 : vector<1x48x256xf32> to vector<48x256xf32>
    %93 = vector.shape_cast %90 : vector<48x256xf32> to vector<1x48x256xf32>
    tpu.vector_store %arg6[%c0_27, %c0_28, %c0_29], %93 {strides = array<i32>} : memref<1x48x256xf32, #tpu.memory_space<vmem>>, vector<1x48x256xf32>,
    %94 = vector.extract_strided_slice %89 {offsets = [48, 0], sizes = [48, 256], strides = [1, 1]} : vector<96x256xf32> to vector<48x256xf32>
    %c0_30 = arith.constant 0 : index
    %c0_31 = arith.constant 0 : index
    %c0_32 = arith.constant 0 : index
    %95 = vector.load %arg7[%c0_30, %c0_31, %c0_32] : memref<1x48x256xf32, #tpu.memory_space<vmem>>, vector<1x48x256xf32>
    %96 = vector.shape_cast %95 : vector<1x48x256xf32> to vector<48x256xf32>
    %97 = vector.shape_cast %94 : vector<48x256xf32> to vector<1x48x256xf32>
    tpu.vector_store %arg7[%c0_30, %c0_31, %c0_32], %97 {strides = array<i32>} : memref<1x48x256xf32, #tpu.memory_space<vmem>>, vector<1x48x256xf32>,
    return
  }
  func.func @transform_0(%arg0: i32) -> (i32, i32, i32, i32) {
    %c0_i32 = arith.constant 0 : i32
    %c0_i32_0 = arith.constant 0 : i32
    %c0_i32_1 = arith.constant 0 : i32
    %c0_i32_2 = arith.constant 0 : i32
    return %arg0, %c0_i32, %c0_i32_0, %c0_i32_1 : i32, i32, i32, i32
  }
  func.func @transform_1(%arg0: i32) -> (i32, i32) {
    %c0_i32 = arith.constant 0 : i32
    %c0_i32_0 = arith.constant 0 : i32
    %c0_i32_1 = arith.constant 0 : i32
    return %c0_i32, %c0_i32_0 : i32, i32
  }
  func.func @transform_2(%arg0: i32) -> (i32, i32) {
    %c0_i32 = arith.constant 0 : i32
    %c0_i32_0 = arith.constant 0 : i32
    %c0_i32_1 = arith.constant 0 : i32
    return %c0_i32, %c0_i32_0 : i32, i32
  }
  func.func @transform_3(%arg0: i32) -> (i32, i32) {
    %c0_i32 = arith.constant 0 : i32
    %c0_i32_0 = arith.constant 0 : i32
    %c0_i32_1 = arith.constant 0 : i32
    return %c0_i32, %c0_i32_0 : i32, i32
  }
  func.func @transform_4(%arg0: i32) -> (i32, i32) {
    %c0_i32 = arith.constant 0 : i32
    %c0_i32_0 = arith.constant 0 : i32
    %c0_i32_1 = arith.constant 0 : i32
    return %c0_i32, %c0_i32_0 : i32, i32
  }
  func.func @transform_5(%arg0: i32) -> (i32, i32, i32) {
    %c0_i32 = arith.constant 0 : i32
    %c0_i32_0 = arith.constant 0 : i32
    %c0_i32_1 = arith.constant 0 : i32
    return %arg0, %c0_i32, %c0_i32_0 : i32, i32, i32
  }
  func.func @transform_6(%arg0: i32) -> (i32, i32, i32) {
    %c0_i32 = arith.constant 0 : i32
    %c0_i32_0 = arith.constant 0 : i32
    %c0_i32_1 = arith.constant 0 : i32
    return %arg0, %c0_i32, %c0_i32_0 : i32, i32, i32
  }
}

</mosaic_0001>

<llo_original>
// kernel: tpu_custom_call.1
$region0: #{tpu_custom_call.1}
  #allocation0 [shape = 'u32[]', space=smem, size = 0x4, offset = 0x4, fixed_abs, tag = 'smem constant byte address 0x4 - core index']
  #allocation1 [shape = 'u32[144,128]{1,0:T(1,128)}', space=vmem, size = 0x12000, scoped, tag = 'internal scratch']
  #allocation2 [shape = 'f32[18,18,96]{2,1,0:T(8,128)}', space=vmem, size = 0x36000, scoped, tag = 'scratch operand']
  %s0 = inlined_call_operand.vmem [shape: f32[2,18,18,3], index: 0, kind: input, shape index: {}]
  %s1 = inlined_call_operand.vmem [shape: f32[27,48], index: 1, kind: input, shape index: {}]
  %s2 = inlined_call_operand.vmem [shape: f32[9,96], index: 2, kind: input, shape index: {}]
  %s3 = inlined_call_operand.vmem [shape: f32[96,96], index: 3, kind: input, shape index: {}]
  %s4 = inlined_call_operand.vmem [shape: f32[96,1], index: 4, kind: input, shape index: {}]
  %s5 = inlined_call_operand.hbm [shape: f32[2,48,256], index: 5, kind: output, shape index: {0}]
  %s6 = inlined_call_operand.hbm [shape: f32[2,48,256], index: 6, kind: output, shape index: {1}]
  %7 = xla_tuple %s5, %s6
  %s8 = sld [smem:[#allocation0]]
  $region61: #{tpu_custom_call.1} parent=0
    _
  %s10 = ssub.s32 1, %s8
  %s11 = scalar_select 0, %s10, %s8
  $region1: #{tpu_custom_call.1} parent=0
    #allocation3 [shape = 'u8[98304]{0}', space=vmem, size = 0x18000, scoped, tag = 'output window, operand 0']
    #allocation4 [shape = 's32[2]{0}', space=sflag, size = 0x8, scoped, tag = 'scoped memory for tpu_custom_call.1']
    #allocation5 [shape = 'u8[98304]{0}', space=vmem, size = 0x18000, scoped, tag = 'output window, operand 1']
    #allocation6 [shape = 's32[2]{0}', space=sflag, size = 0x8, scoped, tag = 'scoped memory for tpu_custom_call.1']
    %12 = vsyncpa [#allocation4], 0
    %s13 = scalar_lea.sflag [#allocation4], 1
    %14 = vsyncpa %s13, 0
    %15 = vsyncpa [#allocation6], 0
    %s16 = scalar_lea.sflag [#allocation6], 1
    %17 = vsyncpa %s16, 0
    loop: start=0, step=1, limit=4
    $region2: #{tpu_custom_call.1} parent=1 // loop_pre_header
      _
    $region3: #{tpu_custom_call.1} parent=1 // loop_header
      %s19 = sphi 0, %s23
      %p20 = scmp.ge.s32.totalorder %s19, 4
      %s29 = sphi 0, %s31
      %s32 = sphi 0, %s29
      %s33 = sphi 0, %s32
      %s49 = sphi 0, %s33
      %s53 = sphi 0, %s53
      %s55 = sphi 0, %s53
      %s56 = sphi 0, %s55
      %s70 = sphi 0, %s56
      %s74 = sphi 0, %s74
      %s76 = sphi 0, %s74
      %s77 = sphi 0, %s76
      %s91 = sphi 0, %s77
      %s95 = sphi 0, %s95
      %s97 = sphi 0, %s95
      %s98 = sphi 0, %s97
      %s112 = sphi 0, %s98
      %s116 = sphi 0, %s116
      %s118 = sphi 0, %s116
      %s119 = sphi 0, %s118
      %s133 = sphi 0, %s119
      %s139 = sphi 0, %s141
      %s142 = sphi 0, %s139
      %s143 = sphi 0, %s142
      %s159 = sphi 0, %s143
      %s165 = sphi 0, %s167
      %s168 = sphi 0, %s165
      %s169 = sphi 0, %s168
      %s185 = sphi 0, %s169
    $region4: #{tpu_custom_call.1} parent=1 // loop_header_branch
      %22 = sbr.rel (%p20) target = $region8
    $region5: #{tpu_custom_call.1} parent=1 // loop_body
      %s24 = ssub.s32 %s19, 1
      %s25 = ssub.s32 %s19, 2
      %s26 = sadd.s32 %s19, 1
      %s27 = ssub.s32 %s19, %s26
      %p28 = scmp.eq.s32.totalorder %s27, 0
      %s30 = sadd.s32 %s29, 1
      %s31 = scalar_select %p28, %s29, %s30
      %p34 = pneg %p28
      %p35 = scmp.eq.s32.totalorder %s19, 1
      %p36 = por %p34, %p35
      %p37 = scmp.ne.s32.totalorder %s29, %s32
      %p38 = scmp.eq.s32.totalorder %s19, 0
      %p39 = por %p37, %p38
      %p40 = scmp.ne.s32.totalorder %s29, %s32
      %p41 = scmp.eq.s32.totalorder %s24, 1
      %p42 = por %p40, %p41
      %p43 = scmp.ne.s32.totalorder %s32, %s33
      %p44 = scmp.eq.s32.totalorder %s24, 0
      %p45 = por %p43, %p44
      %p46 = scmp.ne.s32.totalorder %s32, %s33
      %p47 = scmp.eq.s32.totalorder %s25, 1
      %p48 = por %p46, %p47
      %p50 = scmp.ne.s32.totalorder %s33, %s49
      %p51 = scmp.eq.s32.totalorder %s25, 0
      %p52 = por %p50, %p51
      %s54 = sadd.s32 %s53, 1
      %p57 = scmp.eq.s32.totalorder %s19, 1
      %p58 = scmp.ne.s32.totalorder %s53, %s55
      %p59 = scmp.eq.s32.totalorder %s19, 0
      %p60 = por %p58, %p59
      %p61 = scmp.ne.s32.totalorder %s53, %s55
      %p62 = scmp.eq.s32.totalorder %s24, 1
      %p63 = por %p61, %p62
      %p64 = scmp.ne.s32.totalorder %s55, %s56
      %p65 = scmp.eq.s32.totalorder %s24, 0
      %p66 = por %p64, %p65
      %p67 = scmp.ne.s32.totalorder %s55, %s56
      %p68 = scmp.eq.s32.totalorder %s25, 1
      %p69 = por %p67, %p68
      %p71 = scmp.ne.s32.totalorder %s56, %s70
      %p72 = scmp.eq.s32.totalorder %s25, 0
      %p73 = por %p71, %p72
      %s75 = sadd.s32 %s74, 1
      %p78 = scmp.eq.s32.totalorder %s19, 1
      %p79 = scmp.ne.s32.totalorder %s74, %s76
      %p80 = scmp.eq.s32.totalorder %s19, 0
      %p81 = por %p79, %p80
      %p82 = scmp.ne.s32.totalorder %s74, %s76
      %p83 = scmp.eq.s32.totalorder %s24, 1
      %p84 = por %p82, %p83
      %p85 = scmp.ne.s32.totalorder %s76, %s77
      %p86 = scmp.eq.s32.totalorder %s24, 0
      %p87 = por %p85, %p86
      %p88 = scmp.ne.s32.totalorder %s76, %s77
      %p89 = scmp.eq.s32.totalorder %s25, 1
      %p90 = por %p88, %p89
      %p92 = scmp.ne.s32.totalorder %s77, %s91
      %p93 = scmp.eq.s32.totalorder %s25, 0
      %p94 = por %p92, %p93
      %s96 = sadd.s32 %s95, 1
      %p99 = scmp.eq.s32.totalorder %s19, 1
      %p100 = scmp.ne.s32.totalorder %s95, %s97
      %p101 = scmp.eq.s32.totalorder %s19, 0
      %p102 = por %p100, %p101
      %p103 = scmp.ne.s32.totalorder %s95, %s97
      %p104 = scmp.eq.s32.totalorder %s24, 1
      %p105 = por %p103, %p104
      %p106 = scmp.ne.s32.totalorder %s97, %s98
      %p107 = scmp.eq.s32.totalorder %s24, 0
      %p108 = por %p106, %p107
      %p109 = scmp.ne.s32.totalorder %s97, %s98
      %p110 = scmp.eq.s32.totalorder %s25, 1
      %p111 = por %p109, %p110
      %p113 = scmp.ne.s32.totalorder %s98, %s112
      %p114 = scmp.eq.s32.totalorder %s25, 0
      %p115 = por %p113, %p114
      %s117 = sadd.s32 %s116, 1
      %p120 = scmp.eq.s32.totalorder %s19, 1
      %p121 = scmp.ne.s32.totalorder %s116, %s118
      %p122 = scmp.eq.s32.totalorder %s19, 0
      %p123 = por %p121, %p122
      %p124 = scmp.ne.s32.totalorder %s116, %s118
      %p125 = scmp.eq.s32.totalorder %s24, 1
      %p126 = por %p124, %p125
      %p127 = scmp.ne.s32.totalorder %s118, %s119
      %p128 = scmp.eq.s32.totalorder %s24, 0
      %p129 = por %p127, %p128
      %p130 = scmp.ne.s32.totalorder %s118, %s119
      %p131 = scmp.eq.s32.totalorder %s25, 1
      %p132 = por %p130, %p131
      %p134 = scmp.ne.s32.totalorder %s119, %s133
      %p135 = scmp.eq.s32.totalorder %s25, 0
      %p136 = por %p134, %p135
      %s137 = ssub.s32 %s19, %s26
      %p138 = scmp.eq.s32.totalorder %s137, 0
      %s140 = sadd.s32 %s139, 1
      %s141 = scalar_select %p138, %s139, %s140
      %p144 = pneg %p138
      %p145 = scmp.eq.s32.totalorder %s19, 1
      %p146 = por %p144, %p145
      %p147 = scmp.ne.s32.totalorder %s139, %s142
      %p148 = scmp.eq.s32.totalorder %s19, 0
      %p149 = por %p147, %p148
      %p150 = scmp.ne.s32.totalorder %s139, %s142
      %p151 = scmp.eq.s32.totalorder %s24, 1
      %p152 = por %p150, %p151
      %p153 = scmp.ne.s32.totalorder %s142, %s143
      %p154 = scmp.eq.s32.totalorder %s24, 0
      %p155 = por %p153, %p154
      %p156 = scmp.ne.s32.totalorder %s142, %s143
      %p157 = scmp.eq.s32.totalorder %s25, 1
      %p158 = por %p156, %p157
      %p160 = scmp.ne.s32.totalorder %s143, %s159
      %p161 = scmp.eq.s32.totalorder %s25, 0
      %p162 = por %p160, %p161
      %s163 = ssub.s32 %s19, %s26
      %p164 = scmp.eq.s32.totalorder %s163, 0
      %s166 = sadd.s32 %s165, 1
      %s167 = scalar_select %p164, %s165, %s166
      %p170 = pneg %p164
      %p171 = scmp.eq.s32.totalorder %s19, 1
      %p172 = por %p170, %p171
      %p173 = scmp.ne.s32.totalorder %s165, %s168
      %p174 = scmp.eq.s32.totalorder %s19, 0
      %p175 = por %p173, %p174
      %p176 = scmp.ne.s32.totalorder %s165, %s168
      %p177 = scmp.eq.s32.totalorder %s24, 1
      %p178 = por %p176, %p177
      %p179 = scmp.ne.s32.totalorder %s168, %s169
      %p180 = scmp.eq.s32.totalorder %s24, 0
      %p181 = por %p179, %p180
      %p182 = scmp.ne.s32.totalorder %s168, %s169
      %p183 = scmp.eq.s32.totalorder %s25, 1
      %p184 = por %p182, %p183
      %p186 = scmp.ne.s32.totalorder %s169, %s185
      %p187 = scmp.eq.s32.totalorder %s25, 0
      %p188 = por %p186, %p187
      %p189 = scmp.le.s32.totalorder 1, %s19
      %p190 = scmp.lt.s32.totalorder %s19, 3
      %p191 = pnand %p189, %p190
      %p192 = pneg %p191
      // Predicated region
      $region9: #{tpu_custom_call.1} parent=5 // pred_check
        _
      $region10: #{tpu_custom_call.1} parent=5 // pred_check_branch
        %194 = sbr.rel (%p191) target = $region12
      $region11: #{tpu_custom_call.1} parent=5 // pred_region
        %s195 = ssub.s32 %s19, 1
        // Predicated region
        $region13: #{tpu_custom_call.1} parent=11 // pred_check
          %p196 = pneg %p66
        $region14: #{tpu_custom_call.1} parent=11 // pred_check_branch
          %198 = sbr.rel (%p196) target = $region16
        $region15: #{tpu_custom_call.1} parent=11 // pred_region
          _
        $region16: #{tpu_custom_call.1} parent=11 // pred_fallthru
          _
        // Predicated region
        $region17: #{tpu_custom_call.1} parent=11 // pred_check
          %p199 = pneg %p87
        $region18: #{tpu_custom_call.1} parent=11 // pred_check_branch
          %201 = sbr.rel (%p199) target = $region20
        $region19: #{tpu_custom_call.1} parent=11 // pred_region
          _
        $region20: #{tpu_custom_call.1} parent=11 // pred_fallthru
          _
        // Predicated region
        $region21: #{tpu_custom_call.1} parent=11 // pred_check
          %p202 = pneg %p108
        $region22: #{tpu_custom_call.1} parent=11 // pred_check_branch
          %204 = sbr.rel (%p202) target = $region24
        $region23: #{tpu_custom_call.1} parent=11 // pred_region
          _
        $region24: #{tpu_custom_call.1} parent=11 // pred_fallthru
          _
        // Predicated region
        $region25: #{tpu_custom_call.1} parent=11 // pred_check
          %p205 = pneg %p129
        $region26: #{tpu_custom_call.1} parent=11 // pred_check_branch
          %207 = sbr.rel (%p205) target = $region28
        $region27: #{tpu_custom_call.1} parent=11 // pred_region
          _
        $region28: #{tpu_custom_call.1} parent=11 // pred_fallthru
          _
      $region12: #{tpu_custom_call.1} parent=5 // pred_fallthru
        _
      %p208 = scmp.lt.s32.totalorder %s19, 2
      // Predicated region
      $region29: #{tpu_custom_call.1} parent=5 // pred_check
        %p209 = pneg %p208
      $region30: #{tpu_custom_call.1} parent=5 // pred_check_branch
        %211 = sbr.rel (%p209) target = $region32
      $region31: #{tpu_custom_call.1} parent=5 // pred_region
        // Predicated region
        $region33: #{tpu_custom_call.1} parent=31 // pred_check
          %p212 = pneg %p39
        $region34: #{tpu_custom_call.1} parent=31 // pred_check_branch
          %214 = sbr.rel (%p212) target = $region36
        $region35: #{tpu_custom_call.1} parent=31 // pred_region
          %p215 = scmp.lt.s32.totalorder %s19, 1
          %s216 = scalar_select %p215, %s19, 1
          %s217 = smul.addr %s216, 54
          %s218 = smul.addr %s217, 8
          %s219 = scalar_lea.vmem %s0, %s218
        $region36: #{tpu_custom_call.1} parent=31 // pred_fallthru
          _
      $region32: #{tpu_custom_call.1} parent=5 // pred_fallthru
        _
      %p220 = scmp.le.s32.totalorder 1, %s19
      %p221 = scmp.lt.s32.totalorder %s19, 3
      %p222 = pnand %p220, %p221
      %p223 = pneg %p222
      // Predicated region
      $region37: #{tpu_custom_call.1} parent=5 // pred_check
        _
      $region38: #{tpu_custom_call.1} parent=5 // pred_check_branch
        %225 = sbr.rel (%p222) target = $region40
      $region39: #{tpu_custom_call.1} parent=5 // pred_region
        %s226 = ssub.s32 %s19, 1
        %p227 = scmp.lt.s32.totalorder %s24, 1
        %s228 = scalar_select %p227, %s24, 1
        %s229 = smul.addr %s228, 54
        %s230 = smul.addr %s229, 8
        %s231 = scalar_lea.vmem %s0, %s230
        %p232 = pneg %p45
        %p233 = pneg %p42
        %p234 = pneg %p66
        %p235 = pneg %p63
        %p236 = pneg %p87
        %p237 = pneg %p84
        %p238 = pneg %p108
        %p239 = pneg %p105
        %p240 = pneg %p129
        %p241 = pneg %p126
        %p242 = pneg %p155
        %p243 = pneg %p152
        %s244 = sand.u32 %s142, 1
        %s245 = scalar_lea.sflag [#allocation4], %s244
        %s246 = sand.u32 %s142, 1
        %s247 = smul.addr %s246, 96
        %s248 = scalar_lea.vmem [#allocation3], %s247
        %p249 = pneg %p181
        %p250 = pneg %p178
        %s251 = sand.u32 %s168, 1
        %s252 = scalar_lea.sflag [#allocation6], %s251
        %s253 = sand.u32 %s168, 1
        %s254 = smul.addr %s253, 96
        %s255 = scalar_lea.vmem [#allocation5], %s254
        %p256 = scmp.lt.s32.totalorder %s24, 1
        %s257 = scalar_select %p256, %s24, 1
        %s258 = smul.addr %s257, 54
        %s259 = smul.addr %s258, 8
        %s260 = scalar_lea.vmem %s0, %s259
        %v262 = vld [vmem:[%s260] sm:$0xff]
        %v263 = vld [vmem:[%s260 + $0x8] sm:$0xff]
        %v264 = vld [vmem:[%s260 + $0x10] sm:$0x3]
        %v265 = vld [vmem:[%s260 + $0x18] sm:$0xff]
        %v266 = vld [vmem:[%s260 + $0x20] sm:$0xff]
        %v267 = vld [vmem:[%s260 + $0x28] sm:$0x3]
        %v268 = vld [vmem:[%s260 + $0x30] sm:$0xff]
        %v269 = vld [vmem:[%s260 + $0x38] sm:$0xff]
        %v270 = vld [vmem:[%s260 + $0x40] sm:$0x3]
        %v271 = vld [vmem:[%s260 + $0x48] sm:$0xff]
        %v272 = vld [vmem:[%s260 + $0x50] sm:$0xff]
        %v273 = vld [vmem:[%s260 + $0x58] sm:$0x3]
        %v274 = vld [vmem:[%s260 + $0x60] sm:$0xff]
        %v275 = vld [vmem:[%s260 + $0x68] sm:$0xff]
        %v276 = vld [vmem:[%s260 + $0x70] sm:$0x3]
        %v277 = vld [vmem:[%s260 + $0x78] sm:$0xff]
        %v278 = vld [vmem:[%s260 + $0x80] sm:$0xff]
        %v279 = vld [vmem:[%s260 + $0x88] sm:$0x3]
        %v280 = vld [vmem:[%s260 + $0x90] sm:$0xff]
        %v281 = vld [vmem:[%s260 + $0x98] sm:$0xff]
        %v282 = vld [vmem:[%s260 + $0xa0] sm:$0x3]
        %v283 = vld [vmem:[%s260 + $0xa8] sm:$0xff]
        %v284 = vld [vmem:[%s260 + $0xb0] sm:$0xff]
        %v285 = vld [vmem:[%s260 + $0xb8] sm:$0x3]
        %v286 = vld [vmem:[%s260 + $0xc0] sm:$0xff]
        %v287 = vld [vmem:[%s260 + $0xc8] sm:$0xff]
        %v288 = vld [vmem:[%s260 + $0xd0] sm:$0x3]
        %v289 = vld [vmem:[%s260 + $0xd8] sm:$0xff]
        %v290 = vld [vmem:[%s260 + $0xe0] sm:$0xff]
        %v291 = vld [vmem:[%s260 + $0xe8] sm:$0x3]
        %v292 = vld [vmem:[%s260 + $0xf0] sm:$0xff]
        %v293 = vld [vmem:[%s260 + $0xf8] sm:$0xff]
        %v294 = vld [vmem:[%s260 + $0x100] sm:$0x3]
        %v295 = vld [vmem:[%s260 + $0x108] sm:$0xff]
        %v296 = vld [vmem:[%s260 + $0x110] sm:$0xff]
        %v297 = vld [vmem:[%s260 + $0x118] sm:$0x3]
        %v298 = vld [vmem:[%s260 + $0x120] sm:$0xff]
        %v299 = vld [vmem:[%s260 + $0x128] sm:$0xff]
        %v300 = vld [vmem:[%s260 + $0x130] sm:$0x3]
        %v301 = vld [vmem:[%s260 + $0x138] sm:$0xff]
        %v302 = vld [vmem:[%s260 + $0x140] sm:$0xff]
        %v303 = vld [vmem:[%s260 + $0x148] sm:$0x3]
        %v304 = vld [vmem:[%s260 + $0x150] sm:$0xff]
        %v305 = vld [vmem:[%s260 + $0x158] sm:$0xff]
        %v306 = vld [vmem:[%s260 + $0x160] sm:$0x3]
        %v307 = vld [vmem:[%s260 + $0x168] sm:$0xff]
        %v308 = vld [vmem:[%s260 + $0x170] sm:$0xff]
        %v309 = vld [vmem:[%s260 + $0x178] sm:$0x3]
        %v310 = vld [vmem:[%s260 + $0x180] sm:$0xff]
        %v311 = vld [vmem:[%s260 + $0x188] sm:$0xff]
        %v312 = vld [vmem:[%s260 + $0x190] sm:$0x3]
        %v313 = vld [vmem:[%s260 + $0x198] sm:$0xff]
        %v314 = vld [vmem:[%s260 + $0x1a0] sm:$0xff]
        %v315 = vld [vmem:[%s260 + $0x1a8] sm:$0x3]
        %vm364 = vcmask 1046528
        %v365 = vrot.slane %v262, 1
        %v366 = vrot.slane %v263, 1
        %v367 = vsel %vm364, %v365, %v366
        %v368 = vrot.slane %v264, 1
        %v369 = vsel %vm364, %v366, %v368
        %v370 = vrot.slane %v265, 1
        %v371 = vrot.slane %v266, 1
        %v372 = vsel %vm364, %v370, %v371
        %v373 = vrot.slane %v267, 1
        %v374 = vsel %vm364, %v371, %v373
        %v375 = vrot.slane %v268, 1
        %v376 = vrot.slane %v269, 1
        %v377 = vsel %vm364, %v375, %v376
        %v378 = vrot.slane %v270, 1
        %v379 = vsel %vm364, %v376, %v378
        %v380 = vrot.slane %v271, 1
        %v381 = vrot.slane %v272, 1
        %v382 = vsel %vm364, %v380, %v381
        %v383 = vrot.slane %v273, 1
        %v384 = vsel %vm364, %v381, %v383
        %v385 = vrot.slane %v274, 1
        %v386 = vrot.slane %v275, 1
        %v387 = vsel %vm364, %v385, %v386
        %v388 = vrot.slane %v276, 1
        %v389 = vsel %vm364, %v386, %v388
        %v390 = vrot.slane %v277, 1
        %v391 = vrot.slane %v278, 1
        %v392 = vsel %vm364, %v390, %v391
        %v393 = vrot.slane %v279, 1
        %v394 = vsel %vm364, %v391, %v393
        %v395 = vrot.slane %v280, 1
        %v396 = vrot.slane %v281, 1
        %v397 = vsel %vm364, %v395, %v396
        %v398 = vrot.slane %v282, 1
        %v399 = vsel %vm364, %v396, %v398
        %v400 = vrot.slane %v283, 1
        %v401 = vrot.slane %v284, 1
        %v402 = vsel %vm364, %v400, %v401
        %v403 = vrot.slane %v285, 1
        %v404 = vsel %vm364, %v401, %v403
        %v405 = vrot.slane %v286, 1
        %v406 = vrot.slane %v287, 1
        %v407 = vsel %vm364, %v405, %v406
        %v408 = vrot.slane %v288, 1
        %v409 = vsel %vm364, %v406, %v408
        %v410 = vrot.slane %v289, 1
        %v411 = vrot.slane %v290, 1
        %v412 = vsel %vm364, %v410, %v411
        %v413 = vrot.slane %v291, 1
        %v414 = vsel %vm364, %v411, %v413
        %v415 = vrot.slane %v292, 1
        %v416 = vrot.slane %v293, 1
        %v417 = vsel %vm364, %v415, %v416
        %v418 = vrot.slane %v294, 1
        %v419 = vsel %vm364, %v416, %v418
        %v420 = vrot.slane %v295, 1
        %v421 = vrot.slane %v296, 1
        %v422 = vsel %vm364, %v420, %v421
        %v423 = vrot.slane %v297, 1
        %v424 = vsel %vm364, %v421, %v423
        %v425 = vrot.slane %v298, 1
        %v426 = vrot.slane %v299, 1
        %v427 = vsel %vm364, %v425, %v426
        %v428 = vrot.slane %v300, 1
        %v429 = vsel %vm364, %v426, %v428
        %v430 = vrot.slane %v301, 1
        %v431 = vrot.slane %v302, 1
        %v432 = vsel %vm364, %v430, %v431
        %v433 = vrot.slane %v303, 1
        %v434 = vsel %vm364, %v431, %v433
        %v435 = vrot.slane %v304, 1
        %v436 = vrot.slane %v305, 1
        %v437 = vsel %vm364, %v435, %v436
        %v438 = vrot.slane %v306, 1
        %v439 = vsel %vm364, %v436, %v438
        %v440 = vrot.slane %v307, 1
        %v441 = vrot.slane %v308, 1
        %v442 = vsel %vm364, %v440, %v441
        %v443 = vrot.slane %v309, 1
        %v444 = vsel %vm364, %v441, %v443
        %445 = vrot.lane.b32.xlu0 %v367, 3
        %v446 = vpop.permute.xlu0 %445
        %447 = vrot.lane.b32.xlu0 %v369, 3
        %v448 = vpop.permute.xlu0 %447
        %449 = vrot.lane.b32.xlu0 %v372, 3
        %v450 = vpop.permute.xlu0 %449
        %451 = vrot.lane.b32.xlu0 %v374, 3
        %v452 = vpop.permute.xlu0 %451
        %453 = vrot.lane.b32.xlu0 %v377, 3
        %v454 = vpop.permute.xlu0 %453
        %455 = vrot.lane.b32.xlu0 %v379, 3
        %v456 = vpop.permute.xlu0 %455
        %457 = vrot.lane.b32.xlu0 %v382, 3
        %v458 = vpop.permute.xlu0 %457
        %459 = vrot.lane.b32.xlu0 %v384, 3
        %v460 = vpop.permute.xlu0 %459
        %461 = vrot.lane.b32.xlu0 %v387, 3
        %v462 = vpop.permute.xlu0 %461
        %463 = vrot.lane.b32.xlu0 %v389, 3
        %v464 = vpop.permute.xlu0 %463
        %465 = vrot.lane.b32.xlu0 %v392, 3
        %v466 = vpop.permute.xlu0 %465
        %467 = vrot.lane.b32.xlu0 %v394, 3
        %v468 = vpop.permute.xlu0 %467
        %469 = vrot.lane.b32.xlu0 %v397, 3
        %v470 = vpop.permute.xlu0 %469
        %471 = vrot.lane.b32.xlu0 %v399, 3
        %v472 = vpop.permute.xlu0 %471
        %473 = vrot.lane.b32.xlu0 %v402, 3
        %v474 = vpop.permute.xlu0 %473
        %475 = vrot.lane.b32.xlu0 %v404, 3
        %v476 = vpop.permute.xlu0 %475
        %477 = vrot.lane.b32.xlu0 %v407, 3
        %v478 = vpop.permute.xlu0 %477
        %479 = vrot.lane.b32.xlu0 %v409, 3
        %v480 = vpop.permute.xlu0 %479
        %481 = vrot.lane.b32.xlu0 %v412, 3
        %v482 = vpop.permute.xlu0 %481
        %483 = vrot.lane.b32.xlu0 %v414, 3
        %v484 = vpop.permute.xlu0 %483
        %485 = vrot.lane.b32.xlu0 %v417, 3
        %v486 = vpop.permute.xlu0 %485
        %487 = vrot.lane.b32.xlu0 %v419, 3
        %v488 = vpop.permute.xlu0 %487
        %489 = vrot.lane.b32.xlu0 %v422, 3
        %v490 = vpop.permute.xlu0 %489
        %491 = vrot.lane.b32.xlu0 %v424, 3
        %v492 = vpop.permute.xlu0 %491
        %493 = vrot.lane.b32.xlu0 %v427, 3
        %v494 = vpop.permute.xlu0 %493
        %495 = vrot.lane.b32.xlu0 %v429, 3
        %v496 = vpop.permute.xlu0 %495
        %497 = vrot.lane.b32.xlu0 %v432, 3
        %v498 = vpop.permute.xlu0 %497
        %499 = vrot.lane.b32.xlu0 %v434, 3
        %v500 = vpop.permute.xlu0 %499
        %501 = vrot.lane.b32.xlu0 %v437, 3
        %v502 = vpop.permute.xlu0 %501
        %503 = vrot.lane.b32.xlu0 %v439, 3
        %v504 = vpop.permute.xlu0 %503
        %505 = vrot.lane.b32.xlu0 %v442, 3
        %v506 = vpop.permute.xlu0 %505
        %507 = vrot.lane.b32.xlu0 %v444, 3
        %v508 = vpop.permute.xlu0 %507
        %vm541 = vcmask 1045504
        %v542 = vrot.slane %v262, 2
        %v543 = vrot.slane %v263, 2
        %v544 = vsel %vm541, %v542, %v543
        %v545 = vrot.slane %v264, 2
        %v546 = vsel %vm541, %v543, %v545
        %v547 = vrot.slane %v265, 2
        %v548 = vrot.slane %v266, 2
        %v549 = vsel %vm541, %v547, %v548
        %v550 = vrot.slane %v267, 2
        %v551 = vsel %vm541, %v548, %v550
        %v552 = vrot.slane %v268, 2
        %v553 = vrot.slane %v269, 2
        %v554 = vsel %vm541, %v552, %v553
        %v555 = vrot.slane %v270, 2
        %v556 = vsel %vm541, %v553, %v555
        %v557 = vrot.slane %v271, 2
        %v558 = vrot.slane %v272, 2
        %v559 = vsel %vm541, %v557, %v558
        %v560 = vrot.slane %v273, 2
        %v561 = vsel %vm541, %v558, %v560
        %v562 = vrot.slane %v274, 2
        %v563 = vrot.slane %v275, 2
        %v564 = vsel %vm541, %v562, %v563
        %v565 = vrot.slane %v276, 2
        %v566 = vsel %vm541, %v563, %v565
        %v567 = vrot.slane %v277, 2
        %v568 = vrot.slane %v278, 2
        %v569 = vsel %vm541, %v567, %v568
        %v570 = vrot.slane %v279, 2
        %v571 = vsel %vm541, %v568, %v570
        %v572 = vrot.slane %v280, 2
        %v573 = vrot.slane %v281, 2
        %v574 = vsel %vm541, %v572, %v573
        %v575 = vrot.slane %v282, 2
        %v576 = vsel %vm541, %v573, %v575
        %v577 = vrot.slane %v283, 2
        %v578 = vrot.slane %v284, 2
        %v579 = vsel %vm541, %v577, %v578
        %v580 = vrot.slane %v285, 2
        %v581 = vsel %vm541, %v578, %v580
        %v582 = vrot.slane %v286, 2
        %v583 = vrot.slane %v287, 2
        %v584 = vsel %vm541, %v582, %v583
        %v585 = vrot.slane %v288, 2
        %v586 = vsel %vm541, %v583, %v585
        %v587 = vrot.slane %v289, 2
        %v588 = vrot.slane %v290, 2
        %v589 = vsel %vm541, %v587, %v588
        %v590 = vrot.slane %v291, 2
        %v591 = vsel %vm541, %v588, %v590
        %v592 = vrot.slane %v292, 2
        %v593 = vrot.slane %v293, 2
        %v594 = vsel %vm541, %v592, %v593
        %v595 = vrot.slane %v294, 2
        %v596 = vsel %vm541, %v593, %v595
        %v597 = vrot.slane %v295, 2
        %v598 = vrot.slane %v296, 2
        %v599 = vsel %vm541, %v597, %v598
        %v600 = vrot.slane %v297, 2
        %v601 = vsel %vm541, %v598, %v600
        %v602 = vrot.slane %v298, 2
        %v603 = vrot.slane %v299, 2
        %v604 = vsel %vm541, %v602, %v603
        %v605 = vrot.slane %v300, 2
        %v606 = vsel %vm541, %v603, %v605
        %v607 = vrot.slane %v301, 2
        %v608 = vrot.slane %v302, 2
        %v609 = vsel %vm541, %v607, %v608
        %v610 = vrot.slane %v303, 2
        %v611 = vsel %vm541, %v608, %v610
        %v612 = vrot.slane %v304, 2
        %v613 = vrot.slane %v305, 2
        %v614 = vsel %vm541, %v612, %v613
        %v615 = vrot.slane %v306, 2
        %v616 = vsel %vm541, %v613, %v615
        %v617 = vrot.slane %v307, 2
        %v618 = vrot.slane %v308, 2
        %v619 = vsel %vm541, %v617, %v618
        %v620 = vrot.slane %v309, 2
        %v621 = vsel %vm541, %v618, %v620
        %622 = vrot.lane.b32.xlu0 %v544, 6
        %v623 = vpop.permute.xlu0 %622
        %624 = vrot.lane.b32.xlu0 %v546, 6
        %v625 = vpop.permute.xlu0 %624
        %626 = vrot.lane.b32.xlu0 %v549, 6
        %v627 = vpop.permute.xlu0 %626
        %628 = vrot.lane.b32.xlu0 %v551, 6
        %v629 = vpop.permute.xlu0 %628
        %630 = vrot.lane.b32.xlu0 %v554, 6
        %v631 = vpop.permute.xlu0 %630
        %632 = vrot.lane.b32.xlu0 %v556, 6
        %v633 = vpop.permute.xlu0 %632
        %634 = vrot.lane.b32.xlu0 %v559, 6
        %v635 = vpop.permute.xlu0 %634
        %636 = vrot.lane.b32.xlu0 %v561, 6
        %v637 = vpop.permute.xlu0 %636
        %638 = vrot.lane.b32.xlu0 %v564, 6
        %v639 = vpop.permute.xlu0 %638
        %640 = vrot.lane.b32.xlu0 %v566, 6
        %v641 = vpop.permute.xlu0 %640
        %642 = vrot.lane.b32.xlu0 %v569, 6
        %v643 = vpop.permute.xlu0 %642
        %644 = vrot.lane.b32.xlu0 %v571, 6
        %v645 = vpop.permute.xlu0 %644
        %646 = vrot.lane.b32.xlu0 %v574, 6
        %v647 = vpop.permute.xlu0 %646
        %648 = vrot.lane.b32.xlu0 %v576, 6
        %v649 = vpop.permute.xlu0 %648
        %650 = vrot.lane.b32.xlu0 %v579, 6
        %v651 = vpop.permute.xlu0 %650
        %652 = vrot.lane.b32.xlu0 %v581, 6
        %v653 = vpop.permute.xlu0 %652
        %654 = vrot.lane.b32.xlu0 %v584, 6
        %v655 = vpop.permute.xlu0 %654
        %656 = vrot.lane.b32.xlu0 %v586, 6
        %v657 = vpop.permute.xlu0 %656
        %658 = vrot.lane.b32.xlu0 %v589, 6
        %v659 = vpop.permute.xlu0 %658
        %660 = vrot.lane.b32.xlu0 %v591, 6
        %v661 = vpop.permute.xlu0 %660
        %662 = vrot.lane.b32.xlu0 %v594, 6
        %v663 = vpop.permute.xlu0 %662
        %664 = vrot.lane.b32.xlu0 %v596, 6
        %v665 = vpop.permute.xlu0 %664
        %666 = vrot.lane.b32.xlu0 %v599, 6
        %v667 = vpop.permute.xlu0 %666
        %668 = vrot.lane.b32.xlu0 %v601, 6
        %v669 = vpop.permute.xlu0 %668
        %670 = vrot.lane.b32.xlu0 %v604, 6
        %v671 = vpop.permute.xlu0 %670
        %672 = vrot.lane.b32.xlu0 %v606, 6
        %v673 = vpop.permute.xlu0 %672
        %674 = vrot.lane.b32.xlu0 %v609, 6
        %v675 = vpop.permute.xlu0 %674
        %676 = vrot.lane.b32.xlu0 %v611, 6
        %v677 = vpop.permute.xlu0 %676
        %678 = vrot.lane.b32.xlu0 %v614, 6
        %v679 = vpop.permute.xlu0 %678
        %680 = vrot.lane.b32.xlu0 %v616, 6
        %v681 = vpop.permute.xlu0 %680
        %682 = vrot.lane.b32.xlu0 %v619, 6
        %v683 = vpop.permute.xlu0 %682
        %684 = vrot.lane.b32.xlu0 %v621, 6
        %v685 = vpop.permute.xlu0 %684
        %720 = vrot.lane.b32.xlu0 %v265, 9
        %v721 = vpop.permute.xlu0 %720
        %722 = vrot.lane.b32.xlu0 %v266, 9
        %v723 = vpop.permute.xlu0 %722
        %724 = vrot.lane.b32.xlu0 %v268, 9
        %v725 = vpop.permute.xlu0 %724
        %726 = vrot.lane.b32.xlu0 %v269, 9
        %v727 = vpop.permute.xlu0 %726
        %728 = vrot.lane.b32.xlu0 %v271, 9
        %v729 = vpop.permute.xlu0 %728
        %730 = vrot.lane.b32.xlu0 %v272, 9
        %v731 = vpop.permute.xlu0 %730
        %732 = vrot.lane.b32.xlu0 %v274, 9
        %v733 = vpop.permute.xlu0 %732
        %734 = vrot.lane.b32.xlu0 %v275, 9
        %v735 = vpop.permute.xlu0 %734
        %736 = vrot.lane.b32.xlu0 %v277, 9
        %v737 = vpop.permute.xlu0 %736
        %738 = vrot.lane.b32.xlu0 %v278, 9
        %v739 = vpop.permute.xlu0 %738
        %740 = vrot.lane.b32.xlu0 %v280, 9
        %v741 = vpop.permute.xlu0 %740
        %742 = vrot.lane.b32.xlu0 %v281, 9
        %v743 = vpop.permute.xlu0 %742
        %744 = vrot.lane.b32.xlu0 %v283, 9
        %v745 = vpop.permute.xlu0 %744
        %746 = vrot.lane.b32.xlu0 %v284, 9
        %v747 = vpop.permute.xlu0 %746
        %748 = vrot.lane.b32.xlu0 %v286, 9
        %v749 = vpop.permute.xlu0 %748
        %750 = vrot.lane.b32.xlu0 %v287, 9
        %v751 = vpop.permute.xlu0 %750
        %752 = vrot.lane.b32.xlu0 %v289, 9
        %v753 = vpop.permute.xlu0 %752
        %754 = vrot.lane.b32.xlu0 %v290, 9
        %v755 = vpop.permute.xlu0 %754
        %756 = vrot.lane.b32.xlu0 %v292, 9
        %v757 = vpop.permute.xlu0 %756
        %758 = vrot.lane.b32.xlu0 %v293, 9
        %v759 = vpop.permute.xlu0 %758
        %760 = vrot.lane.b32.xlu0 %v295, 9
        %v761 = vpop.permute.xlu0 %760
        %762 = vrot.lane.b32.xlu0 %v296, 9
        %v763 = vpop.permute.xlu0 %762
        %764 = vrot.lane.b32.xlu0 %v298, 9
        %v765 = vpop.permute.xlu0 %764
        %766 = vrot.lane.b32.xlu0 %v299, 9
        %v767 = vpop.permute.xlu0 %766
        %768 = vrot.lane.b32.xlu0 %v301, 9
        %v769 = vpop.permute.xlu0 %768
        %770 = vrot.lane.b32.xlu0 %v302, 9
        %v771 = vpop.permute.xlu0 %770
        %772 = vrot.lane.b32.xlu0 %v304, 9
        %v773 = vpop.permute.xlu0 %772
        %774 = vrot.lane.b32.xlu0 %v305, 9
        %v775 = vpop.permute.xlu0 %774
        %776 = vrot.lane.b32.xlu0 %v307, 9
        %v777 = vpop.permute.xlu0 %776
        %778 = vrot.lane.b32.xlu0 %v308, 9
        %v779 = vpop.permute.xlu0 %778
        %780 = vrot.lane.b32.xlu0 %v310, 9
        %v781 = vpop.permute.xlu0 %780
        %782 = vrot.lane.b32.xlu0 %v311, 9
        %v783 = vpop.permute.xlu0 %782
        %v817 = vrot.slane %v310, 1
        %v818 = vrot.slane %v311, 1
        %v819 = vsel %vm364, %v817, %v818
        %v820 = vrot.slane %v312, 1
        %v821 = vsel %vm364, %v818, %v820
        %822 = vrot.lane.b32.xlu0 %v372, 12
        %v823 = vpop.permute.xlu0 %822
        %824 = vrot.lane.b32.xlu0 %v374, 12
        %v825 = vpop.permute.xlu0 %824
        %826 = vrot.lane.b32.xlu0 %v377, 12
        %v827 = vpop.permute.xlu0 %826
        %828 = vrot.lane.b32.xlu0 %v379, 12
        %v829 = vpop.permute.xlu0 %828
        %830 = vrot.lane.b32.xlu0 %v382, 12
        %v831 = vpop.permute.xlu0 %830
        %832 = vrot.lane.b32.xlu0 %v384, 12
        %v833 = vpop.permute.xlu0 %832
        %834 = vrot.lane.b32.xlu0 %v387, 12
        %v835 = vpop.permute.xlu0 %834
        %836 = vrot.lane.b32.xlu0 %v389, 12
        %v837 = vpop.permute.xlu0 %836
        %838 = vrot.lane.b32.xlu0 %v392, 12
        %v839 = vpop.permute.xlu0 %838
        %840 = vrot.lane.b32.xlu0 %v394, 12
        %v841 = vpop.permute.xlu0 %840
        %842 = vrot.lane.b32.xlu0 %v397, 12
        %v843 = vpop.permute.xlu0 %842
        %844 = vrot.lane.b32.xlu0 %v399, 12
        %v845 = vpop.permute.xlu0 %844
        %846 = vrot.lane.b32.xlu0 %v402, 12
        %v847 = vpop.permute.xlu0 %846
        %848 = vrot.lane.b32.xlu0 %v404, 12
        %v849 = vpop.permute.xlu0 %848
        %850 = vrot.lane.b32.xlu0 %v407, 12
        %v851 = vpop.permute.xlu0 %850
        %852 = vrot.lane.b32.xlu0 %v409, 12
        %v853 = vpop.permute.xlu0 %852
        %854 = vrot.lane.b32.xlu0 %v412, 12
        %v855 = vpop.permute.xlu0 %854
        %856 = vrot.lane.b32.xlu0 %v414, 12
        %v857 = vpop.permute.xlu0 %856
        %858 = vrot.lane.b32.xlu0 %v417, 12
        %v859 = vpop.permute.xlu0 %858
        %860 = vrot.lane.b32.xlu0 %v419, 12
        %v861 = vpop.permute.xlu0 %860
        %862 = vrot.lane.b32.xlu0 %v422, 12
        %v863 = vpop.permute.xlu0 %862
        %864 = vrot.lane.b32.xlu0 %v424, 12
        %v865 = vpop.permute.xlu0 %864
        %866 = vrot.lane.b32.xlu0 %v427, 12
        %v867 = vpop.permute.xlu0 %866
        %868 = vrot.lane.b32.xlu0 %v429, 12
        %v869 = vpop.permute.xlu0 %868
        %870 = vrot.lane.b32.xlu0 %v432, 12
        %v871 = vpop.permute.xlu0 %870
        %872 = vrot.lane.b32.xlu0 %v434, 12
        %v873 = vpop.permute.xlu0 %872
        %874 = vrot.lane.b32.xlu0 %v437, 12
        %v875 = vpop.permute.xlu0 %874
        %876 = vrot.lane.b32.xlu0 %v439, 12
        %v877 = vpop.permute.xlu0 %876
        %878 = vrot.lane.b32.xlu0 %v442, 12
        %v879 = vpop.permute.xlu0 %878
        %880 = vrot.lane.b32.xlu0 %v444, 12
        %v881 = vpop.permute.xlu0 %880
        %882 = vrot.lane.b32.xlu0 %v819, 12
        %v883 = vpop.permute.xlu0 %882
        %884 = vrot.lane.b32.xlu0 %v821, 12
        %v885 = vpop.permute.xlu0 %884
        %v918 = vrot.slane %v310, 2
        %v919 = vrot.slane %v311, 2
        %v920 = vsel %vm541, %v918, %v919
        %v921 = vrot.slane %v312, 2
        %v922 = vsel %vm541, %v919, %v921
        %923 = vrot.lane.b32.xlu0 %v549, 15
        %v924 = vpop.permute.xlu0 %923
        %925 = vrot.lane.b32.xlu0 %v551, 15
        %v926 = vpop.permute.xlu0 %925
        %927 = vrot.lane.b32.xlu0 %v554, 15
        %v928 = vpop.permute.xlu0 %927
        %929 = vrot.lane.b32.xlu0 %v556, 15
        %v930 = vpop.permute.xlu0 %929
        %931 = vrot.lane.b32.xlu0 %v559, 15
        %v932 = vpop.permute.xlu0 %931
        %933 = vrot.lane.b32.xlu0 %v561, 15
        %v934 = vpop.permute.xlu0 %933
        %935 = vrot.lane.b32.xlu0 %v564, 15
        %v936 = vpop.permute.xlu0 %935
        %937 = vrot.lane.b32.xlu0 %v566, 15
        %v938 = vpop.permute.xlu0 %937
        %939 = vrot.lane.b32.xlu0 %v569, 15
        %v940 = vpop.permute.xlu0 %939
        %941 = vrot.lane.b32.xlu0 %v571, 15
        %v942 = vpop.permute.xlu0 %941
        %943 = vrot.lane.b32.xlu0 %v574, 15
        %v944 = vpop.permute.xlu0 %943
        %945 = vrot.lane.b32.xlu0 %v576, 15
        %v946 = vpop.permute.xlu0 %945
        %947 = vrot.lane.b32.xlu0 %v579, 15
        %v948 = vpop.permute.xlu0 %947
        %949 = vrot.lane.b32.xlu0 %v581, 15
        %v950 = vpop.permute.xlu0 %949
        %951 = vrot.lane.b32.xlu0 %v584, 15
        %v952 = vpop.permute.xlu0 %951
        %953 = vrot.lane.b32.xlu0 %v586, 15
        %v954 = vpop.permute.xlu0 %953
        %955 = vrot.lane.b32.xlu0 %v589, 15
        %v956 = vpop.permute.xlu0 %955
        %957 = vrot.lane.b32.xlu0 %v591, 15
        %v958 = vpop.permute.xlu0 %957
        %959 = vrot.lane.b32.xlu0 %v594, 15
        %v960 = vpop.permute.xlu0 %959
        %961 = vrot.lane.b32.xlu0 %v596, 15
        %v962 = vpop.permute.xlu0 %961
        %963 = vrot.lane.b32.xlu0 %v599, 15
        %v964 = vpop.permute.xlu0 %963
        %965 = vrot.lane.b32.xlu0 %v601, 15
        %v966 = vpop.permute.xlu0 %965
        %967 = vrot.lane.b32.xlu0 %v604, 15
        %v968 = vpop.permute.xlu0 %967
        %969 = vrot.lane.b32.xlu0 %v606, 15
        %v970 = vpop.permute.xlu0 %969
        %971 = vrot.lane.b32.xlu0 %v609, 15
        %v972 = vpop.permute.xlu0 %971
        %973 = vrot.lane.b32.xlu0 %v611, 15
        %v974 = vpop.permute.xlu0 %973
        %975 = vrot.lane.b32.xlu0 %v614, 15
        %v976 = vpop.permute.xlu0 %975
        %977 = vrot.lane.b32.xlu0 %v616, 15
        %v978 = vpop.permute.xlu0 %977
        %979 = vrot.lane.b32.xlu0 %v619, 15
        %v980 = vpop.permute.xlu0 %979
        %981 = vrot.lane.b32.xlu0 %v621, 15
        %v982 = vpop.permute.xlu0 %981
        %983 = vrot.lane.b32.xlu0 %v920, 15
        %v984 = vpop.permute.xlu0 %983
        %985 = vrot.lane.b32.xlu0 %v922, 15
        %v986 = vpop.permute.xlu0 %985
        %1021 = vrot.lane.b32.xlu0 %v268, 18
        %v1022 = vpop.permute.xlu0 %1021
        %1023 = vrot.lane.b32.xlu0 %v269, 18
        %v1024 = vpop.permute.xlu0 %1023
        %1025 = vrot.lane.b32.xlu0 %v271, 18
        %v1026 = vpop.permute.xlu0 %1025
        %1027 = vrot.lane.b32.xlu0 %v272, 18
        %v1028 = vpop.permute.xlu0 %1027
        %1029 = vrot.lane.b32.xlu0 %v274, 18
        %v1030 = vpop.permute.xlu0 %1029
        %1031 = vrot.lane.b32.xlu0 %v275, 18
        %v1032 = vpop.permute.xlu0 %1031
        %1033 = vrot.lane.b32.xlu0 %v277, 18
        %v1034 = vpop.permute.xlu0 %1033
        %1035 = vrot.lane.b32.xlu0 %v278, 18
        %v1036 = vpop.permute.xlu0 %1035
        %1037 = vrot.lane.b32.xlu0 %v280, 18
        %v1038 = vpop.permute.xlu0 %1037
        %1039 = vrot.lane.b32.xlu0 %v281, 18
        %v1040 = vpop.permute.xlu0 %1039
        %1041 = vrot.lane.b32.xlu0 %v283, 18
        %v1042 = vpop.permute.xlu0 %1041
        %1043 = vrot.lane.b32.xlu0 %v284, 18
        %v1044 = vpop.permute.xlu0 %1043
        %1045 = vrot.lane.b32.xlu0 %v286, 18
        %v1046 = vpop.permute.xlu0 %1045
        %1047 = vrot.lane.b32.xlu0 %v287, 18
        %v1048 = vpop.permute.xlu0 %1047
        %1049 = vrot.lane.b32.xlu0 %v289, 18
        %v1050 = vpop.permute.xlu0 %1049
        %1051 = vrot.lane.b32.xlu0 %v290, 18
        %v1052 = vpop.permute.xlu0 %1051
        %1053 = vrot.lane.b32.xlu0 %v292, 18
        %v1054 = vpop.permute.xlu0 %1053
        %1055 = vrot.lane.b32.xlu0 %v293, 18
        %v1056 = vpop.permute.xlu0 %1055
        %1057 = vrot.lane.b32.xlu0 %v295, 18
        %v1058 = vpop.permute.xlu0 %1057
        %1059 = vrot.lane.b32.xlu0 %v296, 18
        %v1060 = vpop.permute.xlu0 %1059
        %1061 = vrot.lane.b32.xlu0 %v298, 18
        %v1062 = vpop.permute.xlu0 %1061
        %1063 = vrot.lane.b32.xlu0 %v299, 18
        %v1064 = vpop.permute.xlu0 %1063
        %1065 = vrot.lane.b32.xlu0 %v301, 18
        %v1066 = vpop.permute.xlu0 %1065
        %1067 = vrot.lane.b32.xlu0 %v302, 18
        %v1068 = vpop.permute.xlu0 %1067
        %1069 = vrot.lane.b32.xlu0 %v304, 18
        %v1070 = vpop.permute.xlu0 %1069
        %1071 = vrot.lane.b32.xlu0 %v305, 18
        %v1072 = vpop.permute.xlu0 %1071
        %1073 = vrot.lane.b32.xlu0 %v307, 18
        %v1074 = vpop.permute.xlu0 %1073
        %1075 = vrot.lane.b32.xlu0 %v308, 18
        %v1076 = vpop.permute.xlu0 %1075
        %1077 = vrot.lane.b32.xlu0 %v310, 18
        %v1078 = vpop.permute.xlu0 %1077
        %1079 = vrot.lane.b32.xlu0 %v311, 18
        %v1080 = vpop.permute.xlu0 %1079
        %1081 = vrot.lane.b32.xlu0 %v313, 18
        %v1082 = vpop.permute.xlu0 %1081
        %1083 = vrot.lane.b32.xlu0 %v314, 18
        %v1084 = vpop.permute.xlu0 %1083
        %v1118 = vrot.slane %v313, 1
        %v1119 = vrot.slane %v314, 1
        %v1120 = vsel %vm364, %v1118, %v1119
        %v1121 = vrot.slane %v315, 1
        %v1122 = vsel %vm364, %v1119, %v1121
        %1123 = vrot.lane.b32.xlu0 %v377, 21
        %v1124 = vpop.permute.xlu0 %1123
        %1125 = vrot.lane.b32.xlu0 %v379, 21
        %v1126 = vpop.permute.xlu0 %1125
        %1127 = vrot.lane.b32.xlu0 %v382, 21
        %v1128 = vpop.permute.xlu0 %1127
        %1129 = vrot.lane.b32.xlu0 %v384, 21
        %v1130 = vpop.permute.xlu0 %1129
        %1131 = vrot.lane.b32.xlu0 %v387, 21
        %v1132 = vpop.permute.xlu0 %1131
        %1133 = vrot.lane.b32.xlu0 %v389, 21
        %v1134 = vpop.permute.xlu0 %1133
        %1135 = vrot.lane.b32.xlu0 %v392, 21
        %v1136 = vpop.permute.xlu0 %1135
        %1137 = vrot.lane.b32.xlu0 %v394, 21
        %v1138 = vpop.permute.xlu0 %1137
        %1139 = vrot.lane.b32.xlu0 %v397, 21
        %v1140 = vpop.permute.xlu0 %1139
        %1141 = vrot.lane.b32.xlu0 %v399, 21
        %v1142 = vpop.permute.xlu0 %1141
        %1143 = vrot.lane.b32.xlu0 %v402, 21
        %v1144 = vpop.permute.xlu0 %1143
        %1145 = vrot.lane.b32.xlu0 %v404, 21
        %v1146 = vpop.permute.xlu0 %1145
        %1147 = vrot.lane.b32.xlu0 %v407, 21
        %v1148 = vpop.permute.xlu0 %1147
        %1149 = vrot.lane.b32.xlu0 %v409, 21
        %v1150 = vpop.permute.xlu0 %1149
        %1151 = vrot.lane.b32.xlu0 %v412, 21
        %v1152 = vpop.permute.xlu0 %1151
        %1153 = vrot.lane.b32.xlu0 %v414, 21
        %v1154 = vpop.permute.xlu0 %1153
        %1155 = vrot.lane.b32.xlu0 %v417, 21
        %v1156 = vpop.permute.xlu0 %1155
        %1157 = vrot.lane.b32.xlu0 %v419, 21
        %v1158 = vpop.permute.xlu0 %1157
        %1159 = vrot.lane.b32.xlu0 %v422, 21
        %v1160 = vpop.permute.xlu0 %1159
        %1161 = vrot.lane.b32.xlu0 %v424, 21
        %v1162 = vpop.permute.xlu0 %1161
        %1163 = vrot.lane.b32.xlu0 %v427, 21
        %v1164 = vpop.permute.xlu0 %1163
        %1165 = vrot.lane.b32.xlu0 %v429, 21
        %v1166 = vpop.permute.xlu0 %1165
        %1167 = vrot.lane.b32.xlu0 %v432, 21
        %v1168 = vpop.permute.xlu0 %1167
        %1169 = vrot.lane.b32.xlu0 %v434, 21
        %v1170 = vpop.permute.xlu0 %1169
        %1171 = vrot.lane.b32.xlu0 %v437, 21
        %v1172 = vpop.permute.xlu0 %1171
        %1173 = vrot.lane.b32.xlu0 %v439, 21
        %v1174 = vpop.permute.xlu0 %1173
        %1175 = vrot.lane.b32.xlu0 %v442, 21
        %v1176 = vpop.permute.xlu0 %1175
        %1177 = vrot.lane.b32.xlu0 %v444, 21
        %v1178 = vpop.permute.xlu0 %1177
        %1179 = vrot.lane.b32.xlu0 %v819, 21
        %v1180 = vpop.permute.xlu0 %1179
        %1181 = vrot.lane.b32.xlu0 %v821, 21
        %v1182 = vpop.permute.xlu0 %1181
        %1183 = vrot.lane.b32.xlu0 %v1120, 21
        %v1184 = vpop.permute.xlu0 %1183
        %1185 = vrot.lane.b32.xlu0 %v1122, 21
        %v1186 = vpop.permute.xlu0 %1185
        %v1219 = vrot.slane %v313, 2
        %v1220 = vrot.slane %v314, 2
        %v1221 = vsel %vm541, %v1219, %v1220
        %v1222 = vrot.slane %v315, 2
        %v1223 = vsel %vm541, %v1220, %v1222
        %1224 = vrot.lane.b32.xlu0 %v554, 24
        %v1225 = vpop.permute.xlu0 %1224
        %1226 = vrot.lane.b32.xlu0 %v556, 24
        %v1227 = vpop.permute.xlu0 %1226
        %1228 = vrot.lane.b32.xlu0 %v559, 24
        %v1229 = vpop.permute.xlu0 %1228
        %1230 = vrot.lane.b32.xlu0 %v561, 24
        %v1231 = vpop.permute.xlu0 %1230
        %1232 = vrot.lane.b32.xlu0 %v564, 24
        %v1233 = vpop.permute.xlu0 %1232
        %1234 = vrot.lane.b32.xlu0 %v566, 24
        %v1235 = vpop.permute.xlu0 %1234
        %1236 = vrot.lane.b32.xlu0 %v569, 24
        %v1237 = vpop.permute.xlu0 %1236
        %1238 = vrot.lane.b32.xlu0 %v571, 24
        %v1239 = vpop.permute.xlu0 %1238
        %1240 = vrot.lane.b32.xlu0 %v574, 24
        %v1241 = vpop.permute.xlu0 %1240
        %1242 = vrot.lane.b32.xlu0 %v576, 24
        %v1243 = vpop.permute.xlu0 %1242
        %1244 = vrot.lane.b32.xlu0 %v579, 24
        %v1245 = vpop.permute.xlu0 %1244
        %1246 = vrot.lane.b32.xlu0 %v581, 24
        %v1247 = vpop.permute.xlu0 %1246
        %1248 = vrot.lane.b32.xlu0 %v584, 24
        %v1249 = vpop.permute.xlu0 %1248
        %1250 = vrot.lane.b32.xlu0 %v586, 24
        %v1251 = vpop.permute.xlu0 %1250
        %1252 = vrot.lane.b32.xlu0 %v589, 24
        %v1253 = vpop.permute.xlu0 %1252
        %1254 = vrot.lane.b32.xlu0 %v591, 24
        %v1255 = vpop.permute.xlu0 %1254
        %1256 = vrot.lane.b32.xlu0 %v594, 24
        %v1257 = vpop.permute.xlu0 %1256
        %1258 = vrot.lane.b32.xlu0 %v596, 24
        %v1259 = vpop.permute.xlu0 %1258
        %1260 = vrot.lane.b32.xlu0 %v599, 24
        %v1261 = vpop.permute.xlu0 %1260
        %1262 = vrot.lane.b32.xlu0 %v601, 24
        %v1263 = vpop.permute.xlu0 %1262
        %1264 = vrot.lane.b32.xlu0 %v604, 24
        %v1265 = vpop.permute.xlu0 %1264
        %1266 = vrot.lane.b32.xlu0 %v606, 24
        %v1267 = vpop.permute.xlu0 %1266
        %1268 = vrot.lane.b32.xlu0 %v609, 24
        %v1269 = vpop.permute.xlu0 %1268
        %1270 = vrot.lane.b32.xlu0 %v611, 24
        %v1271 = vpop.permute.xlu0 %1270
        %1272 = vrot.lane.b32.xlu0 %v614, 24
        %v1273 = vpop.permute.xlu0 %1272
        %1274 = vrot.lane.b32.xlu0 %v616, 24
        %v1275 = vpop.permute.xlu0 %1274
        %1276 = vrot.lane.b32.xlu0 %v619, 24
        %v1277 = vpop.permute.xlu0 %1276
        %1278 = vrot.lane.b32.xlu0 %v621, 24
        %v1279 = vpop.permute.xlu0 %1278
        %1280 = vrot.lane.b32.xlu0 %v920, 24
        %v1281 = vpop.permute.xlu0 %1280
        %1282 = vrot.lane.b32.xlu0 %v922, 24
        %v1283 = vpop.permute.xlu0 %1282
        %1284 = vrot.lane.b32.xlu0 %v1221, 24
        %v1285 = vpop.permute.xlu0 %1284
        %1286 = vrot.lane.b32.xlu0 %v1223, 24
        %v1287 = vpop.permute.xlu0 %1286
        %vm1320 = vcmask 23552
        %v1321 = vsel %vm1320, %v262, %v446
        %v1322 = vsel %vm1320, %v263, %v448
        %v1323 = vsel %vm1320, %v265, %v450
        %v1324 = vsel %vm1320, %v266, %v452
        %v1325 = vsel %vm1320, %v268, %v454
        %v1326 = vsel %vm1320, %v269, %v456
        %v1327 = vsel %vm1320, %v271, %v458
        %v1328 = vsel %vm1320, %v272, %v460
        %v1329 = vsel %vm1320, %v274, %v462
        %v1330 = vsel %vm1320, %v275, %v464
        %v1331 = vsel %vm1320, %v277, %v466
        %v1332 = vsel %vm1320, %v278, %v468
        %v1333 = vsel %vm1320, %v280, %v470
        %v1334 = vsel %vm1320, %v281, %v472
        %v1335 = vsel %vm1320, %v283, %v474
        %v1336 = vsel %vm1320, %v284, %v476
        %v1337 = vsel %vm1320, %v286, %v478
        %v1338 = vsel %vm1320, %v287, %v480
        %v1339 = vsel %vm1320, %v289, %v482
        %v1340 = vsel %vm1320, %v290, %v484
        %v1341 = vsel %vm1320, %v292, %v486
        %v1342 = vsel %vm1320, %v293, %v488
        %v1343 = vsel %vm1320, %v295, %v490
        %v1344 = vsel %vm1320, %v296, %v492
        %v1345 = vsel %vm1320, %v298, %v494
        %v1346 = vsel %vm1320, %v299, %v496
        %v1347 = vsel %vm1320, %v301, %v498
        %v1348 = vsel %vm1320, %v302, %v500
        %v1349 = vsel %vm1320, %v304, %v502
        %v1350 = vsel %vm1320, %v305, %v504
        %v1351 = vsel %vm1320, %v307, %v506
        %v1352 = vsel %vm1320, %v308, %v508
        %vm1353 = vcmask 48128
        %v1354 = vsel %vm1353, %v1321, %v623
        %v1355 = vsel %vm1353, %v1322, %v625
        %v1356 = vsel %vm1353, %v1323, %v627
        %v1357 = vsel %vm1353, %v1324, %v629
        %v1358 = vsel %vm1353, %v1325, %v631
        %v1359 = vsel %vm1353, %v1326, %v633
        %v1360 = vsel %vm1353, %v1327, %v635
        %v1361 = vsel %vm1353, %v1328, %v637
        %v1362 = vsel %vm1353, %v1329, %v639
        %v1363 = vsel %vm1353, %v1330, %v641
        %v1364 = vsel %vm1353, %v1331, %v643
        %v1365 = vsel %vm1353, %v1332, %v645
        %v1366 = vsel %vm1353, %v1333, %v647
        %v1367 = vsel %vm1353, %v1334, %v649
        %v1368 = vsel %vm1353, %v1335, %v651
        %v1369 = vsel %vm1353, %v1336, %v653
        %v1370 = vsel %vm1353, %v1337, %v655
        %v1371 = vsel %vm1353, %v1338, %v657
        %v1372 = vsel %vm1353, %v1339, %v659
        %v1373 = vsel %vm1353, %v1340, %v661
        %v1374 = vsel %vm1353, %v1341, %v663
        %v1375 = vsel %vm1353, %v1342, %v665
        %v1376 = vsel %vm1353, %v1343, %v667
        %v1377 = vsel %vm1353, %v1344, %v669
        %v1378 = vsel %vm1353, %v1345, %v671
        %v1379 = vsel %vm1353, %v1346, %v673
        %v1380 = vsel %vm1353, %v1347, %v675
        %v1381 = vsel %vm1353, %v1348, %v677
        %v1382 = vsel %vm1353, %v1349, %v679
        %v1383 = vsel %vm1353, %v1350, %v681
        %v1384 = vsel %vm1353, %v1351, %v683
        %v1385 = vsel %vm1353, %v1352, %v685
        %vm1386 = vcmask 72704
        %v1387 = vsel %vm1386, %v1354, %v721
        %v1388 = vsel %vm1386, %v1355, %v723
        %v1389 = vsel %vm1386, %v1356, %v725
        %v1390 = vsel %vm1386, %v1357, %v727
        %v1391 = vsel %vm1386, %v1358, %v729
        %v1392 = vsel %vm1386, %v1359, %v731
        %v1393 = vsel %vm1386, %v1360, %v733
        %v1394 = vsel %vm1386, %v1361, %v735
        %v1395 = vsel %vm1386, %v1362, %v737
        %v1396 = vsel %vm1386, %v1363, %v739
        %v1397 = vsel %vm1386, %v1364, %v741
        %v1398 = vsel %vm1386, %v1365, %v743
        %v1399 = vsel %vm1386, %v1366, %v745
        %v1400 = vsel %vm1386, %v1367, %v747
        %v1401 = vsel %vm1386, %v1368, %v749
        %v1402 = vsel %vm1386, %v1369, %v751
        %v1403 = vsel %vm1386, %v1370, %v753
        %v1404 = vsel %vm1386, %v1371, %v755
        %v1405 = vsel %vm1386, %v1372, %v757
        %v1406 = vsel %vm1386, %v1373, %v759
        %v1407 = vsel %vm1386, %v1374, %v761
        %v1408 = vsel %vm1386, %v1375, %v763
        %v1409 = vsel %vm1386, %v1376, %v765
        %v1410 = vsel %vm1386, %v1377, %v767
        %v1411 = vsel %vm1386, %v1378, %v769
        %v1412 = vsel %vm1386, %v1379, %v771
        %v1413 = vsel %vm1386, %v1380, %v773
        %v1414 = vsel %vm1386, %v1381, %v775
        %v1415 = vsel %vm1386, %v1382, %v777
        %v1416 = vsel %vm1386, %v1383, %v779
        %v1417 = vsel %vm1386, %v1384, %v781
        %v1418 = vsel %vm1386, %v1385, %v783
        %vm1419 = vcmask 97280
        %v1420 = vsel %vm1419, %v1387, %v823
        %v1421 = vsel %vm1419, %v1388, %v825
        %v1422 = vsel %vm1419, %v1389, %v827
        %v1423 = vsel %vm1419, %v1390, %v829
        %v1424 = vsel %vm1419, %v1391, %v831
        %v1425 = vsel %vm1419, %v1392, %v833
        %v1426 = vsel %vm1419, %v1393, %v835
        %v1427 = vsel %vm1419, %v1394, %v837
        %v1428 = vsel %vm1419, %v1395, %v839
        %v1429 = vsel %vm1419, %v1396, %v841
        %v1430 = vsel %vm1419, %v1397, %v843
        %v1431 = vsel %vm1419, %v1398, %v845
        %v1432 = vsel %vm1419, %v1399, %v847
        %v1433 = vsel %vm1419, %v1400, %v849
        %v1434 = vsel %vm1419, %v1401, %v851
        %v1435 = vsel %vm1419, %v1402, %v853
        %v1436 = vsel %vm1419, %v1403, %v855
        %v1437 = vsel %vm1419, %v1404, %v857
        %v1438 = vsel %vm1419, %v1405, %v859
        %v1439 = vsel %vm1419, %v1406, %v861
        %v1440 = vsel %vm1419, %v1407, %v863
        %v1441 = vsel %vm1419, %v1408, %v865
        %v1442 = vsel %vm1419, %v1409, %v867
        %v1443 = vsel %vm1419, %v1410, %v869
        %v1444 = vsel %vm1419, %v1411, %v871
        %v1445 = vsel %vm1419, %v1412, %v873
        %v1446 = vsel %vm1419, %v1413, %v875
        %v1447 = vsel %vm1419, %v1414, %v877
        %v1448 = vsel %vm1419, %v1415, %v879
        %v1449 = vsel %vm1419, %v1416, %v881
        %v1450 = vsel %vm1419, %v1417, %v883
        %v1451 = vsel %vm1419, %v1418, %v885
        %vm1452 = vcmask 121856
        %v1453 = vsel %vm1452, %v1420, %v924
        %v1454 = vsel %vm1452, %v1421, %v926
        %v1455 = vsel %vm1452, %v1422, %v928
        %v1456 = vsel %vm1452, %v1423, %v930
        %v1457 = vsel %vm1452, %v1424, %v932
        %v1458 = vsel %vm1452, %v1425, %v934
        %v1459 = vsel %vm1452, %v1426, %v936
        %v1460 = vsel %vm1452, %v1427, %v938
        %v1461 = vsel %vm1452, %v1428, %v940
        %v1462 = vsel %vm1452, %v1429, %v942
        %v1463 = vsel %vm1452, %v1430, %v944
        %v1464 = vsel %vm1452, %v1431, %v946
        %v1465 = vsel %vm1452, %v1432, %v948
        %v1466 = vsel %vm1452, %v1433, %v950
        %v1467 = vsel %vm1452, %v1434, %v952
        %v1468 = vsel %vm1452, %v1435, %v954
        %v1469 = vsel %vm1452, %v1436, %v956
        %v1470 = vsel %vm1452, %v1437, %v958
        %v1471 = vsel %vm1452, %v1438, %v960
        %v1472 = vsel %vm1452, %v1439, %v962
        %v1473 = vsel %vm1452, %v1440, %v964
        %v1474 = vsel %vm1452, %v1441, %v966
        %v1475 = vsel %vm1452, %v1442, %v968
        %v1476 = vsel %vm1452, %v1443, %v970
        %v1477 = vsel %vm1452, %v1444, %v972
        %v1478 = vsel %vm1452, %v1445, %v974
        %v1479 = vsel %vm1452, %v1446, %v976
        %v1480 = vsel %vm1452, %v1447, %v978
        %v1481 = vsel %vm1452, %v1448, %v980
        %v1482 = vsel %vm1452, %v1449, %v982
        %v1483 = vsel %vm1452, %v1450, %v984
        %v1484 = vsel %vm1452, %v1451, %v986
        %vm1485 = vcmask 146432
        %v1486 = vsel %vm1485, %v1453, %v1022
        %v1487 = vsel %vm1485, %v1454, %v1024
        %v1488 = vsel %vm1485, %v1455, %v1026
        %v1489 = vsel %vm1485, %v1456, %v1028
        %v1490 = vsel %vm1485, %v1457, %v1030
        %v1491 = vsel %vm1485, %v1458, %v1032
        %v1492 = vsel %vm1485, %v1459, %v1034
        %v1493 = vsel %vm1485, %v1460, %v1036
        %v1494 = vsel %vm1485, %v1461, %v1038
        %v1495 = vsel %vm1485, %v1462, %v1040
        %v1496 = vsel %vm1485, %v1463, %v1042
        %v1497 = vsel %vm1485, %v1464, %v1044
        %v1498 = vsel %vm1485, %v1465, %v1046
        %v1499 = vsel %vm1485, %v1466, %v1048
        %v1500 = vsel %vm1485, %v1467, %v1050
        %v1501 = vsel %vm1485, %v1468, %v1052
        %v1502 = vsel %vm1485, %v1469, %v1054
        %v1503 = vsel %vm1485, %v1470, %v1056
        %v1504 = vsel %vm1485, %v1471, %v1058
        %v1505 = vsel %vm1485, %v1472, %v1060
        %v1506 = vsel %vm1485, %v1473, %v1062
        %v1507 = vsel %vm1485, %v1474, %v1064
        %v1508 = vsel %vm1485, %v1475, %v1066
        %v1509 = vsel %vm1485, %v1476, %v1068
        %v1510 = vsel %vm1485, %v1477, %v1070
        %v1511 = vsel %vm1485, %v1478, %v1072
        %v1512 = vsel %vm1485, %v1479, %v1074
        %v1513 = vsel %vm1485, %v1480, %v1076
        %v1514 = vsel %vm1485, %v1481, %v1078
        %v1515 = vsel %vm1485, %v1482, %v1080
        %v1516 = vsel %vm1485, %v1483, %v1082
        %v1517 = vsel %vm1485, %v1484, %v1084
        %vm1518 = vcmask 171008
        %v1519 = vsel %vm1518, %v1486, %v1124
        %v1520 = vsel %vm1518, %v1487, %v1126
        %v1521 = vsel %vm1518, %v1488, %v1128
        %v1522 = vsel %vm1518, %v1489, %v1130
        %v1523 = vsel %vm1518, %v1490, %v1132
        %v1524 = vsel %vm1518, %v1491, %v1134
        %v1525 = vsel %vm1518, %v1492, %v1136
        %v1526 = vsel %vm1518, %v1493, %v1138
        %v1527 = vsel %vm1518, %v1494, %v1140
        %v1528 = vsel %vm1518, %v1495, %v1142
        %v1529 = vsel %vm1518, %v1496, %v1144
        %v1530 = vsel %vm1518, %v1497, %v1146
        %v1531 = vsel %vm1518, %v1498, %v1148
        %v1532 = vsel %vm1518, %v1499, %v1150
        %v1533 = vsel %vm1518, %v1500, %v1152
        %v1534 = vsel %vm1518, %v1501, %v1154
        %v1535 = vsel %vm1518, %v1502, %v1156
        %v1536 = vsel %vm1518, %v1503, %v1158
        %v1537 = vsel %vm1518, %v1504, %v1160
        %v1538 = vsel %vm1518, %v1505, %v1162
        %v1539 = vsel %vm1518, %v1506, %v1164
        %v1540 = vsel %vm1518, %v1507, %v1166
        %v1541 = vsel %vm1518, %v1508, %v1168
        %v1542 = vsel %vm1518, %v1509, %v1170
        %v1543 = vsel %vm1518, %v1510, %v1172
        %v1544 = vsel %vm1518, %v1511, %v1174
        %v1545 = vsel %vm1518, %v1512, %v1176
        %v1546 = vsel %vm1518, %v1513, %v1178
        %v1547 = vsel %vm1518, %v1514, %v1180
        %v1548 = vsel %vm1518, %v1515, %v1182
        %v1549 = vsel %vm1518, %v1516, %v1184
        %v1550 = vsel %vm1518, %v1517, %v1186
        %vm1551 = vcmask 195584
        %v1552 = vsel %vm1551, %v1519, %v1225
        %v1553 = vsel %vm1551, %v1520, %v1227
        %v1554 = vsel %vm1551, %v1521, %v1229
        %v1555 = vsel %vm1551, %v1522, %v1231
        %v1556 = vsel %vm1551, %v1523, %v1233
        %v1557 = vsel %vm1551, %v1524, %v1235
        %v1558 = vsel %vm1551, %v1525, %v1237
        %v1559 = vsel %vm1551, %v1526, %v1239
        %v1560 = vsel %vm1551, %v1527, %v1241
        %v1561 = vsel %vm1551, %v1528, %v1243
        %v1562 = vsel %vm1551, %v1529, %v1245
        %v1563 = vsel %vm1551, %v1530, %v1247
        %v1564 = vsel %vm1551, %v1531, %v1249
        %v1565 = vsel %vm1551, %v1532, %v1251
        %v1566 = vsel %vm1551, %v1533, %v1253
        %v1567 = vsel %vm1551, %v1534, %v1255
        %v1568 = vsel %vm1551, %v1535, %v1257
        %v1569 = vsel %vm1551, %v1536, %v1259
        %v1570 = vsel %vm1551, %v1537, %v1261
        %v1571 = vsel %vm1551, %v1538, %v1263
        %v1572 = vsel %vm1551, %v1539, %v1265
        %v1573 = vsel %vm1551, %v1540, %v1267
        %v1574 = vsel %vm1551, %v1541, %v1269
        %v1575 = vsel %vm1551, %v1542, %v1271
        %v1576 = vsel %vm1551, %v1543, %v1273
        %v1577 = vsel %vm1551, %v1544, %v1275
        %v1578 = vsel %vm1551, %v1545, %v1277
        %v1579 = vsel %vm1551, %v1546, %v1279
        %v1580 = vsel %vm1551, %v1547, %v1281
        %v1581 = vsel %vm1551, %v1548, %v1283
        %v1582 = vsel %vm1551, %v1549, %v1285
        %v1583 = vsel %vm1551, %v1550, %v1287
        %v1584 = vpack.c.bf16 %v1553, %v1552
        %v1585 = vpack.c.bf16 %v1555, %v1554
        %v1586 = vpack.c.bf16 %v1557, %v1556
        %v1587 = vpack.c.bf16 %v1559, %v1558
        %v1588 = vpack.c.bf16 %v1561, %v1560
        %v1589 = vpack.c.bf16 %v1563, %v1562
        %v1590 = vpack.c.bf16 %v1565, %v1564
        %v1591 = vpack.c.bf16 %v1567, %v1566
        %v1592 = vpack.c.bf16 %v1569, %v1568
        %v1593 = vpack.c.bf16 %v1571, %v1570
        %v1594 = vpack.c.bf16 %v1573, %v1572
        %v1595 = vpack.c.bf16 %v1575, %v1574
        %v1596 = vpack.c.bf16 %v1577, %v1576
        %v1597 = vpack.c.bf16 %v1579, %v1578
        %v1598 = vpack.c.bf16 %v1581, %v1580
        %v1599 = vpack.c.bf16 %v1583, %v1582
        %v1600 = vld [vmem:[%s1] sm:$0xff]
        %v1601 = vld [vmem:[%s1 + $0x8] sm:$0xff]
        %v1602 = vld [vmem:[%s1 + $0x10] sm:$0xff]
        %v1603 = vld [vmem:[%s1 + $0x18] sm:$0x7]
        %v1604 = vpack.c.bf16 %v1601, %v1600
        %v1605 = vpack.c.bf16 %v1603, %v1602
        %vm1606 = vcmask 220160
        %v1608 = vsel %vm1606, %v1584, 0
        %v1611 = vsel %vm1606, %v1585, 0
        %v1614 = vsel %vm1606, %v1586, 0
        %v1617 = vsel %vm1606, %v1587, 0
        %v1620 = vsel %vm1606, %v1588, 0
        %v1623 = vsel %vm1606, %v1589, 0
        %v1626 = vsel %vm1606, %v1590, 0
        %v1629 = vsel %vm1606, %v1591, 0
        %v1632 = vsel %vm1606, %v1592, 0
        %v1635 = vsel %vm1606, %v1593, 0
        %v1638 = vsel %vm1606, %v1594, 0
        %v1641 = vsel %vm1606, %v1595, 0
        %v1644 = vsel %vm1606, %v1596, 0
        %v1647 = vsel %vm1606, %v1597, 0
        %v1650 = vsel %vm1606, %v1598, 0
        %v1653 = vsel %vm1606, %v1599, 0
        %vm1655 = vcmask 1044480
        %v1656 = vsel %vm1655, 4294967295, 65535
        %v1657 = vsel %vm541, %v1656, 0
        %v1659 = vand.u32 %v1605, %v1657
        %1661 = vmatprep.subr.bf16.mxu0 0
        %1662 = vmatpush1.bf16.msra.mxu0 0
        %1663 = vmatprep.subr.bf16.mxu0 0
        %1664 = vmatpush1.bf16.msra.mxu0 0
        %1665 = vmatprep.subr.bf16.mxu0 0
        %1666 = vmatpush1.bf16.msra.mxu0 0
        %1667 = vmatprep.subr.bf16.mxu0 0
        %1668 = vmatpush1.bf16.msra.mxu0 0
        %1669 = vmatprep.subr.bf16.mxu0 0
        %1670 = vmatpush1.bf16.msra.mxu0 0
        %1671 = vmatprep.subr.bf16.mxu0 0
        %1672 = vmatpush1.bf16.msra.mxu0 0
        %1673 = vmatprep.subr.bf16.mxu0 0
        %1674 = vmatpush1.bf16.msra.mxu0 %v1659
        %1675 = vmatprep.subr.bf16.mxu0 0
        %1676 = vmatpush1.bf16.msra.mxu0 %v1604
        %1677 = vmatprep.subr.bf16.mxu0 0
        %1678 = vmatpush2.bf16.msra.mxu0 0
        %1679 = vmatprep.subr.bf16.mxu0 0
        %1680 = vmatpush2.bf16.msra.mxu0 0
        %1681 = vmatprep.subr.bf16.mxu0 0
        %1682 = vmatpush2.bf16.msra.mxu0 0
        %1683 = vmatprep.subr.bf16.mxu0 0
        %1684 = vmatpush2.bf16.msra.mxu0 0
        %1685 = vmatprep.subr.bf16.mxu0 0
        %1686 = vmatpush2.bf16.msra.mxu0 0
        %1687 = vmatprep.subr.bf16.mxu0 0
        %1688 = vmatpush2.bf16.msra.mxu0 0
        %1689 = vmatprep.subr.bf16.mxu0 0
        %1690 = vmatpush2.bf16.msra.mxu0 0
        %1691 = vmatprep.subr.bf16.mxu0 0
        %1692 = vmatpush2.bf16.msra.mxu0 0
        %1693 = vmatprep.mubr.bf16.mxu0 0
        %1694 = vmatmul.mubr.bf16.gmra.mxu0 %v1608
        %v1695 = vpop.f32.mrf.mxu0
        %v1696 = vadd.f32 0.0, %v1695
        %v1697 = vpop.f32.mrf.mxu0
        %v1698 = vpop.f32.mrf.mxu0
        %v1699 = vadd.f32 0.0, %v1698
        %v1700 = vpop.f32.mrf.mxu0
        %1701 = vmatprep.mubr.bf16.mxu0 0
        %1702 = vmatmul.mubr.bf16.gmra.mxu0 %v1611
        %v1703 = vpop.f32.mrf.mxu0
        %v1704 = vadd.f32 0.0, %v1703
        %v1705 = vpop.f32.mrf.mxu0
        %v1706 = vpop.f32.mrf.mxu0
        %v1707 = vadd.f32 0.0, %v1706
        %v1708 = vpop.f32.mrf.mxu0
        %1709 = vmatprep.mubr.bf16.mxu0 0
        %1710 = vmatmul.mubr.bf16.gmra.mxu0 %v1614
        %v1711 = vpop.f32.mrf.mxu0
        %v1712 = vadd.f32 0.0, %v1711
        %v1713 = vpop.f32.mrf.mxu0
        %v1714 = vpop.f32.mrf.mxu0
        %v1715 = vadd.f32 0.0, %v1714
        %v1716 = vpop.f32.mrf.mxu0
        %1717 = vmatprep.mubr.bf16.mxu0 0
        %1718 = vmatmul.mubr.bf16.gmra.mxu0 %v1617
        %v1719 = vpop.f32.mrf.mxu0
        %v1720 = vadd.f32 0.0, %v1719
        %v1721 = vpop.f32.mrf.mxu0
        %v1722 = vpop.f32.mrf.mxu0
        %v1723 = vadd.f32 0.0, %v1722
        %v1724 = vpop.f32.mrf.mxu0
        %1725 = vmatprep.mubr.bf16.mxu0 0
        %1726 = vmatmul.mubr.bf16.gmra.mxu0 %v1620
        %v1727 = vpop.f32.mrf.mxu0
        %v1728 = vadd.f32 0.0, %v1727
        %v1729 = vpop.f32.mrf.mxu0
        %v1730 = vpop.f32.mrf.mxu0
        %v1731 = vadd.f32 0.0, %v1730
        %v1732 = vpop.f32.mrf.mxu0
        %1733 = vmatprep.mubr.bf16.mxu0 0
        %1734 = vmatmul.mubr.bf16.gmra.mxu0 %v1623
        %v1735 = vpop.f32.mrf.mxu0
        %v1736 = vadd.f32 0.0, %v1735
        %v1737 = vpop.f32.mrf.mxu0
        %v1738 = vpop.f32.mrf.mxu0
        %v1739 = vadd.f32 0.0, %v1738
        %v1740 = vpop.f32.mrf.mxu0
        %1741 = vmatprep.mubr.bf16.mxu0 0
        %1742 = vmatmul.mubr.bf16.gmra.mxu0 %v1626
        %v1743 = vpop.f32.mrf.mxu0
        %v1744 = vadd.f32 0.0, %v1743
        %v1745 = vpop.f32.mrf.mxu0
        %v1746 = vpop.f32.mrf.mxu0
        %v1747 = vadd.f32 0.0, %v1746
        %v1748 = vpop.f32.mrf.mxu0
        %1749 = vmatprep.mubr.bf16.mxu0 0
        %1750 = vmatmul.mubr.bf16.gmra.mxu0 %v1629
        %v1751 = vpop.f32.mrf.mxu0
        %v1752 = vadd.f32 0.0, %v1751
        %v1753 = vpop.f32.mrf.mxu0
        %v1754 = vpop.f32.mrf.mxu0
        %v1755 = vadd.f32 0.0, %v1754
        %v1756 = vpop.f32.mrf.mxu0
        %1757 = vmatprep.mubr.bf16.mxu0 0
        %1758 = vmatmul.mubr.bf16.gmra.mxu0 %v1632
        %v1759 = vpop.f32.mrf.mxu0
        %v1760 = vadd.f32 0.0, %v1759
        %v1761 = vpop.f32.mrf.mxu0
        %v1762 = vpop.f32.mrf.mxu0
        %v1763 = vadd.f32 0.0, %v1762
        %v1764 = vpop.f32.mrf.mxu0
        %1765 = vmatprep.mubr.bf16.mxu0 0
        %1766 = vmatmul.mubr.bf16.gmra.mxu0 %v1635
        %v1767 = vpop.f32.mrf.mxu0
        %v1768 = vadd.f32 0.0, %v1767
        %v1769 = vpop.f32.mrf.mxu0
        %v1770 = vpop.f32.mrf.mxu0
        %v1771 = vadd.f32 0.0, %v1770
        %v1772 = vpop.f32.mrf.mxu0
        %1773 = vmatprep.mubr.bf16.mxu0 0
        %1774 = vmatmul.mubr.bf16.gmra.mxu0 %v1638
        %v1775 = vpop.f32.mrf.mxu0
        %v1776 = vadd.f32 0.0, %v1775
        %v1777 = vpop.f32.mrf.mxu0
        %v1778 = vpop.f32.mrf.mxu0
        %v1779 = vadd.f32 0.0, %v1778
        %v1780 = vpop.f32.mrf.mxu0
        %1781 = vmatprep.mubr.bf16.mxu0 0
        %1782 = vmatmul.mubr.bf16.gmra.mxu0 %v1641
        %v1783 = vpop.f32.mrf.mxu0
        %v1784 = vadd.f32 0.0, %v1783
        %v1785 = vpop.f32.mrf.mxu0
        %v1786 = vpop.f32.mrf.mxu0
        %v1787 = vadd.f32 0.0, %v1786
        %v1788 = vpop.f32.mrf.mxu0
        %1789 = vmatprep.mubr.bf16.mxu0 0
        %1790 = vmatmul.mubr.bf16.gmra.mxu0 %v1644
        %v1791 = vpop.f32.mrf.mxu0
        %v1792 = vadd.f32 0.0, %v1791
        %v1793 = vpop.f32.mrf.mxu0
        %v1794 = vpop.f32.mrf.mxu0
        %v1795 = vadd.f32 0.0, %v1794
        %v1796 = vpop.f32.mrf.mxu0
        %1797 = vmatprep.mubr.bf16.mxu0 0
        %1798 = vmatmul.mubr.bf16.gmra.mxu0 %v1647
        %v1799 = vpop.f32.mrf.mxu0
        %v1800 = vadd.f32 0.0, %v1799
        %v1801 = vpop.f32.mrf.mxu0
        %v1802 = vpop.f32.mrf.mxu0
        %v1803 = vadd.f32 0.0, %v1802
        %v1804 = vpop.f32.mrf.mxu0
        %1805 = vmatprep.mubr.bf16.mxu0 0
        %1806 = vmatmul.mubr.bf16.gmra.mxu0 %v1650
        %v1807 = vpop.f32.mrf.mxu0
        %v1808 = vadd.f32 0.0, %v1807
        %v1809 = vpop.f32.mrf.mxu0
        %v1810 = vpop.f32.mrf.mxu0
        %v1811 = vadd.f32 0.0, %v1810
        %v1812 = vpop.f32.mrf.mxu0
        %1813 = vmatprep.mubr.bf16.mxu0 0
        %1814 = vmatmul.mubr.bf16.gmra.mxu0 %v1653
        %v1815 = vpop.f32.mrf.mxu0
        %v1816 = vadd.f32 0.0, %v1815
        %v1817 = vpop.f32.mrf.mxu0
        %v1818 = vpop.f32.mrf.mxu0
        %v1819 = vadd.f32 0.0, %v1818
        %v1820 = vpop.f32.mrf.mxu0
        %1821 = vdwg.mxu0
        %vm1822 = vcmask 785408
        %1823 = vst.msk [vmem:[#allocation2] sm:$0xff] %vm1822, 0.0
        %1824 = vst.msk [vmem:[#allocation2 + $0x8] sm:$0xff] %vm1822, 0.0
        %vm1825 = vcmask 779264
        %1826 = vst.msk [vmem:[#allocation2 + $0x10] sm:$0x3] %vm1825, 0.0
        %1827 = vst.msk [vmem:[#allocation2 + $0x18] sm:$0xff] %vm1822, 0.0
        %1828 = vst.msk [vmem:[#allocation2 + $0x20] sm:$0xff] %vm1822, 0.0
        %1829 = vst.msk [vmem:[#allocation2 + $0x28] sm:$0x3] %vm1825, 0.0
        %1830 = vst.msk [vmem:[#allocation2 + $0x30] sm:$0xff] %vm1822, 0.0
        %1831 = vst.msk [vmem:[#allocation2 + $0x38] sm:$0xff] %vm1822, 0.0
        %1832 = vst.msk [vmem:[#allocation2 + $0x40] sm:$0x3] %vm1825, 0.0
        %1833 = vst.msk [vmem:[#allocation2 + $0x48] sm:$0xff] %vm1822, 0.0
        %1834 = vst.msk [vmem:[#allocation2 + $0x50] sm:$0xff] %vm1822, 0.0
        %1835 = vst.msk [vmem:[#allocation2 + $0x58] sm:$0x3] %vm1825, 0.0
        %1836 = vst.msk [vmem:[#allocation2 + $0x60] sm:$0xff] %vm1822, 0.0
        %1837 = vst.msk [vmem:[#allocation2 + $0x68] sm:$0xff] %vm1822, 0.0
        %1838 = vst.msk [vmem:[#allocation2 + $0x70] sm:$0x3] %vm1825, 0.0
        %1839 = vst.msk [vmem:[#allocation2 + $0x78] sm:$0xff] %vm1822, 0.0
        %1840 = vst.msk [vmem:[#allocation2 + $0x80] sm:$0xff] %vm1822, 0.0
        %1841 = vst.msk [vmem:[#allocation2 + $0x88] sm:$0x3] %vm1825, 0.0
        %1842 = vst.msk [vmem:[#allocation2 + $0x90] sm:$0xff] %vm1822, 0.0
        %1843 = vst.msk [vmem:[#allocation2 + $0x98] sm:$0xff] %vm1822, 0.0
        %1844 = vst.msk [vmem:[#allocation2 + $0xa0] sm:$0x3] %vm1825, 0.0
        %1845 = vst.msk [vmem:[#allocation2 + $0xa8] sm:$0xff] %vm1822, 0.0
        %1846 = vst.msk [vmem:[#allocation2 + $0xb0] sm:$0xff] %vm1822, 0.0
        %1847 = vst.msk [vmem:[#allocation2 + $0xb8] sm:$0x3] %vm1825, 0.0
        %1848 = vst.msk [vmem:[#allocation2 + $0xc0] sm:$0xff] %vm1822, 0.0
        %1849 = vst.msk [vmem:[#allocation2 + $0xc8] sm:$0xff] %vm1822, 0.0
        %1850 = vst.msk [vmem:[#allocation2 + $0xd0] sm:$0x3] %vm1825, 0.0
        %1851 = vst.msk [vmem:[#allocation2 + $0xd8] sm:$0xff] %vm1822, 0.0
        %1852 = vst.msk [vmem:[#allocation2 + $0xe0] sm:$0xff] %vm1822, 0.0
        %1853 = vst.msk [vmem:[#allocation2 + $0xe8] sm:$0x3] %vm1825, 0.0
        %1854 = vst.msk [vmem:[#allocation2 + $0xf0] sm:$0xff] %vm1822, 0.0
        %1855 = vst.msk [vmem:[#allocation2 + $0xf8] sm:$0xff] %vm1822, 0.0
        %1856 = vst.msk [vmem:[#allocation2 + $0x100] sm:$0x3] %vm1825, 0.0
        %1857 = vst.msk [vmem:[#allocation2 + $0x108] sm:$0xff] %vm1822, 0.0
        %1858 = vst.msk [vmem:[#allocation2 + $0x110] sm:$0xff] %vm1822, 0.0
        %1859 = vst.msk [vmem:[#allocation2 + $0x118] sm:$0x3] %vm1825, 0.0
        %1860 = vst.msk [vmem:[#allocation2 + $0x120] sm:$0xff] %vm1822, 0.0
        %1861 = vst.msk [vmem:[#allocation2 + $0x128] sm:$0xff] %vm1822, 0.0
        %1862 = vst.msk [vmem:[#allocation2 + $0x130] sm:$0x3] %vm1825, 0.0
        %1863 = vst.msk [vmem:[#allocation2 + $0x138] sm:$0xff] %vm1822, 0.0
        %1864 = vst.msk [vmem:[#allocation2 + $0x140] sm:$0xff] %vm1822, 0.0
        %1865 = vst.msk [vmem:[#allocation2 + $0x148] sm:$0x3] %vm1825, 0.0
        %1866 = vst.msk [vmem:[#allocation2 + $0x150] sm:$0xff] %vm1822, 0.0
        %1867 = vst.msk [vmem:[#allocation2 + $0x158] sm:$0xff] %vm1822, 0.0
        %1868 = vst.msk [vmem:[#allocation2 + $0x160] sm:$0x3] %vm1825, 0.0
        %1869 = vst.msk [vmem:[#allocation2 + $0x168] sm:$0xff] %vm1822, 0.0
        %1870 = vst.msk [vmem:[#allocation2 + $0x170] sm:$0xff] %vm1822, 0.0
        %1871 = vst.msk [vmem:[#allocation2 + $0x178] sm:$0x3] %vm1825, 0.0
        %1872 = vst.msk [vmem:[#allocation2 + $0x180] sm:$0xff] %vm1822, 0.0
        %1873 = vst.msk [vmem:[#allocation2 + $0x188] sm:$0xff] %vm1822, 0.0
        %1874 = vst.msk [vmem:[#allocation2 + $0x190] sm:$0x3] %vm1825, 0.0
        %1875 = vst.msk [vmem:[#allocation2 + $0x198] sm:$0xff] %vm1822, 0.0
        %1876 = vst.msk [vmem:[#allocation2 + $0x1a0] sm:$0xff] %vm1822, 0.0
        %1877 = vst.msk [vmem:[#allocation2 + $0x1a8] sm:$0x3] %vm1825, 0.0
        %1910 = vrot.lane.b32.xlu0 %v1696, 48
        %v1911 = vpop.permute.xlu0 %1910
        %1912 = vrot.lane.b32.xlu0 %v1699, 48
        %v1913 = vpop.permute.xlu0 %1912
        %1914 = vrot.lane.b32.xlu0 %v1704, 48
        %v1915 = vpop.permute.xlu0 %1914
        %1916 = vrot.lane.b32.xlu0 %v1707, 48
        %v1917 = vpop.permute.xlu0 %1916
        %1918 = vrot.lane.b32.xlu0 %v1712, 48
        %v1919 = vpop.permute.xlu0 %1918
        %1920 = vrot.lane.b32.xlu0 %v1715, 48
        %v1921 = vpop.permute.xlu0 %1920
        %1922 = vrot.lane.b32.xlu0 %v1720, 48
        %v1923 = vpop.permute.xlu0 %1922
        %1924 = vrot.lane.b32.xlu0 %v1723, 48
        %v1925 = vpop.permute.xlu0 %1924
        %1926 = vrot.lane.b32.xlu0 %v1728, 48
        %v1927 = vpop.permute.xlu0 %1926
        %1928 = vrot.lane.b32.xlu0 %v1731, 48
        %v1929 = vpop.permute.xlu0 %1928
        %1930 = vrot.lane.b32.xlu0 %v1736, 48
        %v1931 = vpop.permute.xlu0 %1930
        %1932 = vrot.lane.b32.xlu0 %v1739, 48
        %v1933 = vpop.permute.xlu0 %1932
        %1934 = vrot.lane.b32.xlu0 %v1744, 48
        %v1935 = vpop.permute.xlu0 %1934
        %1936 = vrot.lane.b32.xlu0 %v1747, 48
        %v1937 = vpop.permute.xlu0 %1936
        %1938 = vrot.lane.b32.xlu0 %v1752, 48
        %v1939 = vpop.permute.xlu0 %1938
        %1940 = vrot.lane.b32.xlu0 %v1755, 48
        %v1941 = vpop.permute.xlu0 %1940
        %1942 = vrot.lane.b32.xlu0 %v1760, 48
        %v1943 = vpop.permute.xlu0 %1942
        %1944 = vrot.lane.b32.xlu0 %v1763, 48
        %v1945 = vpop.permute.xlu0 %1944
        %1946 = vrot.lane.b32.xlu0 %v1768, 48
        %v1947 = vpop.permute.xlu0 %1946
        %1948 = vrot.lane.b32.xlu0 %v1771, 48
        %v1949 = vpop.permute.xlu0 %1948
        %1950 = vrot.lane.b32.xlu0 %v1776, 48
        %v1951 = vpop.permute.xlu0 %1950
        %1952 = vrot.lane.b32.xlu0 %v1779, 48
        %v1953 = vpop.permute.xlu0 %1952
        %1954 = vrot.lane.b32.xlu0 %v1784, 48
        %v1955 = vpop.permute.xlu0 %1954
        %1956 = vrot.lane.b32.xlu0 %v1787, 48
        %v1957 = vpop.permute.xlu0 %1956
        %1958 = vrot.lane.b32.xlu0 %v1792, 48
        %v1959 = vpop.permute.xlu0 %1958
        %1960 = vrot.lane.b32.xlu0 %v1795, 48
        %v1961 = vpop.permute.xlu0 %1960
        %1962 = vrot.lane.b32.xlu0 %v1800, 48
        %v1963 = vpop.permute.xlu0 %1962
        %1964 = vrot.lane.b32.xlu0 %v1803, 48
        %v1965 = vpop.permute.xlu0 %1964
        %1966 = vrot.lane.b32.xlu0 %v1808, 48
        %v1967 = vpop.permute.xlu0 %1966
        %1968 = vrot.lane.b32.xlu0 %v1811, 48
        %v1969 = vpop.permute.xlu0 %1968
        %1970 = vrot.lane.b32.xlu0 %v1816, 48
        %v1971 = vpop.permute.xlu0 %1970
        %1972 = vrot.lane.b32.xlu0 %v1819, 48
        %v1973 = vpop.permute.xlu0 %1972
        %vm2006 = vcmask 392192
        %v2007 = vsel %vm2006, %v1696, %v1911
        %v2008 = vsel %vm2006, %v1699, %v1913
        %v2009 = vsel %vm2006, %v1704, %v1915
        %v2010 = vsel %vm2006, %v1707, %v1917
        %v2011 = vsel %vm2006, %v1712, %v1919
        %v2012 = vsel %vm2006, %v1715, %v1921
        %v2013 = vsel %vm2006, %v1720, %v1923
        %v2014 = vsel %vm2006, %v1723, %v1925
        %v2015 = vsel %vm2006, %v1728, %v1927
        %v2016 = vsel %vm2006, %v1731, %v1929
        %v2017 = vsel %vm2006, %v1736, %v1931
        %v2018 = vsel %vm2006, %v1739, %v1933
        %v2019 = vsel %vm2006, %v1744, %v1935
        %v2020 = vsel %vm2006, %v1747, %v1937
        %v2021 = vsel %vm2006, %v1752, %v1939
        %v2022 = vsel %vm2006, %v1755, %v1941
        %v2023 = vsel %vm2006, %v1760, %v1943
        %v2024 = vsel %vm2006, %v1763, %v1945
        %v2025 = vsel %vm2006, %v1768, %v1947
        %v2026 = vsel %vm2006, %v1771, %v1949
        %v2027 = vsel %vm2006, %v1776, %v1951
        %v2028 = vsel %vm2006, %v1779, %v1953
        %v2029 = vsel %vm2006, %v1784, %v1955
        %v2030 = vsel %vm2006, %v1787, %v1957
        %v2031 = vsel %vm2006, %v1792, %v1959
        %v2032 = vsel %vm2006, %v1795, %v1961
        %v2033 = vsel %vm2006, %v1800, %v1963
        %v2034 = vsel %vm2006, %v1803, %v1965
        %v2035 = vsel %vm2006, %v1808, %v1967
        %v2036 = vsel %vm2006, %v1811, %v1969
        %v2037 = vsel %vm2006, %v1816, %v1971
        %v2038 = vsel %vm2006, %v1819, %v1973
        %s2039 = scalar_lea.vmem [#allocation2], 24
        %2040 = vst.msk [vmem:[%s2039 + $0x1] sm:$0xff] %vm1822, %v2007
        %2041 = vst.msk [vmem:[%s2039 + $0x9] sm:$0xff] %vm1822, %v2008
        %2042 = vst.msk [vmem:[%s2039 + $0x19] sm:$0xff] %vm1822, %v2009
        %2043 = vst.msk [vmem:[%s2039 + $0x21] sm:$0xff] %vm1822, %v2010
        %2044 = vst.msk [vmem:[%s2039 + $0x31] sm:$0xff] %vm1822, %v2011
        %2045 = vst.msk [vmem:[%s2039 + $0x39] sm:$0xff] %vm1822, %v2012
        %2046 = vst.msk [vmem:[%s2039 + $0x49] sm:$0xff] %vm1822, %v2013
        %2047 = vst.msk [vmem:[%s2039 + $0x51] sm:$0xff] %vm1822, %v2014
        %2048 = vst.msk [vmem:[%s2039 + $0x61] sm:$0xff] %vm1822, %v2015
        %2049 = vst.msk [vmem:[%s2039 + $0x69] sm:$0xff] %vm1822, %v2016
        %2050 = vst.msk [vmem:[%s2039 + $0x79] sm:$0xff] %vm1822, %v2017
        %2051 = vst.msk [vmem:[%s2039 + $0x81] sm:$0xff] %vm1822, %v2018
        %2052 = vst.msk [vmem:[%s2039 + $0x91] sm:$0xff] %vm1822, %v2019
        %2053 = vst.msk [vmem:[%s2039 + $0x99] sm:$0xff] %vm1822, %v2020
        %2054 = vst.msk [vmem:[%s2039 + $0xa9] sm:$0xff] %vm1822, %v2021
        %2055 = vst.msk [vmem:[%s2039 + $0xb1] sm:$0xff] %vm1822, %v2022
        %2056 = vst.msk [vmem:[%s2039 + $0xc1] sm:$0xff] %vm1822, %v2023
        %2057 = vst.msk [vmem:[%s2039 + $0xc9] sm:$0xff] %vm1822, %v2024
        %2058 = vst.msk [vmem:[%s2039 + $0xd9] sm:$0xff] %vm1822, %v2025
        %2059 = vst.msk [vmem:[%s2039 + $0xe1] sm:$0xff] %vm1822, %v2026
        %2060 = vst.msk [vmem:[%s2039 + $0xf1] sm:$0xff] %vm1822, %v2027
        %2061 = vst.msk [vmem:[%s2039 + $0xf9] sm:$0xff] %vm1822, %v2028
        %2062 = vst.msk [vmem:[%s2039 + $0x109] sm:$0xff] %vm1822, %v2029
        %2063 = vst.msk [vmem:[%s2039 + $0x111] sm:$0xff] %vm1822, %v2030
        %2064 = vst.msk [vmem:[%s2039 + $0x121] sm:$0xff] %vm1822, %v2031
        %2065 = vst.msk [vmem:[%s2039 + $0x129] sm:$0xff] %vm1822, %v2032
        %2066 = vst.msk [vmem:[%s2039 + $0x139] sm:$0xff] %vm1822, %v2033
        %2067 = vst.msk [vmem:[%s2039 + $0x141] sm:$0xff] %vm1822, %v2034
        %2068 = vst.msk [vmem:[%s2039 + $0x151] sm:$0xff] %vm1822, %v2035
        %2069 = vst.msk [vmem:[%s2039 + $0x159] sm:$0xff] %vm1822, %v2036
        %2070 = vst.msk [vmem:[%s2039 + $0x169] sm:$0xff] %vm1822, %v2037
        %2071 = vst.msk [vmem:[%s2039 + $0x171] sm:$0xff] %vm1822, %v2038
        %v2072 = vld [vmem:[%s2] sm:$0xff]
        %v2073 = vld [vmem:[%s2 + $0x8] sm:$0x1]
        %v2074 = vld [vmem:[#allocation2] sm:$0xff]
        %v2075 = vld [vmem:[#allocation2 + $0x8] sm:$0xff]
        %v2076 = vld [vmem:[#allocation2 + $0x10] sm:$0x3]
        %v2077 = vld [vmem:[#allocation2 + $0x18] sm:$0xff]
        %v2078 = vld [vmem:[#allocation2 + $0x20] sm:$0xff]
        %v2079 = vld [vmem:[#allocation2 + $0x28] sm:$0x3]
        %v2080 = vld [vmem:[#allocation2 + $0x30] sm:$0xff]
        %v2081 = vld [vmem:[#allocation2 + $0x38] sm:$0xff]
        %v2082 = vld [vmem:[#allocation2 + $0x40] sm:$0x3]
        %v2083 = vld [vmem:[#allocation2 + $0x48] sm:$0xff]
        %v2084 = vld [vmem:[#allocation2 + $0x50] sm:$0xff]
        %v2085 = vld [vmem:[#allocation2 + $0x58] sm:$0x3]
        %v2086 = vld [vmem:[#allocation2 + $0x60] sm:$0xff]
        %v2087 = vld [vmem:[#allocation2 + $0x68] sm:$0xff]
        %v2088 = vld [vmem:[#allocation2 + $0x70] sm:$0x3]
        %v2089 = vld [vmem:[#allocation2 + $0x78] sm:$0xff]
        %v2090 = vld [vmem:[#allocation2 + $0x80] sm:$0xff]
        %v2091 = vld [vmem:[#allocation2 + $0x88] sm:$0x3]
        %v2092 = vld [vmem:[#allocation2 + $0x90] sm:$0xff]
        %v2093 = vld [vmem:[#allocation2 + $0x98] sm:$0xff]
        %v2094 = vld [vmem:[#allocation2 + $0xa0] sm:$0x3]
        %v2095 = vld [vmem:[#allocation2 + $0xa8] sm:$0xff]
        %v2096 = vld [vmem:[#allocation2 + $0xb0] sm:$0xff]
        %v2097 = vld [vmem:[#allocation2 + $0xb8] sm:$0x3]
        %v2098 = vld [vmem:[#allocation2 + $0xc0] sm:$0xff]
        %v2099 = vld [vmem:[#allocation2 + $0xc8] sm:$0xff]
        %v2100 = vld [vmem:[#allocation2 + $0xd0] sm:$0x3]
        %v2101 = vld [vmem:[#allocation2 + $0xd8] sm:$0xff]
        %v2102 = vld [vmem:[#allocation2 + $0xe0] sm:$0xff]
        %v2103 = vld [vmem:[#allocation2 + $0xe8] sm:$0x3]
        %v2104 = vld [vmem:[#allocation2 + $0xf0] sm:$0xff]
        %v2105 = vld [vmem:[#allocation2 + $0xf8] sm:$0xff]
        %v2106 = vld [vmem:[#allocation2 + $0x100] sm:$0x3]
        %v2107 = vld [vmem:[#allocation2 + $0x108] sm:$0xff]
        %v2108 = vld [vmem:[#allocation2 + $0x110] sm:$0xff]
        %v2109 = vld [vmem:[#allocation2 + $0x118] sm:$0x3]
        %v2110 = vld [vmem:[#allocation2 + $0x120] sm:$0xff]
        %v2111 = vld [vmem:[#allocation2 + $0x128] sm:$0xff]
        %v2112 = vld [vmem:[#allocation2 + $0x130] sm:$0x3]
        %v2113 = vld [vmem:[#allocation2 + $0x138] sm:$0xff]
        %v2114 = vld [vmem:[#allocation2 + $0x140] sm:$0xff]
        %v2115 = vld [vmem:[#allocation2 + $0x148] sm:$0x3]
        %v2116 = vld [vmem:[#allocation2 + $0x150] sm:$0xff]
        %v2117 = vld [vmem:[#allocation2 + $0x158] sm:$0xff]
        %v2118 = vld [vmem:[#allocation2 + $0x160] sm:$0x3]
        %v2119 = vld [vmem:[#allocation2 + $0x168] sm:$0xff]
        %v2120 = vld [vmem:[#allocation2 + $0x170] sm:$0xff]
        %v2121 = vld [vmem:[#allocation2 + $0x178] sm:$0x3]
        %v2122 = vlaneseq
        %v2123 = vshrl.u32 %v2122, 7
        %v2124 = vsub.s32 0, %v2123
        %v2125 = vrot.slane %v2072, %v2124
        %v2126 = vmul.f32 %v2074, %v2125
        %v2127 = vmul.f32 %v2075, %v2125
        %v2128 = vmul.f32 %v2077, %v2125
        %v2129 = vmul.f32 %v2078, %v2125
        %v2130 = vmul.f32 %v2080, %v2125
        %v2131 = vmul.f32 %v2081, %v2125
        %v2132 = vmul.f32 %v2083, %v2125
        %v2133 = vmul.f32 %v2084, %v2125
        %v2134 = vmul.f32 %v2086, %v2125
        %v2135 = vmul.f32 %v2087, %v2125
        %v2136 = vmul.f32 %v2089, %v2125
        %v2137 = vmul.f32 %v2090, %v2125
        %v2138 = vmul.f32 %v2092, %v2125
        %v2139 = vmul.f32 %v2093, %v2125
        %v2140 = vmul.f32 %v2095, %v2125
        %v2141 = vmul.f32 %v2096, %v2125
        %v2142 = vmul.f32 %v2098, %v2125
        %v2143 = vmul.f32 %v2099, %v2125
        %v2144 = vmul.f32 %v2101, %v2125
        %v2145 = vmul.f32 %v2102, %v2125
        %v2146 = vmul.f32 %v2104, %v2125
        %v2147 = vmul.f32 %v2105, %v2125
        %v2148 = vmul.f32 %v2107, %v2125
        %v2149 = vmul.f32 %v2108, %v2125
        %v2150 = vmul.f32 %v2110, %v2125
        %v2151 = vmul.f32 %v2111, %v2125
        %v2152 = vmul.f32 %v2113, %v2125
        %v2153 = vmul.f32 %v2114, %v2125
        %v2154 = vmul.f32 %v2116, %v2125
        %v2155 = vmul.f32 %v2117, %v2125
        %v2156 = vmul.f32 %v2119, %v2125
        %v2157 = vmul.f32 %v2120, %v2125
        %v2158 = vadd.f32 %v2126, 0.0
        %v2159 = vadd.f32 %v2127, 0.0
        %v2160 = vadd.f32 %v2128, 0.0
        %v2161 = vadd.f32 %v2129, 0.0
        %v2162 = vadd.f32 %v2130, 0.0
        %v2163 = vadd.f32 %v2131, 0.0
        %v2164 = vadd.f32 %v2132, 0.0
        %v2165 = vadd.f32 %v2133, 0.0
        %v2166 = vadd.f32 %v2134, 0.0
        %v2167 = vadd.f32 %v2135, 0.0
        %v2168 = vadd.f32 %v2136, 0.0
        %v2169 = vadd.f32 %v2137, 0.0
        %v2170 = vadd.f32 %v2138, 0.0
        %v2171 = vadd.f32 %v2139, 0.0
        %v2172 = vadd.f32 %v2140, 0.0
        %v2173 = vadd.f32 %v2141, 0.0
        %v2174 = vadd.f32 %v2142, 0.0
        %v2175 = vadd.f32 %v2143, 0.0
        %v2176 = vadd.f32 %v2144, 0.0
        %v2177 = vadd.f32 %v2145, 0.0
        %v2178 = vadd.f32 %v2146, 0.0
        %v2179 = vadd.f32 %v2147, 0.0
        %v2180 = vadd.f32 %v2148, 0.0
        %v2181 = vadd.f32 %v2149, 0.0
        %v2182 = vadd.f32 %v2150, 0.0
        %v2183 = vadd.f32 %v2151, 0.0
        %v2184 = vadd.f32 %v2152, 0.0
        %v2185 = vadd.f32 %v2153, 0.0
        %v2186 = vadd.f32 %v2154, 0.0
        %v2187 = vadd.f32 %v2155, 0.0
        %v2188 = vadd.f32 %v2156, 0.0
        %v2189 = vadd.f32 %v2157, 0.0
        %v2190 = vlaneseq
        %v2191 = vshrl.u32 %v2190, 7
        %v2192 = vsub.s32 1, %v2191
        %v2193 = vrot.slane %v2072, %v2192
        %v2194 = vmul.f32 %v2074, %v2193
        %v2195 = vmul.f32 %v2075, %v2193
        %v2196 = vmul.f32 %v2076, %v2193
        %v2197 = vmul.f32 %v2077, %v2193
        %v2198 = vmul.f32 %v2078, %v2193
        %v2199 = vmul.f32 %v2079, %v2193
        %v2200 = vmul.f32 %v2080, %v2193
        %v2201 = vmul.f32 %v2081, %v2193
        %v2202 = vmul.f32 %v2082, %v2193
        %v2203 = vmul.f32 %v2083, %v2193
        %v2204 = vmul.f32 %v2084, %v2193
        %v2205 = vmul.f32 %v2085, %v2193
        %v2206 = vmul.f32 %v2086, %v2193
        %v2207 = vmul.f32 %v2087, %v2193
        %v2208 = vmul.f32 %v2088, %v2193
        %v2209 = vmul.f32 %v2089, %v2193
        %v2210 = vmul.f32 %v2090, %v2193
        %v2211 = vmul.f32 %v2091, %v2193
        %v2212 = vmul.f32 %v2092, %v2193
        %v2213 = vmul.f32 %v2093, %v2193
        %v2214 = vmul.f32 %v2094, %v2193
        %v2215 = vmul.f32 %v2095, %v2193
        %v2216 = vmul.f32 %v2096, %v2193
        %v2217 = vmul.f32 %v2097, %v2193
        %v2218 = vmul.f32 %v2098, %v2193
        %v2219 = vmul.f32 %v2099, %v2193
        %v2220 = vmul.f32 %v2100, %v2193
        %v2221 = vmul.f32 %v2101, %v2193
        %v2222 = vmul.f32 %v2102, %v2193
        %v2223 = vmul.f32 %v2103, %v2193
        %v2224 = vmul.f32 %v2104, %v2193
        %v2225 = vmul.f32 %v2105, %v2193
        %v2226 = vmul.f32 %v2106, %v2193
        %v2227 = vmul.f32 %v2107, %v2193
        %v2228 = vmul.f32 %v2108, %v2193
        %v2229 = vmul.f32 %v2109, %v2193
        %v2230 = vmul.f32 %v2110, %v2193
        %v2231 = vmul.f32 %v2111, %v2193
        %v2232 = vmul.f32 %v2112, %v2193
        %v2233 = vmul.f32 %v2113, %v2193
        %v2234 = vmul.f32 %v2114, %v2193
        %v2235 = vmul.f32 %v2115, %v2193
        %v2236 = vmul.f32 %v2116, %v2193
        %v2237 = vmul.f32 %v2117, %v2193
        %v2238 = vmul.f32 %v2118, %v2193
        %v2239 = vmul.f32 %v2119, %v2193
        %v2240 = vmul.f32 %v2120, %v2193
        %v2241 = vmul.f32 %v2121, %v2193
        %v2290 = vrot.slane %v2194, 1
        %v2291 = vrot.slane %v2195, 1
        %v2292 = vsel %vm364, %v2290, %v2291
        %v2293 = vrot.slane %v2196, 1
        %v2294 = vsel %vm364, %v2291, %v2293
        %v2295 = vrot.slane %v2197, 1
        %v2296 = vrot.slane %v2198, 1
        %v2297 = vsel %vm364, %v2295, %v2296
        %v2298 = vrot.slane %v2199, 1
        %v2299 = vsel %vm364, %v2296, %v2298
        %v2300 = vrot.slane %v2200, 1
        %v2301 = vrot.slane %v2201, 1
        %v2302 = vsel %vm364, %v2300, %v2301
        %v2303 = vrot.slane %v2202, 1
        %v2304 = vsel %vm364, %v2301, %v2303
        %v2305 = vrot.slane %v2203, 1
        %v2306 = vrot.slane %v2204, 1
        %v2307 = vsel %vm364, %v2305, %v2306
        %v2308 = vrot.slane %v2205, 1
        %v2309 = vsel %vm364, %v2306, %v2308
        %v2310 = vrot.slane %v2206, 1
        %v2311 = vrot.slane %v2207, 1
        %v2312 = vsel %vm364, %v2310, %v2311
        %v2313 = vrot.slane %v2208, 1
        %v2314 = vsel %vm364, %v2311, %v2313
        %v2315 = vrot.slane %v2209, 1
        %v2316 = vrot.slane %v2210, 1
        %v2317 = vsel %vm364, %v2315, %v2316
        %v2318 = vrot.slane %v2211, 1
        %v2319 = vsel %vm364, %v2316, %v2318
        %v2320 = vrot.slane %v2212, 1
        %v2321 = vrot.slane %v2213, 1
        %v2322 = vsel %vm364, %v2320, %v2321
        %v2323 = vrot.slane %v2214, 1
        %v2324 = vsel %vm364, %v2321, %v2323
        %v2325 = vrot.slane %v2215, 1
        %v2326 = vrot.slane %v2216, 1
        %v2327 = vsel %vm364, %v2325, %v2326
        %v2328 = vrot.slane %v2217, 1
        %v2329 = vsel %vm364, %v2326, %v2328
        %v2330 = vrot.slane %v2218, 1
        %v2331 = vrot.slane %v2219, 1
        %v2332 = vsel %vm364, %v2330, %v2331
        %v2333 = vrot.slane %v2220, 1
        %v2334 = vsel %vm364, %v2331, %v2333
        %v2335 = vrot.slane %v2221, 1
        %v2336 = vrot.slane %v2222, 1
        %v2337 = vsel %vm364, %v2335, %v2336
        %v2338 = vrot.slane %v2223, 1
        %v2339 = vsel %vm364, %v2336, %v2338
        %v2340 = vrot.slane %v2224, 1
        %v2341 = vrot.slane %v2225, 1
        %v2342 = vsel %vm364, %v2340, %v2341
        %v2343 = vrot.slane %v2226, 1
        %v2344 = vsel %vm364, %v2341, %v2343
        %v2345 = vrot.slane %v2227, 1
        %v2346 = vrot.slane %v2228, 1
        %v2347 = vsel %vm364, %v2345, %v2346
        %v2348 = vrot.slane %v2229, 1
        %v2349 = vsel %vm364, %v2346, %v2348
        %v2350 = vrot.slane %v2230, 1
        %v2351 = vrot.slane %v2231, 1
        %v2352 = vsel %vm364, %v2350, %v2351
        %v2353 = vrot.slane %v2232, 1
        %v2354 = vsel %vm364, %v2351, %v2353
        %v2355 = vrot.slane %v2233, 1
        %v2356 = vrot.slane %v2234, 1
        %v2357 = vsel %vm364, %v2355, %v2356
        %v2358 = vrot.slane %v2235, 1
        %v2359 = vsel %vm364, %v2356, %v2358
        %v2360 = vrot.slane %v2236, 1
        %v2361 = vrot.slane %v2237, 1
        %v2362 = vsel %vm364, %v2360, %v2361
        %v2363 = vrot.slane %v2238, 1
        %v2364 = vsel %vm364, %v2361, %v2363
        %v2365 = vrot.slane %v2239, 1
        %v2366 = vrot.slane %v2240, 1
        %v2367 = vsel %vm364, %v2365, %v2366
        %v2368 = vrot.slane %v2241, 1
        %v2369 = vsel %vm364, %v2366, %v2368
        %v2402 = vadd.f32 %v2158, %v2292
        %v2403 = vadd.f32 %v2159, %v2294
        %v2404 = vadd.f32 %v2160, %v2297
        %v2405 = vadd.f32 %v2161, %v2299
        %v2406 = vadd.f32 %v2162, %v2302
        %v2407 = vadd.f32 %v2163, %v2304
        %v2408 = vadd.f32 %v2164, %v2307
        %v2409 = vadd.f32 %v2165, %v2309
        %v2410 = vadd.f32 %v2166, %v2312
        %v2411 = vadd.f32 %v2167, %v2314
        %v2412 = vadd.f32 %v2168, %v2317
        %v2413 = vadd.f32 %v2169, %v2319
        %v2414 = vadd.f32 %v2170, %v2322
        %v2415 = vadd.f32 %v2171, %v2324
        %v2416 = vadd.f32 %v2172, %v2327
        %v2417 = vadd.f32 %v2173, %v2329
        %v2418 = vadd.f32 %v2174, %v2332
        %v2419 = vadd.f32 %v2175, %v2334
        %v2420 = vadd.f32 %v2176, %v2337
        %v2421 = vadd.f32 %v2177, %v2339
        %v2422 = vadd.f32 %v2178, %v2342
        %v2423 = vadd.f32 %v2179, %v2344
        %v2424 = vadd.f32 %v2180, %v2347
        %v2425 = vadd.f32 %v2181, %v2349
        %v2426 = vadd.f32 %v2182, %v2352
        %v2427 = vadd.f32 %v2183, %v2354
        %v2428 = vadd.f32 %v2184, %v2357
        %v2429 = vadd.f32 %v2185, %v2359
        %v2430 = vadd.f32 %v2186, %v2362
        %v2431 = vadd.f32 %v2187, %v2364
        %v2432 = vadd.f32 %v2188, %v2367
        %v2433 = vadd.f32 %v2189, %v2369
        %v2434 = vlaneseq
        %v2435 = vshrl.u32 %v2434, 7
        %v2436 = vsub.s32 2, %v2435
        %v2437 = vrot.slane %v2072, %v2436
        %v2438 = vmul.f32 %v2074, %v2437
        %v2439 = vmul.f32 %v2075, %v2437
        %v2440 = vmul.f32 %v2076, %v2437
        %v2441 = vmul.f32 %v2077, %v2437
        %v2442 = vmul.f32 %v2078, %v2437
        %v2443 = vmul.f32 %v2079, %v2437
        %v2444 = vmul.f32 %v2080, %v2437
        %v2445 = vmul.f32 %v2081, %v2437
        %v2446 = vmul.f32 %v2082, %v2437
        %v2447 = vmul.f32 %v2083, %v2437
        %v2448 = vmul.f32 %v2084, %v2437
        %v2449 = vmul.f32 %v2085, %v2437
        %v2450 = vmul.f32 %v2086, %v2437
        %v2451 = vmul.f32 %v2087, %v2437
        %v2452 = vmul.f32 %v2088, %v2437
        %v2453 = vmul.f32 %v2089, %v2437
        %v2454 = vmul.f32 %v2090, %v2437
        %v2455 = vmul.f32 %v2091, %v2437
        %v2456 = vmul.f32 %v2092, %v2437
        %v2457 = vmul.f32 %v2093, %v2437
        %v2458 = vmul.f32 %v2094, %v2437
        %v2459 = vmul.f32 %v2095, %v2437
        %v2460 = vmul.f32 %v2096, %v2437
        %v2461 = vmul.f32 %v2097, %v2437
        %v2462 = vmul.f32 %v2098, %v2437
        %v2463 = vmul.f32 %v2099, %v2437
        %v2464 = vmul.f32 %v2100, %v2437
        %v2465 = vmul.f32 %v2101, %v2437
        %v2466 = vmul.f32 %v2102, %v2437
        %v2467 = vmul.f32 %v2103, %v2437
        %v2468 = vmul.f32 %v2104, %v2437
        %v2469 = vmul.f32 %v2105, %v2437
        %v2470 = vmul.f32 %v2106, %v2437
        %v2471 = vmul.f32 %v2107, %v2437
        %v2472 = vmul.f32 %v2108, %v2437
        %v2473 = vmul.f32 %v2109, %v2437
        %v2474 = vmul.f32 %v2110, %v2437
        %v2475 = vmul.f32 %v2111, %v2437
        %v2476 = vmul.f32 %v2112, %v2437
        %v2477 = vmul.f32 %v2113, %v2437
        %v2478 = vmul.f32 %v2114, %v2437
        %v2479 = vmul.f32 %v2115, %v2437
        %v2480 = vmul.f32 %v2116, %v2437
        %v2481 = vmul.f32 %v2117, %v2437
        %v2482 = vmul.f32 %v2118, %v2437
        %v2483 = vmul.f32 %v2119, %v2437
        %v2484 = vmul.f32 %v2120, %v2437
        %v2485 = vmul.f32 %v2121, %v2437
        %v2534 = vrot.slane %v2438, 2
        %v2535 = vrot.slane %v2439, 2
        %v2536 = vsel %vm541, %v2534, %v2535
        %v2537 = vrot.slane %v2440, 2
        %v2538 = vsel %vm541, %v2535, %v2537
        %v2539 = vrot.slane %v2441, 2
        %v2540 = vrot.slane %v2442, 2
        %v2541 = vsel %vm541, %v2539, %v2540
        %v2542 = vrot.slane %v2443, 2
        %v2543 = vsel %vm541, %v2540, %v2542
        %v2544 = vrot.slane %v2444, 2
        %v2545 = vrot.slane %v2445, 2
        %v2546 = vsel %vm541, %v2544, %v2545
        %v2547 = vrot.slane %v2446, 2
        %v2548 = vsel %vm541, %v2545, %v2547
        %v2549 = vrot.slane %v2447, 2
        %v2550 = vrot.slane %v2448, 2
        %v2551 = vsel %vm541, %v2549, %v2550
        %v2552 = vrot.slane %v2449, 2
        %v2553 = vsel %vm541, %v2550, %v2552
        %v2554 = vrot.slane %v2450, 2
        %v2555 = vrot.slane %v2451, 2
        %v2556 = vsel %vm541, %v2554, %v2555
        %v2557 = vrot.slane %v2452, 2
        %v2558 = vsel %vm541, %v2555, %v2557
        %v2559 = vrot.slane %v2453, 2
        %v2560 = vrot.slane %v2454, 2
        %v2561 = vsel %vm541, %v2559, %v2560
        %v2562 = vrot.slane %v2455, 2
        %v2563 = vsel %vm541, %v2560, %v2562
        %v2564 = vrot.slane %v2456, 2
        %v2565 = vrot.slane %v2457, 2
        %v2566 = vsel %vm541, %v2564, %v2565
        %v2567 = vrot.slane %v2458, 2
        %v2568 = vsel %vm541, %v2565, %v2567
        %v2569 = vrot.slane %v2459, 2
        %v2570 = vrot.slane %v2460, 2
        %v2571 = vsel %vm541, %v2569, %v2570
        %v2572 = vrot.slane %v2461, 2
        %v2573 = vsel %vm541, %v2570, %v2572
        %v2574 = vrot.slane %v2462, 2
        %v2575 = vrot.slane %v2463, 2
        %v2576 = vsel %vm541, %v2574, %v2575
        %v2577 = vrot.slane %v2464, 2
        %v2578 = vsel %vm541, %v2575, %v2577
        %v2579 = vrot.slane %v2465, 2
        %v2580 = vrot.slane %v2466, 2
        %v2581 = vsel %vm541, %v2579, %v2580
        %v2582 = vrot.slane %v2467, 2
        %v2583 = vsel %vm541, %v2580, %v2582
        %v2584 = vrot.slane %v2468, 2
        %v2585 = vrot.slane %v2469, 2
        %v2586 = vsel %vm541, %v2584, %v2585
        %v2587 = vrot.slane %v2470, 2
        %v2588 = vsel %vm541, %v2585, %v2587
        %v2589 = vrot.slane %v2471, 2
        %v2590 = vrot.slane %v2472, 2
        %v2591 = vsel %vm541, %v2589, %v2590
        %v2592 = vrot.slane %v2473, 2
        %v2593 = vsel %vm541, %v2590, %v2592
        %v2594 = vrot.slane %v2474, 2
        %v2595 = vrot.slane %v2475, 2
        %v2596 = vsel %vm541, %v2594, %v2595
        %v2597 = vrot.slane %v2476, 2
        %v2598 = vsel %vm541, %v2595, %v2597
        %v2599 = vrot.slane %v2477, 2
        %v2600 = vrot.slane %v2478, 2
        %v2601 = vsel %vm541, %v2599, %v2600
        %v2602 = vrot.slane %v2479, 2
        %v2603 = vsel %vm541, %v2600, %v2602
        %v2604 = vrot.slane %v2480, 2
        %v2605 = vrot.slane %v2481, 2
        %v2606 = vsel %vm541, %v2604, %v2605
        %v2607 = vrot.slane %v2482, 2
        %v2608 = vsel %vm541, %v2605, %v2607
        %v2609 = vrot.slane %v2483, 2
        %v2610 = vrot.slane %v2484, 2
        %v2611 = vsel %vm541, %v2609, %v2610
        %v2612 = vrot.slane %v2485, 2
        %v2613 = vsel %vm541, %v2610, %v2612
        %v2646 = vadd.f32 %v2402, %v2536
        %v2647 = vadd.f32 %v2403, %v2538
        %v2648 = vadd.f32 %v2404, %v2541
        %v2649 = vadd.f32 %v2405, %v2543
        %v2650 = vadd.f32 %v2406, %v2546
        %v2651 = vadd.f32 %v2407, %v2548
        %v2652 = vadd.f32 %v2408, %v2551
        %v2653 = vadd.f32 %v2409, %v2553
        %v2654 = vadd.f32 %v2410, %v2556
        %v2655 = vadd.f32 %v2411, %v2558
        %v2656 = vadd.f32 %v2412, %v2561
        %v2657 = vadd.f32 %v2413, %v2563
        %v2658 = vadd.f32 %v2414, %v2566
        %v2659 = vadd.f32 %v2415, %v2568
        %v2660 = vadd.f32 %v2416, %v2571
        %v2661 = vadd.f32 %v2417, %v2573
        %v2662 = vadd.f32 %v2418, %v2576
        %v2663 = vadd.f32 %v2419, %v2578
        %v2664 = vadd.f32 %v2420, %v2581
        %v2665 = vadd.f32 %v2421, %v2583
        %v2666 = vadd.f32 %v2422, %v2586
        %v2667 = vadd.f32 %v2423, %v2588
        %v2668 = vadd.f32 %v2424, %v2591
        %v2669 = vadd.f32 %v2425, %v2593
        %v2670 = vadd.f32 %v2426, %v2596
        %v2671 = vadd.f32 %v2427, %v2598
        %v2672 = vadd.f32 %v2428, %v2601
        %v2673 = vadd.f32 %v2429, %v2603
        %v2674 = vadd.f32 %v2430, %v2606
        %v2675 = vadd.f32 %v2431, %v2608
        %v2676 = vadd.f32 %v2432, %v2611
        %v2677 = vadd.f32 %v2433, %v2613
        %v2678 = vld [vmem:[%s2039] sm:$0xff]
        %v2679 = vld [vmem:[%s2039 + $0x8] sm:$0xff]
        %v2680 = vld [vmem:[%s2039 + $0x10] sm:$0x3]
        %v2681 = vld [vmem:[%s2039 + $0x18] sm:$0xff]
        %v2682 = vld [vmem:[%s2039 + $0x20] sm:$0xff]
        %v2683 = vld [vmem:[%s2039 + $0x28] sm:$0x3]
        %v2684 = vld [vmem:[%s2039 + $0x30] sm:$0xff]
        %v2685 = vld [vmem:[%s2039 + $0x38] sm:$0xff]
        %v2686 = vld [vmem:[%s2039 + $0x40] sm:$0x3]
        %v2687 = vld [vmem:[%s2039 + $0x48] sm:$0xff]
        %v2688 = vld [vmem:[%s2039 + $0x50] sm:$0xff]
        %v2689 = vld [vmem:[%s2039 + $0x58] sm:$0x3]
        %v2690 = vld [vmem:[%s2039 + $0x60] sm:$0xff]
        %v2691 = vld [vmem:[%s2039 + $0x68] sm:$0xff]
        %v2692 = vld [vmem:[%s2039 + $0x70] sm:$0x3]
        %v2693 = vld [vmem:[%s2039 + $0x78] sm:$0xff]
        %v2694 = vld [vmem:[%s2039 + $0x80] sm:$0xff]
        %v2695 = vld [vmem:[%s2039 + $0x88] sm:$0x3]
        %v2696 = vld [vmem:[%s2039 + $0x90] sm:$0xff]
        %v2697 = vld [vmem:[%s2039 + $0x98] sm:$0xff]
        %v2698 = vld [vmem:[%s2039 + $0xa0] sm:$0x3]
        %v2699 = vld [vmem:[%s2039 + $0xa8] sm:$0xff]
        %v2700 = vld [vmem:[%s2039 + $0xb0] sm:$0xff]
        %v2701 = vld [vmem:[%s2039 + $0xb8] sm:$0x3]
        %v2702 = vld [vmem:[%s2039 + $0xc0] sm:$0xff]
        %v2703 = vld [vmem:[%s2039 + $0xc8] sm:$0xff]
        %v2704 = vld [vmem:[%s2039 + $0xd0] sm:$0x3]
        %v2705 = vld [vmem:[%s2039 + $0xd8] sm:$0xff]
        %v2706 = vld [vmem:[%s2039 + $0xe0] sm:$0xff]
        %v2707 = vld [vmem:[%s2039 + $0xe8] sm:$0x3]
        %v2708 = vld [vmem:[%s2039 + $0xf0] sm:$0xff]
        %v2709 = vld [vmem:[%s2039 + $0xf8] sm:$0xff]
        %v2710 = vld [vmem:[%s2039 + $0x100] sm:$0x3]
        %v2711 = vld [vmem:[%s2039 + $0x108] sm:$0xff]
        %v2712 = vld [vmem:[%s2039 + $0x110] sm:$0xff]
        %v2713 = vld [vmem:[%s2039 + $0x118] sm:$0x3]
        %v2714 = vld [vmem:[%s2039 + $0x120] sm:$0xff]
        %v2715 = vld [vmem:[%s2039 + $0x128] sm:$0xff]
        %v2716 = vld [vmem:[%s2039 + $0x130] sm:$0x3]
        %v2717 = vld [vmem:[%s2039 + $0x138] sm:$0xff]
        %v2718 = vld [vmem:[%s2039 + $0x140] sm:$0xff]
        %v2719 = vld [vmem:[%s2039 + $0x148] sm:$0x3]
        %v2720 = vld [vmem:[%s2039 + $0x150] sm:$0xff]
        %v2721 = vld [vmem:[%s2039 + $0x158] sm:$0xff]
        %v2722 = vld [vmem:[%s2039 + $0x160] sm:$0x3]
        %v2723 = vld [vmem:[%s2039 + $0x168] sm:$0xff]
        %v2724 = vld [vmem:[%s2039 + $0x170] sm:$0xff]
        %v2725 = vld [vmem:[%s2039 + $0x178] sm:$0x3]
        %v2726 = vlaneseq
        %v2727 = vshrl.u32 %v2726, 7
        %v2728 = vsub.s32 3, %v2727
        %v2729 = vrot.slane %v2072, %v2728
        %v2730 = vmul.f32 %v2678, %v2729
        %v2731 = vmul.f32 %v2679, %v2729
        %v2732 = vmul.f32 %v2681, %v2729
        %v2733 = vmul.f32 %v2682, %v2729
        %v2734 = vmul.f32 %v2684, %v2729
        %v2735 = vmul.f32 %v2685, %v2729
        %v2736 = vmul.f32 %v2687, %v2729
        %v2737 = vmul.f32 %v2688, %v2729
        %v2738 = vmul.f32 %v2690, %v2729
        %v2739 = vmul.f32 %v2691, %v2729
        %v2740 = vmul.f32 %v2693, %v2729
        %v2741 = vmul.f32 %v2694, %v2729
        %v2742 = vmul.f32 %v2696, %v2729
        %v2743 = vmul.f32 %v2697, %v2729
        %v2744 = vmul.f32 %v2699, %v2729
        %v2745 = vmul.f32 %v2700, %v2729
        %v2746 = vmul.f32 %v2702, %v2729
        %v2747 = vmul.f32 %v2703, %v2729
        %v2748 = vmul.f32 %v2705, %v2729
        %v2749 = vmul.f32 %v2706, %v2729
        %v2750 = vmul.f32 %v2708, %v2729
        %v2751 = vmul.f32 %v2709, %v2729
        %v2752 = vmul.f32 %v2711, %v2729
        %v2753 = vmul.f32 %v2712, %v2729
        %v2754 = vmul.f32 %v2714, %v2729
        %v2755 = vmul.f32 %v2715, %v2729
        %v2756 = vmul.f32 %v2717, %v2729
        %v2757 = vmul.f32 %v2718, %v2729
        %v2758 = vmul.f32 %v2720, %v2729
        %v2759 = vmul.f32 %v2721, %v2729
        %v2760 = vmul.f32 %v2723, %v2729
        %v2761 = vmul.f32 %v2724, %v2729
        %v2762 = vadd.f32 %v2646, %v2730
        %v2763 = vadd.f32 %v2647, %v2731
        %v2764 = vadd.f32 %v2648, %v2732
        %v2765 = vadd.f32 %v2649, %v2733
        %v2766 = vadd.f32 %v2650, %v2734
        %v2767 = vadd.f32 %v2651, %v2735
        %v2768 = vadd.f32 %v2652, %v2736
        %v2769 = vadd.f32 %v2653, %v2737
        %v2770 = vadd.f32 %v2654, %v2738
        %v2771 = vadd.f32 %v2655, %v2739
        %v2772 = vadd.f32 %v2656, %v2740
        %v2773 = vadd.f32 %v2657, %v2741
        %v2774 = vadd.f32 %v2658, %v2742
        %v2775 = vadd.f32 %v2659, %v2743
        %v2776 = vadd.f32 %v2660, %v2744
        %v2777 = vadd.f32 %v2661, %v2745
        %v2778 = vadd.f32 %v2662, %v2746
        %v2779 = vadd.f32 %v2663, %v2747
        %v2780 = vadd.f32 %v2664, %v2748
        %v2781 = vadd.f32 %v2665, %v2749
        %v2782 = vadd.f32 %v2666, %v2750
        %v2783 = vadd.f32 %v2667, %v2751
        %v2784 = vadd.f32 %v2668, %v2752
        %v2785 = vadd.f32 %v2669, %v2753
        %v2786 = vadd.f32 %v2670, %v2754
        %v2787 = vadd.f32 %v2671, %v2755
        %v2788 = vadd.f32 %v2672, %v2756
        %v2789 = vadd.f32 %v2673, %v2757
        %v2790 = vadd.f32 %v2674, %v2758
        %v2791 = vadd.f32 %v2675, %v2759
        %v2792 = vadd.f32 %v2676, %v2760
        %v2793 = vadd.f32 %v2677, %v2761
        %v2794 = vlaneseq
        %v2795 = vshrl.u32 %v2794, 7
        %v2796 = vsub.s32 4, %v2795
        %v2797 = vrot.slane %v2072, %v2796
        %v2798 = vmul.f32 %v2678, %v2797
        %v2799 = vmul.f32 %v2679, %v2797
        %v2800 = vmul.f32 %v2680, %v2797
        %v2801 = vmul.f32 %v2681, %v2797
        %v2802 = vmul.f32 %v2682, %v2797
        %v2803 = vmul.f32 %v2683, %v2797
        %v2804 = vmul.f32 %v2684, %v2797
        %v2805 = vmul.f32 %v2685, %v2797
        %v2806 = vmul.f32 %v2686, %v2797
        %v2807 = vmul.f32 %v2687, %v2797
        %v2808 = vmul.f32 %v2688, %v2797
        %v2809 = vmul.f32 %v2689, %v2797
        %v2810 = vmul.f32 %v2690, %v2797
        %v2811 = vmul.f32 %v2691, %v2797
        %v2812 = vmul.f32 %v2692, %v2797
        %v2813 = vmul.f32 %v2693, %v2797
        %v2814 = vmul.f32 %v2694, %v2797
        %v2815 = vmul.f32 %v2695, %v2797
        %v2816 = vmul.f32 %v2696, %v2797
        %v2817 = vmul.f32 %v2697, %v2797
        %v2818 = vmul.f32 %v2698, %v2797
        %v2819 = vmul.f32 %v2699, %v2797
        %v2820 = vmul.f32 %v2700, %v2797
        %v2821 = vmul.f32 %v2701, %v2797
        %v2822 = vmul.f32 %v2702, %v2797
        %v2823 = vmul.f32 %v2703, %v2797
        %v2824 = vmul.f32 %v2704, %v2797
        %v2825 = vmul.f32 %v2705, %v2797
        %v2826 = vmul.f32 %v2706, %v2797
        %v2827 = vmul.f32 %v2707, %v2797
        %v2828 = vmul.f32 %v2708, %v2797
        %v2829 = vmul.f32 %v2709, %v2797
        %v2830 = vmul.f32 %v2710, %v2797
        %v2831 = vmul.f32 %v2711, %v2797
        %v2832 = vmul.f32 %v2712, %v2797
        %v2833 = vmul.f32 %v2713, %v2797
        %v2834 = vmul.f32 %v2714, %v2797
        %v2835 = vmul.f32 %v2715, %v2797
        %v2836 = vmul.f32 %v2716, %v2797
        %v2837 = vmul.f32 %v2717, %v2797
        %v2838 = vmul.f32 %v2718, %v2797
        %v2839 = vmul.f32 %v2719, %v2797
        %v2840 = vmul.f32 %v2720, %v2797
        %v2841 = vmul.f32 %v2721, %v2797
        %v2842 = vmul.f32 %v2722, %v2797
        %v2843 = vmul.f32 %v2723, %v2797
        %v2844 = vmul.f32 %v2724, %v2797
        %v2845 = vmul.f32 %v2725, %v2797
        %v2894 = vrot.slane %v2798, 1
        %v2895 = vrot.slane %v2799, 1
        %v2896 = vsel %vm364, %v2894, %v2895
        %v2897 = vrot.slane %v2800, 1
        %v2898 = vsel %vm364, %v2895, %v2897
        %v2899 = vrot.slane %v2801, 1
        %v2900 = vrot.slane %v2802, 1
        %v2901 = vsel %vm364, %v2899, %v2900
        %v2902 = vrot.slane %v2803, 1
        %v2903 = vsel %vm364, %v2900, %v2902
        %v2904 = vrot.slane %v2804, 1
        %v2905 = vrot.slane %v2805, 1
        %v2906 = vsel %vm364, %v2904, %v2905
        %v2907 = vrot.slane %v2806, 1
        %v2908 = vsel %vm364, %v2905, %v2907
        %v2909 = vrot.slane %v2807, 1
        %v2910 = vrot.slane %v2808, 1
        %v2911 = vsel %vm364, %v2909, %v2910
        %v2912 = vrot.slane %v2809, 1
        %v2913 = vsel %vm364, %v2910, %v2912
        %v2914 = vrot.slane %v2810, 1
        %v2915 = vrot.slane %v2811, 1
        %v2916 = vsel %vm364, %v2914, %v2915
        %v2917 = vrot.slane %v2812, 1
        %v2918 = vsel %vm364, %v2915, %v2917
        %v2919 = vrot.slane %v2813, 1
        %v2920 = vrot.slane %v2814, 1
        %v2921 = vsel %vm364, %v2919, %v2920
        %v2922 = vrot.slane %v2815, 1
        %v2923 = vsel %vm364, %v2920, %v2922
        %v2924 = vrot.slane %v2816, 1
        %v2925 = vrot.slane %v2817, 1
        %v2926 = vsel %vm364, %v2924, %v2925
        %v2927 = vrot.slane %v2818, 1
        %v2928 = vsel %vm364, %v2925, %v2927
        %v2929 = vrot.slane %v2819, 1
        %v2930 = vrot.slane %v2820, 1
        %v2931 = vsel %vm364, %v2929, %v2930
        %v2932 = vrot.slane %v2821, 1
        %v2933 = vsel %vm364, %v2930, %v2932
        %v2934 = vrot.slane %v2822, 1
        %v2935 = vrot.slane %v2823, 1
        %v2936 = vsel %vm364, %v2934, %v2935
        %v2937 = vrot.slane %v2824, 1
        %v2938 = vsel %vm364, %v2935, %v2937
        %v2939 = vrot.slane %v2825, 1
        %v2940 = vrot.slane %v2826, 1
        %v2941 = vsel %vm364, %v2939, %v2940
        %v2942 = vrot.slane %v2827, 1
        %v2943 = vsel %vm364, %v2940, %v2942
        %v2944 = vrot.slane %v2828, 1
        %v2945 = vrot.slane %v2829, 1
        %v2946 = vsel %vm364, %v2944, %v2945
        %v2947 = vrot.slane %v2830, 1
        %v2948 = vsel %vm364, %v2945, %v2947
        %v2949 = vrot.slane %v2831, 1
        %v2950 = vrot.slane %v2832, 1
        %v2951 = vsel %vm364, %v2949, %v2950
        %v2952 = vrot.slane %v2833, 1
        %v2953 = vsel %vm364, %v2950, %v2952
        %v2954 = vrot.slane %v2834, 1
        %v2955 = vrot.slane %v2835, 1
        %v2956 = vsel %vm364, %v2954, %v2955
        %v2957 = vrot.slane %v2836, 1
        %v2958 = vsel %vm364, %v2955, %v2957
        %v2959 = vrot.slane %v2837, 1
        %v2960 = vrot.slane %v2838, 1
        %v2961 = vsel %vm364, %v2959, %v2960
        %v2962 = vrot.slane %v2839, 1
        %v2963 = vsel %vm364, %v2960, %v2962
        %v2964 = vrot.slane %v2840, 1
        %v2965 = vrot.slane %v2841, 1
        %v2966 = vsel %vm364, %v2964, %v2965
        %v2967 = vrot.slane %v2842, 1
        %v2968 = vsel %vm364, %v2965, %v2967
        %v2969 = vrot.slane %v2843, 1
        %v2970 = vrot.slane %v2844, 1
        %v2971 = vsel %vm364, %v2969, %v2970
        %v2972 = vrot.slane %v2845, 1
        %v2973 = vsel %vm364, %v2970, %v2972
        %v3006 = vadd.f32 %v2762, %v2896
        %v3007 = vadd.f32 %v2763, %v2898
        %v3008 = vadd.f32 %v2764, %v2901
        %v3009 = vadd.f32 %v2765, %v2903
        %v3010 = vadd.f32 %v2766, %v2906
        %v3011 = vadd.f32 %v2767, %v2908
        %v3012 = vadd.f32 %v2768, %v2911
        %v3013 = vadd.f32 %v2769, %v2913
        %v3014 = vadd.f32 %v2770, %v2916
        %v3015 = vadd.f32 %v2771, %v2918
        %v3016 = vadd.f32 %v2772, %v2921
        %v3017 = vadd.f32 %v2773, %v2923
        %v3018 = vadd.f32 %v2774, %v2926
        %v3019 = vadd.f32 %v2775, %v2928
        %v3020 = vadd.f32 %v2776, %v2931
        %v3021 = vadd.f32 %v2777, %v2933
        %v3022 = vadd.f32 %v2778, %v2936
        %v3023 = vadd.f32 %v2779, %v2938
        %v3024 = vadd.f32 %v2780, %v2941
        %v3025 = vadd.f32 %v2781, %v2943
        %v3026 = vadd.f32 %v2782, %v2946
        %v3027 = vadd.f32 %v2783, %v2948
        %v3028 = vadd.f32 %v2784, %v2951
        %v3029 = vadd.f32 %v2785, %v2953
        %v3030 = vadd.f32 %v2786, %v2956
        %v3031 = vadd.f32 %v2787, %v2958
        %v3032 = vadd.f32 %v2788, %v2961
        %v3033 = vadd.f32 %v2789, %v2963
        %v3034 = vadd.f32 %v2790, %v2966
        %v3035 = vadd.f32 %v2791, %v2968
        %v3036 = vadd.f32 %v2792, %v2971
        %v3037 = vadd.f32 %v2793, %v2973
        %v3038 = vlaneseq
        %v3039 = vshrl.u32 %v3038, 7
        %v3040 = vsub.s32 5, %v3039
        %v3041 = vrot.slane %v2072, %v3040
        %v3042 = vmul.f32 %v2678, %v3041
        %v3043 = vmul.f32 %v2679, %v3041
        %v3044 = vmul.f32 %v2680, %v3041
        %v3045 = vmul.f32 %v2681, %v3041
        %v3046 = vmul.f32 %v2682, %v3041
        %v3047 = vmul.f32 %v2683, %v3041
        %v3048 = vmul.f32 %v2684, %v3041
        %v3049 = vmul.f32 %v2685, %v3041
        %v3050 = vmul.f32 %v2686, %v3041
        %v3051 = vmul.f32 %v2687, %v3041
        %v3052 = vmul.f32 %v2688, %v3041
        %v3053 = vmul.f32 %v2689, %v3041
        %v3054 = vmul.f32 %v2690, %v3041
        %v3055 = vmul.f32 %v2691, %v3041
        %v3056 = vmul.f32 %v2692, %v3041
        %v3057 = vmul.f32 %v2693, %v3041
        %v3058 = vmul.f32 %v2694, %v3041
        %v3059 = vmul.f32 %v2695, %v3041
        %v3060 = vmul.f32 %v2696, %v3041
        %v3061 = vmul.f32 %v2697, %v3041
        %v3062 = vmul.f32 %v2698, %v3041
        %v3063 = vmul.f32 %v2699, %v3041
        %v3064 = vmul.f32 %v2700, %v3041
        %v3065 = vmul.f32 %v2701, %v3041
        %v3066 = vmul.f32 %v2702, %v3041
        %v3067 = vmul.f32 %v2703, %v3041
        %v3068 = vmul.f32 %v2704, %v3041
        %v3069 = vmul.f32 %v2705, %v3041
        %v3070 = vmul.f32 %v2706, %v3041
        %v3071 = vmul.f32 %v2707, %v3041
        %v3072 = vmul.f32 %v2708, %v3041
        %v3073 = vmul.f32 %v2709, %v3041
        %v3074 = vmul.f32 %v2710, %v3041
        %v3075 = vmul.f32 %v2711, %v3041
        %v3076 = vmul.f32 %v2712, %v3041
        %v3077 = vmul.f32 %v2713, %v3041
        %v3078 = vmul.f32 %v2714, %v3041
        %v3079 = vmul.f32 %v2715, %v3041
        %v3080 = vmul.f32 %v2716, %v3041
        %v3081 = vmul.f32 %v2717, %v3041
        %v3082 = vmul.f32 %v2718, %v3041
        %v3083 = vmul.f32 %v2719, %v3041
        %v3084 = vmul.f32 %v2720, %v3041
        %v3085 = vmul.f32 %v2721, %v3041
        %v3086 = vmul.f32 %v2722, %v3041
        %v3087 = vmul.f32 %v2723, %v3041
        %v3088 = vmul.f32 %v2724, %v3041
        %v3089 = vmul.f32 %v2725, %v3041
        %v3138 = vrot.slane %v3042, 2
        %v3139 = vrot.slane %v3043, 2
        %v3140 = vsel %vm541, %v3138, %v3139
        %v3141 = vrot.slane %v3044, 2
        %v3142 = vsel %vm541, %v3139, %v3141
        %v3143 = vrot.slane %v3045, 2
        %v3144 = vrot.slane %v3046, 2
        %v3145 = vsel %vm541, %v3143, %v3144
        %v3146 = vrot.slane %v3047, 2
        %v3147 = vsel %vm541, %v3144, %v3146
        %v3148 = vrot.slane %v3048, 2
        %v3149 = vrot.slane %v3049, 2
        %v3150 = vsel %vm541, %v3148, %v3149
        %v3151 = vrot.slane %v3050, 2
        %v3152 = vsel %vm541, %v3149, %v3151
        %v3153 = vrot.slane %v3051, 2
        %v3154 = vrot.slane %v3052, 2
        %v3155 = vsel %vm541, %v3153, %v3154
        %v3156 = vrot.slane %v3053, 2
        %v3157 = vsel %vm541, %v3154, %v3156
        %v3158 = vrot.slane %v3054, 2
        %v3159 = vrot.slane %v3055, 2
        %v3160 = vsel %vm541, %v3158, %v3159
        %v3161 = vrot.slane %v3056, 2
        %v3162 = vsel %vm541, %v3159, %v3161
        %v3163 = vrot.slane %v3057, 2
        %v3164 = vrot.slane %v3058, 2
        %v3165 = vsel %vm541, %v3163, %v3164
        %v3166 = vrot.slane %v3059, 2
        %v3167 = vsel %vm541, %v3164, %v3166
        %v3168 = vrot.slane %v3060, 2
        %v3169 = vrot.slane %v3061, 2
        %v3170 = vsel %vm541, %v3168, %v3169
        %v3171 = vrot.slane %v3062, 2
        %v3172 = vsel %vm541, %v3169, %v3171
        %v3173 = vrot.slane %v3063, 2
        %v3174 = vrot.slane %v3064, 2
        %v3175 = vsel %vm541, %v3173, %v3174
        %v3176 = vrot.slane %v3065, 2
        %v3177 = vsel %vm541, %v3174, %v3176
        %v3178 = vrot.slane %v3066, 2
        %v3179 = vrot.slane %v3067, 2
        %v3180 = vsel %vm541, %v3178, %v3179
        %v3181 = vrot.slane %v3068, 2
        %v3182 = vsel %vm541, %v3179, %v3181
        %v3183 = vrot.slane %v3069, 2
        %v3184 = vrot.slane %v3070, 2
        %v3185 = vsel %vm541, %v3183, %v3184
        %v3186 = vrot.slane %v3071, 2
        %v3187 = vsel %vm541, %v3184, %v3186
        %v3188 = vrot.slane %v3072, 2
        %v3189 = vrot.slane %v3073, 2
        %v3190 = vsel %vm541, %v3188, %v3189
        %v3191 = vrot.slane %v3074, 2
        %v3192 = vsel %vm541, %v3189, %v3191
        %v3193 = vrot.slane %v3075, 2
        %v3194 = vrot.slane %v3076, 2
        %v3195 = vsel %vm541, %v3193, %v3194
        %v3196 = vrot.slane %v3077, 2
        %v3197 = vsel %vm541, %v3194, %v3196
        %v3198 = vrot.slane %v3078, 2
        %v3199 = vrot.slane %v3079, 2
        %v3200 = vsel %vm541, %v3198, %v3199
        %v3201 = vrot.slane %v3080, 2
        %v3202 = vsel %vm541, %v3199, %v3201
        %v3203 = vrot.slane %v3081, 2
        %v3204 = vrot.slane %v3082, 2
        %v3205 = vsel %vm541, %v3203, %v3204
        %v3206 = vrot.slane %v3083, 2
        %v3207 = vsel %vm541, %v3204, %v3206
        %v3208 = vrot.slane %v3084, 2
        %v3209 = vrot.slane %v3085, 2
        %v3210 = vsel %vm541, %v3208, %v3209
        %v3211 = vrot.slane %v3086, 2
        %v3212 = vsel %vm541, %v3209, %v3211
        %v3213 = vrot.slane %v3087, 2
        %v3214 = vrot.slane %v3088, 2
        %v3215 = vsel %vm541, %v3213, %v3214
        %v3216 = vrot.slane %v3089, 2
        %v3217 = vsel %vm541, %v3214, %v3216
        %v3250 = vadd.f32 %v3006, %v3140
        %v3251 = vadd.f32 %v3007, %v3142
        %v3252 = vadd.f32 %v3008, %v3145
        %v3253 = vadd.f32 %v3009, %v3147
        %v3254 = vadd.f32 %v3010, %v3150
        %v3255 = vadd.f32 %v3011, %v3152
        %v3256 = vadd.f32 %v3012, %v3155
        %v3257 = vadd.f32 %v3013, %v3157
        %v3258 = vadd.f32 %v3014, %v3160
        %v3259 = vadd.f32 %v3015, %v3162
        %v3260 = vadd.f32 %v3016, %v3165
        %v3261 = vadd.f32 %v3017, %v3167
        %v3262 = vadd.f32 %v3018, %v3170
        %v3263 = vadd.f32 %v3019, %v3172
        %v3264 = vadd.f32 %v3020, %v3175
        %v3265 = vadd.f32 %v3021, %v3177
        %v3266 = vadd.f32 %v3022, %v3180
        %v3267 = vadd.f32 %v3023, %v3182
        %v3268 = vadd.f32 %v3024, %v3185
        %v3269 = vadd.f32 %v3025, %v3187
        %v3270 = vadd.f32 %v3026, %v3190
        %v3271 = vadd.f32 %v3027, %v3192
        %v3272 = vadd.f32 %v3028, %v3195
        %v3273 = vadd.f32 %v3029, %v3197
        %v3274 = vadd.f32 %v3030, %v3200
        %v3275 = vadd.f32 %v3031, %v3202
        %v3276 = vadd.f32 %v3032, %v3205
        %v3277 = vadd.f32 %v3033, %v3207
        %v3278 = vadd.f32 %v3034, %v3210
        %v3279 = vadd.f32 %v3035, %v3212
        %v3280 = vadd.f32 %v3036, %v3215
        %v3281 = vadd.f32 %v3037, %v3217
        %s3282 = scalar_lea.vmem [#allocation2], 48
        %v3283 = vld [vmem:[%s3282] sm:$0xff]
        %v3284 = vld [vmem:[%s3282 + $0x8] sm:$0xff]
        %v3285 = vld [vmem:[%s3282 + $0x10] sm:$0x3]
        %v3286 = vld [vmem:[%s3282 + $0x18] sm:$0xff]
        %v3287 = vld [vmem:[%s3282 + $0x20] sm:$0xff]
        %v3288 = vld [vmem:[%s3282 + $0x28] sm:$0x3]
        %v3289 = vld [vmem:[%s3282 + $0x30] sm:$0xff]
        %v3290 = vld [vmem:[%s3282 + $0x38] sm:$0xff]
        %v3291 = vld [vmem:[%s3282 + $0x40] sm:$0x3]
        %v3292 = vld [vmem:[%s3282 + $0x48] sm:$0xff]
        %v3293 = vld [vmem:[%s3282 + $0x50] sm:$0xff]
        %v3294 = vld [vmem:[%s3282 + $0x58] sm:$0x3]
        %v3295 = vld [vmem:[%s3282 + $0x60] sm:$0xff]
        %v3296 = vld [vmem:[%s3282 + $0x68] sm:$0xff]
        %v3297 = vld [vmem:[%s3282 + $0x70] sm:$0x3]
        %v3298 = vld [vmem:[%s3282 + $0x78] sm:$0xff]
        %v3299 = vld [vmem:[%s3282 + $0x80] sm:$0xff]
        %v3300 = vld [vmem:[%s3282 + $0x88] sm:$0x3]
        %v3301 = vld [vmem:[%s3282 + $0x90] sm:$0xff]
        %v3302 = vld [vmem:[%s3282 + $0x98] sm:$0xff]
        %v3303 = vld [vmem:[%s3282 + $0xa0] sm:$0x3]
        %v3304 = vld [vmem:[%s3282 + $0xa8] sm:$0xff]
        %v3305 = vld [vmem:[%s3282 + $0xb0] sm:$0xff]
        %v3306 = vld [vmem:[%s3282 + $0xb8] sm:$0x3]
        %v3307 = vld [vmem:[%s3282 + $0xc0] sm:$0xff]
        %v3308 = vld [vmem:[%s3282 + $0xc8] sm:$0xff]
        %v3309 = vld [vmem:[%s3282 + $0xd0] sm:$0x3]
        %v3310 = vld [vmem:[%s3282 + $0xd8] sm:$0xff]
        %v3311 = vld [vmem:[%s3282 + $0xe0] sm:$0xff]
        %v3312 = vld [vmem:[%s3282 + $0xe8] sm:$0x3]
        %v3313 = vld [vmem:[%s3282 + $0xf0] sm:$0xff]
        %v3314 = vld [vmem:[%s3282 + $0xf8] sm:$0xff]
        %v3315 = vld [vmem:[%s3282 + $0x100] sm:$0x3]
        %v3316 = vld [vmem:[%s3282 + $0x108] sm:$0xff]
        %v3317 = vld [vmem:[%s3282 + $0x110] sm:$0xff]
        %v3318 = vld [vmem:[%s3282 + $0x118] sm:$0x3]
        %v3319 = vld [vmem:[%s3282 + $0x120] sm:$0xff]
        %v3320 = vld [vmem:[%s3282 + $0x128] sm:$0xff]
        %v3321 = vld [vmem:[%s3282 + $0x130] sm:$0x3]
        %v3322 = vld [vmem:[%s3282 + $0x138] sm:$0xff]
        %v3323 = vld [vmem:[%s3282 + $0x140] sm:$0xff]
        %v3324 = vld [vmem:[%s3282 + $0x148] sm:$0x3]
        %v3325 = vld [vmem:[%s3282 + $0x150] sm:$0xff]
        %v3326 = vld [vmem:[%s3282 + $0x158] sm:$0xff]
        %v3327 = vld [vmem:[%s3282 + $0x160] sm:$0x3]
        %v3328 = vld [vmem:[%s3282 + $0x168] sm:$0xff]
        %v3329 = vld [vmem:[%s3282 + $0x170] sm:$0xff]
        %v3330 = vld [vmem:[%s3282 + $0x178] sm:$0x3]
        %v3331 = vlaneseq
        %v3332 = vshrl.u32 %v3331, 7
        %v3333 = vsub.s32 6, %v3332
        %v3334 = vrot.slane %v2072, %v3333
        %v3335 = vmul.f32 %v3283, %v3334
        %v3336 = vmul.f32 %v3284, %v3334
        %v3337 = vmul.f32 %v3286, %v3334
        %v3338 = vmul.f32 %v3287, %v3334
        %v3339 = vmul.f32 %v3289, %v3334
        %v3340 = vmul.f32 %v3290, %v3334
        %v3341 = vmul.f32 %v3292, %v3334
        %v3342 = vmul.f32 %v3293, %v3334
        %v3343 = vmul.f32 %v3295, %v3334
        %v3344 = vmul.f32 %v3296, %v3334
        %v3345 = vmul.f32 %v3298, %v3334
        %v3346 = vmul.f32 %v3299, %v3334
        %v3347 = vmul.f32 %v3301, %v3334
        %v3348 = vmul.f32 %v3302, %v3334
        %v3349 = vmul.f32 %v3304, %v3334
        %v3350 = vmul.f32 %v3305, %v3334
        %v3351 = vmul.f32 %v3307, %v3334
        %v3352 = vmul.f32 %v3308, %v3334
        %v3353 = vmul.f32 %v3310, %v3334
        %v3354 = vmul.f32 %v3311, %v3334
        %v3355 = vmul.f32 %v3313, %v3334
        %v3356 = vmul.f32 %v3314, %v3334
        %v3357 = vmul.f32 %v3316, %v3334
        %v3358 = vmul.f32 %v3317, %v3334
        %v3359 = vmul.f32 %v3319, %v3334
        %v3360 = vmul.f32 %v3320, %v3334
        %v3361 = vmul.f32 %v3322, %v3334
        %v3362 = vmul.f32 %v3323, %v3334
        %v3363 = vmul.f32 %v3325, %v3334
        %v3364 = vmul.f32 %v3326, %v3334
        %v3365 = vmul.f32 %v3328, %v3334
        %v3366 = vmul.f32 %v3329, %v3334
        %v3367 = vadd.f32 %v3250, %v3335
        %v3368 = vadd.f32 %v3251, %v3336
        %v3369 = vadd.f32 %v3252, %v3337
        %v3370 = vadd.f32 %v3253, %v3338
        %v3371 = vadd.f32 %v3254, %v3339
        %v3372 = vadd.f32 %v3255, %v3340
        %v3373 = vadd.f32 %v3256, %v3341
        %v3374 = vadd.f32 %v3257, %v3342
        %v3375 = vadd.f32 %v3258, %v3343
        %v3376 = vadd.f32 %v3259, %v3344
        %v3377 = vadd.f32 %v3260, %v3345
        %v3378 = vadd.f32 %v3261, %v3346
        %v3379 = vadd.f32 %v3262, %v3347
        %v3380 = vadd.f32 %v3263, %v3348
        %v3381 = vadd.f32 %v3264, %v3349
        %v3382 = vadd.f32 %v3265, %v3350
        %v3383 = vadd.f32 %v3266, %v3351
        %v3384 = vadd.f32 %v3267, %v3352
        %v3385 = vadd.f32 %v3268, %v3353
        %v3386 = vadd.f32 %v3269, %v3354
        %v3387 = vadd.f32 %v3270, %v3355
        %v3388 = vadd.f32 %v3271, %v3356
        %v3389 = vadd.f32 %v3272, %v3357
        %v3390 = vadd.f32 %v3273, %v3358
        %v3391 = vadd.f32 %v3274, %v3359
        %v3392 = vadd.f32 %v3275, %v3360
        %v3393 = vadd.f32 %v3276, %v3361
        %v3394 = vadd.f32 %v3277, %v3362
        %v3395 = vadd.f32 %v3278, %v3363
        %v3396 = vadd.f32 %v3279, %v3364
        %v3397 = vadd.f32 %v3280, %v3365
        %v3398 = vadd.f32 %v3281, %v3366
        %v3399 = vlaneseq
        %v3400 = vshrl.u32 %v3399, 7
        %v3401 = vsub.s32 7, %v3400
        %v3402 = vrot.slane %v2072, %v3401
        %v3403 = vmul.f32 %v3283, %v3402
        %v3404 = vmul.f32 %v3284, %v3402
        %v3405 = vmul.f32 %v3285, %v3402
        %v3406 = vmul.f32 %v3286, %v3402
        %v3407 = vmul.f32 %v3287, %v3402
        %v3408 = vmul.f32 %v3288, %v3402
        %v3409 = vmul.f32 %v3289, %v3402
        %v3410 = vmul.f32 %v3290, %v3402
        %v3411 = vmul.f32 %v3291, %v3402
        %v3412 = vmul.f32 %v3292, %v3402
        %v3413 = vmul.f32 %v3293, %v3402
        %v3414 = vmul.f32 %v3294, %v3402
        %v3415 = vmul.f32 %v3295, %v3402
        %v3416 = vmul.f32 %v3296, %v3402
        %v3417 = vmul.f32 %v3297, %v3402
        %v3418 = vmul.f32 %v3298, %v3402
        %v3419 = vmul.f32 %v3299, %v3402
        %v3420 = vmul.f32 %v3300, %v3402
        %v3421 = vmul.f32 %v3301, %v3402
        %v3422 = vmul.f32 %v3302, %v3402
        %v3423 = vmul.f32 %v3303, %v3402
        %v3424 = vmul.f32 %v3304, %v3402
        %v3425 = vmul.f32 %v3305, %v3402
        %v3426 = vmul.f32 %v3306, %v3402
        %v3427 = vmul.f32 %v3307, %v3402
        %v3428 = vmul.f32 %v3308, %v3402
        %v3429 = vmul.f32 %v3309, %v3402
        %v3430 = vmul.f32 %v3310, %v3402
        %v3431 = vmul.f32 %v3311, %v3402
        %v3432 = vmul.f32 %v3312, %v3402
        %v3433 = vmul.f32 %v3313, %v3402
        %v3434 = vmul.f32 %v3314, %v3402
        %v3435 = vmul.f32 %v3315, %v3402
        %v3436 = vmul.f32 %v3316, %v3402
        %v3437 = vmul.f32 %v3317, %v3402
        %v3438 = vmul.f32 %v3318, %v3402
        %v3439 = vmul.f32 %v3319, %v3402
        %v3440 = vmul.f32 %v3320, %v3402
        %v3441 = vmul.f32 %v3321, %v3402
        %v3442 = vmul.f32 %v3322, %v3402
        %v3443 = vmul.f32 %v3323, %v3402
        %v3444 = vmul.f32 %v3324, %v3402
        %v3445 = vmul.f32 %v3325, %v3402
        %v3446 = vmul.f32 %v3326, %v3402
        %v3447 = vmul.f32 %v3327, %v3402
        %v3448 = vmul.f32 %v3328, %v3402
        %v3449 = vmul.f32 %v3329, %v3402
        %v3450 = vmul.f32 %v3330, %v3402
        %v3499 = vrot.slane %v3403, 1
        %v3500 = vrot.slane %v3404, 1
        %v3501 = vsel %vm364, %v3499, %v3500
        %v3502 = vrot.slane %v3405, 1
        %v3503 = vsel %vm364, %v3500, %v3502
        %v3504 = vrot.slane %v3406, 1
        %v3505 = vrot.slane %v3407, 1
        %v3506 = vsel %vm364, %v3504, %v3505
        %v3507 = vrot.slane %v3408, 1
        %v3508 = vsel %vm364, %v3505, %v3507
        %v3509 = vrot.slane %v3409, 1
        %v3510 = vrot.slane %v3410, 1
        %v3511 = vsel %vm364, %v3509, %v3510
        %v3512 = vrot.slane %v3411, 1
        %v3513 = vsel %vm364, %v3510, %v3512
        %v3514 = vrot.slane %v3412, 1
        %v3515 = vrot.slane %v3413, 1
        %v3516 = vsel %vm364, %v3514, %v3515
        %v3517 = vrot.slane %v3414, 1
        %v3518 = vsel %vm364, %v3515, %v3517
        %v3519 = vrot.slane %v3415, 1
        %v3520 = vrot.slane %v3416, 1
        %v3521 = vsel %vm364, %v3519, %v3520
        %v3522 = vrot.slane %v3417, 1
        %v3523 = vsel %vm364, %v3520, %v3522
        %v3524 = vrot.slane %v3418, 1
        %v3525 = vrot.slane %v3419, 1
        %v3526 = vsel %vm364, %v3524, %v3525
        %v3527 = vrot.slane %v3420, 1
        %v3528 = vsel %vm364, %v3525, %v3527
        %v3529 = vrot.slane %v3421, 1
        %v3530 = vrot.slane %v3422, 1
        %v3531 = vsel %vm364, %v3529, %v3530
        %v3532 = vrot.slane %v3423, 1
        %v3533 = vsel %vm364, %v3530, %v3532
        %v3534 = vrot.slane %v3424, 1
        %v3535 = vrot.slane %v3425, 1
        %v3536 = vsel %vm364, %v3534, %v3535
        %v3537 = vrot.slane %v3426, 1
        %v3538 = vsel %vm364, %v3535, %v3537
        %v3539 = vrot.slane %v3427, 1
        %v3540 = vrot.slane %v3428, 1
        %v3541 = vsel %vm364, %v3539, %v3540
        %v3542 = vrot.slane %v3429, 1
        %v3543 = vsel %vm364, %v3540, %v3542
        %v3544 = vrot.slane %v3430, 1
        %v3545 = vrot.slane %v3431, 1
        %v3546 = vsel %vm364, %v3544, %v3545
        %v3547 = vrot.slane %v3432, 1
        %v3548 = vsel %vm364, %v3545, %v3547
        %v3549 = vrot.slane %v3433, 1
        %v3550 = vrot.slane %v3434, 1
        %v3551 = vsel %vm364, %v3549, %v3550
        %v3552 = vrot.slane %v3435, 1
        %v3553 = vsel %vm364, %v3550, %v3552
        %v3554 = vrot.slane %v3436, 1
        %v3555 = vrot.slane %v3437, 1
        %v3556 = vsel %vm364, %v3554, %v3555
        %v3557 = vrot.slane %v3438, 1
        %v3558 = vsel %vm364, %v3555, %v3557
        %v3559 = vrot.slane %v3439, 1
        %v3560 = vrot.slane %v3440, 1
        %v3561 = vsel %vm364, %v3559, %v3560
        %v3562 = vrot.slane %v3441, 1
        %v3563 = vsel %vm364, %v3560, %v3562
        %v3564 = vrot.slane %v3442, 1
        %v3565 = vrot.slane %v3443, 1
        %v3566 = vsel %vm364, %v3564, %v3565
        %v3567 = vrot.slane %v3444, 1
        %v3568 = vsel %vm364, %v3565, %v3567
        %v3569 = vrot.slane %v3445, 1
        %v3570 = vrot.slane %v3446, 1
        %v3571 = vsel %vm364, %v3569, %v3570
        %v3572 = vrot.slane %v3447, 1
        %v3573 = vsel %vm364, %v3570, %v3572
        %v3574 = vrot.slane %v3448, 1
        %v3575 = vrot.slane %v3449, 1
        %v3576 = vsel %vm364, %v3574, %v3575
        %v3577 = vrot.slane %v3450, 1
        %v3578 = vsel %vm364, %v3575, %v3577
        %v3611 = vadd.f32 %v3367, %v3501
        %v3612 = vadd.f32 %v3368, %v3503
        %v3613 = vadd.f32 %v3369, %v3506
        %v3614 = vadd.f32 %v3370, %v3508
        %v3615 = vadd.f32 %v3371, %v3511
        %v3616 = vadd.f32 %v3372, %v3513
        %v3617 = vadd.f32 %v3373, %v3516
        %v3618 = vadd.f32 %v3374, %v3518
        %v3619 = vadd.f32 %v3375, %v3521
        %v3620 = vadd.f32 %v3376, %v3523
        %v3621 = vadd.f32 %v3377, %v3526
        %v3622 = vadd.f32 %v3378, %v3528
        %v3623 = vadd.f32 %v3379, %v3531
        %v3624 = vadd.f32 %v3380, %v3533
        %v3625 = vadd.f32 %v3381, %v3536
        %v3626 = vadd.f32 %v3382, %v3538
        %v3627 = vadd.f32 %v3383, %v3541
        %v3628 = vadd.f32 %v3384, %v3543
        %v3629 = vadd.f32 %v3385, %v3546
        %v3630 = vadd.f32 %v3386, %v3548
        %v3631 = vadd.f32 %v3387, %v3551
        %v3632 = vadd.f32 %v3388, %v3553
        %v3633 = vadd.f32 %v3389, %v3556
        %v3634 = vadd.f32 %v3390, %v3558
        %v3635 = vadd.f32 %v3391, %v3561
        %v3636 = vadd.f32 %v3392, %v3563
        %v3637 = vadd.f32 %v3393, %v3566
        %v3638 = vadd.f32 %v3394, %v3568
        %v3639 = vadd.f32 %v3395, %v3571
        %v3640 = vadd.f32 %v3396, %v3573
        %v3641 = vadd.f32 %v3397, %v3576
        %v3642 = vadd.f32 %v3398, %v3578
        %v3643 = vlaneseq
        %v3644 = vshrl.u32 %v3643, 7
        %v3645 = vsub.s32 0, %v3644
        %v3646 = vrot.slane %v2073, %v3645
        %v3647 = vmul.f32 %v3283, %v3646
        %v3648 = vmul.f32 %v3284, %v3646
        %v3649 = vmul.f32 %v3285, %v3646
        %v3650 = vmul.f32 %v3286, %v3646
        %v3651 = vmul.f32 %v3287, %v3646
        %v3652 = vmul.f32 %v3288, %v3646
        %v3653 = vmul.f32 %v3289, %v3646
        %v3654 = vmul.f32 %v3290, %v3646
        %v3655 = vmul.f32 %v3291, %v3646
        %v3656 = vmul.f32 %v3292, %v3646
        %v3657 = vmul.f32 %v3293, %v3646
        %v3658 = vmul.f32 %v3294, %v3646
        %v3659 = vmul.f32 %v3295, %v3646
        %v3660 = vmul.f32 %v3296, %v3646
        %v3661 = vmul.f32 %v3297, %v3646
        %v3662 = vmul.f32 %v3298, %v3646
        %v3663 = vmul.f32 %v3299, %v3646
        %v3664 = vmul.f32 %v3300, %v3646
        %v3665 = vmul.f32 %v3301, %v3646
        %v3666 = vmul.f32 %v3302, %v3646
        %v3667 = vmul.f32 %v3303, %v3646
        %v3668 = vmul.f32 %v3304, %v3646
        %v3669 = vmul.f32 %v3305, %v3646
        %v3670 = vmul.f32 %v3306, %v3646
        %v3671 = vmul.f32 %v3307, %v3646
        %v3672 = vmul.f32 %v3308, %v3646
        %v3673 = vmul.f32 %v3309, %v3646
        %v3674 = vmul.f32 %v3310, %v3646
        %v3675 = vmul.f32 %v3311, %v3646
        %v3676 = vmul.f32 %v3312, %v3646
        %v3677 = vmul.f32 %v3313, %v3646
        %v3678 = vmul.f32 %v3314, %v3646
        %v3679 = vmul.f32 %v3315, %v3646
        %v3680 = vmul.f32 %v3316, %v3646
        %v3681 = vmul.f32 %v3317, %v3646
        %v3682 = vmul.f32 %v3318, %v3646
        %v3683 = vmul.f32 %v3319, %v3646
        %v3684 = vmul.f32 %v3320, %v3646
        %v3685 = vmul.f32 %v3321, %v3646
        %v3686 = vmul.f32 %v3322, %v3646
        %v3687 = vmul.f32 %v3323, %v3646
        %v3688 = vmul.f32 %v3324, %v3646
        %v3689 = vmul.f32 %v3325, %v3646
        %v3690 = vmul.f32 %v3326, %v3646
        %v3691 = vmul.f32 %v3327, %v3646
        %v3692 = vmul.f32 %v3328, %v3646
        %v3693 = vmul.f32 %v3329, %v3646
        %v3694 = vmul.f32 %v3330, %v3646
        %v3743 = vrot.slane %v3647, 2
        %v3744 = vrot.slane %v3648, 2
        %v3745 = vsel %vm541, %v3743, %v3744
        %v3746 = vrot.slane %v3649, 2
        %v3747 = vsel %vm541, %v3744, %v3746
        %v3748 = vrot.slane %v3650, 2
        %v3749 = vrot.slane %v3651, 2
        %v3750 = vsel %vm541, %v3748, %v3749
        %v3751 = vrot.slane %v3652, 2
        %v3752 = vsel %vm541, %v3749, %v3751
        %v3753 = vrot.slane %v3653, 2
        %v3754 = vrot.slane %v3654, 2
        %v3755 = vsel %vm541, %v3753, %v3754
        %v3756 = vrot.slane %v3655, 2
        %v3757 = vsel %vm541, %v3754, %v3756
        %v3758 = vrot.slane %v3656, 2
        %v3759 = vrot.slane %v3657, 2
        %v3760 = vsel %vm541, %v3758, %v3759
        %v3761 = vrot.slane %v3658, 2
        %v3762 = vsel %vm541, %v3759, %v3761
        %v3763 = vrot.slane %v3659, 2
        %v3764 = vrot.slane %v3660, 2
        %v3765 = vsel %vm541, %v3763, %v3764
        %v3766 = vrot.slane %v3661, 2
        %v3767 = vsel %vm541, %v3764, %v3766
        %v3768 = vrot.slane %v3662, 2
        %v3769 = vrot.slane %v3663, 2
        %v3770 = vsel %vm541, %v3768, %v3769
        %v3771 = vrot.slane %v3664, 2
        %v3772 = vsel %vm541, %v3769, %v3771
        %v3773 = vrot.slane %v3665, 2
        %v3774 = vrot.slane %v3666, 2
        %v3775 = vsel %vm541, %v3773, %v3774
        %v3776 = vrot.slane %v3667, 2
        %v3777 = vsel %vm541, %v3774, %v3776
        %v3778 = vrot.slane %v3668, 2
        %v3779 = vrot.slane %v3669, 2
        %v3780 = vsel %vm541, %v3778, %v3779
        %v3781 = vrot.slane %v3670, 2
        %v3782 = vsel %vm541, %v3779, %v3781
        %v3783 = vrot.slane %v3671, 2
        %v3784 = vrot.slane %v3672, 2
        %v3785 = vsel %vm541, %v3783, %v3784
        %v3786 = vrot.slane %v3673, 2
        %v3787 = vsel %vm541, %v3784, %v3786
        %v3788 = vrot.slane %v3674, 2
        %v3789 = vrot.slane %v3675, 2
        %v3790 = vsel %vm541, %v3788, %v3789
        %v3791 = vrot.slane %v3676, 2
        %v3792 = vsel %vm541, %v3789, %v3791
        %v3793 = vrot.slane %v3677, 2
        %v3794 = vrot.slane %v3678, 2
        %v3795 = vsel %vm541, %v3793, %v3794
        %v3796 = vrot.slane %v3679, 2
        %v3797 = vsel %vm541, %v3794, %v3796
        %v3798 = vrot.slane %v3680, 2
        %v3799 = vrot.slane %v3681, 2
        %v3800 = vsel %vm541, %v3798, %v3799
        %v3801 = vrot.slane %v3682, 2
        %v3802 = vsel %vm541, %v3799, %v3801
        %v3803 = vrot.slane %v3683, 2
        %v3804 = vrot.slane %v3684, 2
        %v3805 = vsel %vm541, %v3803, %v3804
        %v3806 = vrot.slane %v3685, 2
        %v3807 = vsel %vm541, %v3804, %v3806
        %v3808 = vrot.slane %v3686, 2
        %v3809 = vrot.slane %v3687, 2
        %v3810 = vsel %vm541, %v3808, %v3809
        %v3811 = vrot.slane %v3688, 2
        %v3812 = vsel %vm541, %v3809, %v3811
        %v3813 = vrot.slane %v3689, 2
        %v3814 = vrot.slane %v3690, 2
        %v3815 = vsel %vm541, %v3813, %v3814
        %v3816 = vrot.slane %v3691, 2
        %v3817 = vsel %vm541, %v3814, %v3816
        %v3818 = vrot.slane %v3692, 2
        %v3819 = vrot.slane %v3693, 2
        %v3820 = vsel %vm541, %v3818, %v3819
        %v3821 = vrot.slane %v3694, 2
        %v3822 = vsel %vm541, %v3819, %v3821
        %v3855 = vadd.f32 %v3611, %v3745
        %v3856 = vadd.f32 %v3612, %v3747
        %v3857 = vadd.f32 %v3613, %v3750
        %v3858 = vadd.f32 %v3614, %v3752
        %v3859 = vadd.f32 %v3615, %v3755
        %v3860 = vadd.f32 %v3616, %v3757
        %v3861 = vadd.f32 %v3617, %v3760
        %v3862 = vadd.f32 %v3618, %v3762
        %v3863 = vadd.f32 %v3619, %v3765
        %v3864 = vadd.f32 %v3620, %v3767
        %v3865 = vadd.f32 %v3621, %v3770
        %v3866 = vadd.f32 %v3622, %v3772
        %v3867 = vadd.f32 %v3623, %v3775
        %v3868 = vadd.f32 %v3624, %v3777
        %v3869 = vadd.f32 %v3625, %v3780
        %v3870 = vadd.f32 %v3626, %v3782
        %v3871 = vadd.f32 %v3627, %v3785
        %v3872 = vadd.f32 %v3628, %v3787
        %v3873 = vadd.f32 %v3629, %v3790
        %v3874 = vadd.f32 %v3630, %v3792
        %v3875 = vadd.f32 %v3631, %v3795
        %v3876 = vadd.f32 %v3632, %v3797
        %v3877 = vadd.f32 %v3633, %v3800
        %v3878 = vadd.f32 %v3634, %v3802
        %v3879 = vadd.f32 %v3635, %v3805
        %v3880 = vadd.f32 %v3636, %v3807
        %v3881 = vadd.f32 %v3637, %v3810
        %v3882 = vadd.f32 %v3638, %v3812
        %v3883 = vadd.f32 %v3639, %v3815
        %v3884 = vadd.f32 %v3640, %v3817
        %v3885 = vadd.f32 %v3641, %v3820
        %v3886 = vadd.f32 %v3642, %v3822
        %v3887 = vld [vmem:[%s3] sm:$0xff]
        %v3888 = vld [vmem:[%s3 + $0x8] sm:$0xff]
        %v3889 = vld [vmem:[%s3 + $0x10] sm:$0xff]
        %v3890 = vld [vmem:[%s3 + $0x18] sm:$0xff]
        %v3891 = vld [vmem:[%s3 + $0x20] sm:$0xff]
        %v3892 = vld [vmem:[%s3 + $0x28] sm:$0xff]
        %v3893 = vld [vmem:[%s3 + $0x30] sm:$0xff]
        %v3894 = vld [vmem:[%s3 + $0x38] sm:$0xff]
        %v3895 = vld [vmem:[%s3 + $0x40] sm:$0xff]
        %v3896 = vld [vmem:[%s3 + $0x48] sm:$0xff]
        %v3897 = vld [vmem:[%s3 + $0x50] sm:$0xff]
        %v3898 = vld [vmem:[%s3 + $0x58] sm:$0xff]
        %v3899 = vpack.c.bf16 %v3888, %v3887
        %v3900 = vpack.c.bf16 %v3890, %v3889
        %v3901 = vpack.c.bf16 %v3892, %v3891
        %v3902 = vpack.c.bf16 %v3894, %v3893
        %v3903 = vpack.c.bf16 %v3896, %v3895
        %v3904 = vpack.c.bf16 %v3898, %v3897
        %v3905 = vpack.c.bf16 %v3856, %v3855
        %v3906 = vpack.c.bf16 %v3858, %v3857
        %v3907 = vpack.c.bf16 %v3860, %v3859
        %v3908 = vpack.c.bf16 %v3862, %v3861
        %v3909 = vpack.c.bf16 %v3864, %v3863
        %v3910 = vpack.c.bf16 %v3866, %v3865
        %v3911 = vpack.c.bf16 %v3868, %v3867
        %v3912 = vpack.c.bf16 %v3870, %v3869
        %v3913 = vpack.c.bf16 %v3872, %v3871
        %v3914 = vpack.c.bf16 %v3874, %v3873
        %v3915 = vpack.c.bf16 %v3876, %v3875
        %v3916 = vpack.c.bf16 %v3878, %v3877
        %v3917 = vpack.c.bf16 %v3880, %v3879
        %v3918 = vpack.c.bf16 %v3882, %v3881
        %v3919 = vpack.c.bf16 %v3884, %v3883
        %v3920 = vpack.c.bf16 %v3886, %v3885
        %v3921 = vld [vmem:[%s4] sm:$0xff]
        %v3922 = vld [vmem:[%s4 + $0x8] sm:$0xff]
        %v3923 = vld [vmem:[%s4 + $0x10] sm:$0xff]
        %v3924 = vld [vmem:[%s4 + $0x18] sm:$0xff]
        %v3925 = vld [vmem:[%s4 + $0x20] sm:$0xff]
        %v3926 = vld [vmem:[%s4 + $0x28] sm:$0xff]
        %v3927 = vld [vmem:[%s4 + $0x30] sm:$0xff]
        %v3928 = vld [vmem:[%s4 + $0x38] sm:$0xff]
        %v3929 = vld [vmem:[%s4 + $0x40] sm:$0xff]
        %v3930 = vld [vmem:[%s4 + $0x48] sm:$0xff]
        %v3931 = vld [vmem:[%s4 + $0x50] sm:$0xff]
        %v3932 = vld [vmem:[%s4 + $0x58] sm:$0xff]
        %3934 = vset.pattern.permute.xlu0 0
        %3935 = vperm.xlu0 %3934, %v3921
        %v3936 = vpop.permute.xlu0 %3935
        %3939 = vset.pattern.permute.xlu0 0
        %3940 = vperm.xlu0 %3939, %v3922
        %v3941 = vpop.permute.xlu0 %3940
        %3944 = vset.pattern.permute.xlu0 0
        %3945 = vperm.xlu0 %3944, %v3923
        %v3946 = vpop.permute.xlu0 %3945
        %3949 = vset.pattern.permute.xlu0 0
        %3950 = vperm.xlu0 %3949, %v3924
        %v3951 = vpop.permute.xlu0 %3950
        %3954 = vset.pattern.permute.xlu0 0
        %3955 = vperm.xlu0 %3954, %v3925
        %v3956 = vpop.permute.xlu0 %3955
        %3959 = vset.pattern.permute.xlu0 0
        %3960 = vperm.xlu0 %3959, %v3926
        %v3961 = vpop.permute.xlu0 %3960
        %3964 = vset.pattern.permute.xlu0 0
        %3965 = vperm.xlu0 %3964, %v3927
        %v3966 = vpop.permute.xlu0 %3965
        %3969 = vset.pattern.permute.xlu0 0
        %3970 = vperm.xlu0 %3969, %v3928
        %v3971 = vpop.permute.xlu0 %3970
        %3974 = vset.pattern.permute.xlu0 0
        %3975 = vperm.xlu0 %3974, %v3929
        %v3976 = vpop.permute.xlu0 %3975
        %3979 = vset.pattern.permute.xlu0 0
        %3980 = vperm.xlu0 %3979, %v3930
        %v3981 = vpop.permute.xlu0 %3980
        %3984 = vset.pattern.permute.xlu0 0
        %3985 = vperm.xlu0 %3984, %v3931
        %v3986 = vpop.permute.xlu0 %3985
        %3989 = vset.pattern.permute.xlu0 0
        %3990 = vperm.xlu0 %3989, %v3932
        %v3991 = vpop.permute.xlu0 %3990
        %3993 = vxpose.xlu0.c.b16.start [1/8] %v3899, 128
        %3994 = vxpose.xlu0.c.b16.cont [2/8] %v3900, 128
        %3995 = vxpose.xlu0.c.b16.cont [3/8] %v3901, 128
        %3996 = vxpose.xlu0.c.b16.cont [4/8] %v3902, 128
        %3997 = vxpose.xlu0.c.b16.cont [5/8] %v3903, 128
        %3998 = vxpose.xlu0.c.b16.cont [6/8] %v3904, 128
        %3999 = vxpose.xlu0.c.b16.cont [7/8] 0, 128
        %4000 = vxpose.xlu0.c.b16.end [8/8] 0, 128
        %v4001 = vpop.trf.xlu0
        %v4002 = vpop.trf.xlu0
        %v4003 = vpop.trf.xlu0
        %v4004 = vpop.trf.xlu0
        %v4005 = vpop.trf.xlu0
        %v4006 = vpop.trf.xlu0
        %v4007 = vpop.trf.xlu0
        %v4008 = vpop.trf.xlu0
        %v4010 = vsel %vm1822, %v4001, 0
        %v4013 = vsel %vm1822, %v4002, 0
        %v4016 = vsel %vm1822, %v4003, 0
        %v4019 = vsel %vm1822, %v4004, 0
        %v4022 = vsel %vm1822, %v4005, 0
        %v4025 = vsel %vm1822, %v4006, 0
        %v4028 = vsel %vm1822, %v3905, 0
        %v4031 = vsel %vm1822, %v3906, 0
        %v4034 = vsel %vm1822, %v3907, 0
        %v4037 = vsel %vm1822, %v3908, 0
        %v4040 = vsel %vm1822, %v3909, 0
        %v4043 = vsel %vm1822, %v3910, 0
        %v4046 = vsel %vm1822, %v3911, 0
        %v4049 = vsel %vm1822, %v3912, 0
        %v4052 = vsel %vm1822, %v3913, 0
        %v4055 = vsel %vm1822, %v3914, 0
        %v4058 = vsel %vm1822, %v3915, 0
        %v4061 = vsel %vm1822, %v3916, 0
        %v4064 = vsel %vm1822, %v3917, 0
        %v4067 = vsel %vm1822, %v3918, 0
        %v4070 = vsel %vm1822, %v3919, 0
        %v4073 = vsel %vm1822, %v3920, 0
        %4075 = vmatprep.subr.bf16.mxu0 0
        %4076 = vmatpush1.bf16.xpose.msra.mxu0 %v4049
        %4077 = vmatprep.subr.bf16.mxu0 0
        %4078 = vmatpush1.bf16.xpose.msra.mxu0 %v4046
        %4079 = vmatprep.subr.bf16.mxu0 0
        %4080 = vmatpush1.bf16.xpose.msra.mxu0 %v4043
        %4081 = vmatprep.subr.bf16.mxu0 0
        %4082 = vmatpush1.bf16.xpose.msra.mxu0 %v4040
        %4083 = vmatprep.subr.bf16.mxu0 0
        %4084 = vmatpush1.bf16.xpose.msra.mxu0 %v4037
        %4085 = vmatprep.subr.bf16.mxu0 0
        %4086 = vmatpush1.bf16.xpose.msra.mxu0 %v4034
        %4087 = vmatprep.subr.bf16.mxu0 0
        %4088 = vmatpush1.bf16.xpose.msra.mxu0 %v4031
        %4089 = vmatprep.subr.bf16.mxu0 0
        %4090 = vmatpush1.bf16.xpose.msra.mxu0 %v4028
        %4091 = vmatprep.subr.bf16.mxu0 0
        %4092 = vmatpush2.bf16.xpose.msra.mxu0 %v4073
        %4093 = vmatprep.subr.bf16.mxu0 0
        %4094 = vmatpush2.bf16.xpose.msra.mxu0 %v4070
        %4095 = vmatprep.subr.bf16.mxu0 0
        %4096 = vmatpush2.bf16.xpose.msra.mxu0 %v4067
        %4097 = vmatprep.subr.bf16.mxu0 0
        %4098 = vmatpush2.bf16.xpose.msra.mxu0 %v4064
        %4099 = vmatprep.subr.bf16.mxu0 0
        %4100 = vmatpush2.bf16.xpose.msra.mxu0 %v4061
        %4101 = vmatprep.subr.bf16.mxu0 0
        %4102 = vmatpush2.bf16.xpose.msra.mxu0 %v4058
        %4103 = vmatprep.subr.bf16.mxu0 0
        %4104 = vmatpush2.bf16.xpose.msra.mxu0 %v4055
        %4105 = vmatprep.subr.bf16.mxu0 0
        %4106 = vmatpush2.bf16.xpose.msra.mxu0 %v4052
        %4107 = vmatprep.mubr.bf16.mxu0 0
        %4108 = vmatmul.mubr.bf16.gmra.mxu0 %v4010
        %v4109 = vpop.f32.mrf.mxu0
        %v4110 = vadd.f32 %v3936, %v4109
        %v4111 = vpop.f32.mrf.mxu0
        %v4112 = vadd.f32 %v3936, %v4111
        %v4113 = vpop.f32.mrf.mxu0
        %v4114 = vadd.f32 %v3941, %v4113
        %v4115 = vpop.f32.mrf.mxu0
        %v4116 = vadd.f32 %v3941, %v4115
        %4117 = vmatprep.mubr.bf16.mxu0 0
        %4118 = vmatmul.mubr.bf16.gmra.mxu0 %v4013
        %v4119 = vpop.f32.mrf.mxu0
        %v4120 = vadd.f32 %v3946, %v4119
        %v4121 = vpop.f32.mrf.mxu0
        %v4122 = vadd.f32 %v3946, %v4121
        %v4123 = vpop.f32.mrf.mxu0
        %v4124 = vadd.f32 %v3951, %v4123
        %v4125 = vpop.f32.mrf.mxu0
        %v4126 = vadd.f32 %v3951, %v4125
        %4127 = vmatprep.mubr.bf16.mxu0 0
        %4128 = vmatmul.mubr.bf16.gmra.mxu0 %v4016
        %v4129 = vpop.f32.mrf.mxu0
        %v4130 = vadd.f32 %v3956, %v4129
        %v4131 = vpop.f32.mrf.mxu0
        %v4132 = vadd.f32 %v3956, %v4131
        %v4133 = vpop.f32.mrf.mxu0
        %v4134 = vadd.f32 %v3961, %v4133
        %v4135 = vpop.f32.mrf.mxu0
        %v4136 = vadd.f32 %v3961, %v4135
        %4137 = vmatprep.mubr.bf16.mxu0 0
        %4138 = vmatmul.mubr.bf16.gmra.mxu0 %v4019
        %v4139 = vpop.f32.mrf.mxu0
        %v4140 = vadd.f32 %v3966, %v4139
        %v4141 = vpop.f32.mrf.mxu0
        %v4142 = vadd.f32 %v3966, %v4141
        %v4143 = vpop.f32.mrf.mxu0
        %v4144 = vadd.f32 %v3971, %v4143
        %v4145 = vpop.f32.mrf.mxu0
        %v4146 = vadd.f32 %v3971, %v4145
        %4147 = vmatprep.mubr.bf16.mxu0 0
        %4148 = vmatmul.mubr.bf16.gmra.mxu0 %v4022
        %v4149 = vpop.f32.mrf.mxu0
        %v4150 = vadd.f32 %v3976, %v4149
        %v4151 = vpop.f32.mrf.mxu0
        %v4152 = vadd.f32 %v3976, %v4151
        %v4153 = vpop.f32.mrf.mxu0
        %v4154 = vadd.f32 %v3981, %v4153
        %v4155 = vpop.f32.mrf.mxu0
        %v4156 = vadd.f32 %v3981, %v4155
        %4157 = vmatprep.mubr.bf16.mxu0 0
        %4158 = vmatmul.mubr.bf16.gmra.mxu0 %v4025
        %v4159 = vpop.f32.mrf.mxu0
        %v4160 = vadd.f32 %v3986, %v4159
        %v4161 = vpop.f32.mrf.mxu0
        %v4162 = vadd.f32 %v3986, %v4161
        %v4163 = vpop.f32.mrf.mxu0
        %v4164 = vadd.f32 %v3991, %v4163
        %v4165 = vpop.f32.mrf.mxu0
        %v4166 = vadd.f32 %v3991, %v4165
        %4167 = vdwg.mxu0
        %4168 = vst [vmem:[%s248] sm:$0xff] %v4110
        %4169 = vst [vmem:[%s248 + $0x8] sm:$0xff] %v4112
        %4170 = vst [vmem:[%s248 + $0x10] sm:$0xff] %v4114
        %4171 = vst [vmem:[%s248 + $0x18] sm:$0xff] %v4116
        %4172 = vst [vmem:[%s248 + $0x20] sm:$0xff] %v4120
        %4173 = vst [vmem:[%s248 + $0x28] sm:$0xff] %v4122
        %4174 = vst [vmem:[%s248 + $0x30] sm:$0xff] %v4124
        %4175 = vst [vmem:[%s248 + $0x38] sm:$0xff] %v4126
        %4176 = vst [vmem:[%s248 + $0x40] sm:$0xff] %v4130
        %4177 = vst [vmem:[%s248 + $0x48] sm:$0xff] %v4132
        %4178 = vst [vmem:[%s248 + $0x50] sm:$0xff] %v4134
        %4179 = vst [vmem:[%s248 + $0x58] sm:$0xff] %v4136
        %4180 = vst [vmem:[%s255] sm:$0xff] %v4140
        %4181 = vst [vmem:[%s255 + $0x8] sm:$0xff] %v4142
        %4182 = vst [vmem:[%s255 + $0x10] sm:$0xff] %v4144
        %4183 = vst [vmem:[%s255 + $0x18] sm:$0xff] %v4146
        %4184 = vst [vmem:[%s255 + $0x20] sm:$0xff] %v4150
        %4185 = vst [vmem:[%s255 + $0x28] sm:$0xff] %v4152
        %4186 = vst [vmem:[%s255 + $0x30] sm:$0xff] %v4154
        %4187 = vst [vmem:[%s255 + $0x38] sm:$0xff] %v4156
        %4188 = vst [vmem:[%s255 + $0x40] sm:$0xff] %v4160
        %4189 = vst [vmem:[%s255 + $0x48] sm:$0xff] %v4162
        %4190 = vst [vmem:[%s255 + $0x50] sm:$0xff] %v4164
        %4191 = vst [vmem:[%s255 + $0x58] sm:$0xff] %v4166
        %s4192 = sand.u32 %s142, 1
        %s4193 = scalar_lea.sflag [#allocation4], %s4192
        %s4194 = sand.u32 %s142, 1
        %s4195 = smul.addr %s4194, 96
        %s4196 = scalar_lea.vmem [#allocation3], %s4195
        %s4197 = sand.u32 %s168, 1
        %s4198 = scalar_lea.sflag [#allocation6], %s4197
        %s4199 = sand.u32 %s168, 1
        %s4200 = smul.addr %s4199, 96
        %s4201 = scalar_lea.vmem [#allocation5], %s4200
        // Predicated region
        $region41: #{tpu_custom_call.1} parent=39 // pred_check
          %p4202 = pneg %p152
        $region42: #{tpu_custom_call.1} parent=39 // pred_check_branch
          %4204 = sbr.rel (%p4202) target = $region44
        $region43: #{tpu_custom_call.1} parent=39 // pred_region
          %s4206 = ssub.s32 1536, 1536
          %4207 = vsyncadd %s4193, %s4206
          %s4208 = smul.addr %s24, 12
          %s4209 = smul.addr %s4208, 128
          %s4210 = scalar_lea.hbm %s5, %s4209
          %s4211 = sshll.u32 %s4196, 4
          %s4212 = int_to_ptr.vmem [resolvable:$true] %s4211
          %4217 = dma.vmem_to_hbm [thread:$0]  %s4212, 1536, %s4210, %s4193, 256, 256, 16
        $region44: #{tpu_custom_call.1} parent=39 // pred_fallthru
          _
        // Predicated region
        $region45: #{tpu_custom_call.1} parent=39 // pred_check
          %p4218 = pneg %p178
        $region46: #{tpu_custom_call.1} parent=39 // pred_check_branch
          %4220 = sbr.rel (%p4218) target = $region48
        $region47: #{tpu_custom_call.1} parent=39 // pred_region
          %s4222 = ssub.s32 1536, 1536
          %4223 = vsyncadd %s4198, %s4222
          %s4224 = smul.addr %s24, 12
          %s4225 = smul.addr %s4224, 128
          %s4226 = scalar_lea.hbm %s6, %s4225
          %s4227 = sshll.u32 %s4201, 4
          %s4228 = int_to_ptr.vmem [resolvable:$true] %s4227
          %4233 = dma.vmem_to_hbm [thread:$0]  %s4228, 1536, %s4226, %s4198, 256, 256, 16
        $region48: #{tpu_custom_call.1} parent=39 // pred_fallthru
          _
      $region40: #{tpu_custom_call.1} parent=5 // pred_fallthru
        _
      %p4234 = scmp.le.s32.totalorder 2, %s19
      // Predicated region
      $region49: #{tpu_custom_call.1} parent=5 // pred_check
        %p4235 = pneg %p4234
      $region50: #{tpu_custom_call.1} parent=5 // pred_check_branch
        %4237 = sbr.rel (%p4235) target = $region52
      $region51: #{tpu_custom_call.1} parent=5 // pred_region
        %s4238 = ssub.s32 %s19, 2
        // Predicated region
        $region53: #{tpu_custom_call.1} parent=51 // pred_check
          %p4239 = pneg %p158
        $region54: #{tpu_custom_call.1} parent=51 // pred_check_branch
          %4241 = sbr.rel (%p4239) target = $region56
        $region55: #{tpu_custom_call.1} parent=51 // pred_region
          %s4242 = sand.u32 %s143, 1
          %s4243 = scalar_lea.sflag [#allocation4], %s4242
          %s4244 = sand.u32 %s143, 1
          %s4245 = smul.addr %s4244, 96
          %s4246 = scalar_lea.vmem [#allocation3], %s4245
          %4247 = dma.done %s4243, 1536
        $region56: #{tpu_custom_call.1} parent=51 // pred_fallthru
          _
        // Predicated region
        $region57: #{tpu_custom_call.1} parent=51 // pred_check
          %p4248 = pneg %p184
        $region58: #{tpu_custom_call.1} parent=51 // pred_check_branch
          %4250 = sbr.rel (%p4248) target = $region60
        $region59: #{tpu_custom_call.1} parent=51 // pred_region
          %s4251 = sand.u32 %s169, 1
          %s4252 = scalar_lea.sflag [#allocation6], %s4251
          %s4253 = sand.u32 %s169, 1
          %s4254 = smul.addr %s4253, 96
          %s4255 = scalar_lea.vmem [#allocation5], %s4254
          %4256 = dma.done %s4252, 1536
        $region60: #{tpu_custom_call.1} parent=51 // pred_fallthru
          _
      $region52: #{tpu_custom_call.1} parent=5 // pred_fallthru
        _
    $region6: #{tpu_custom_call.1} parent=1 // loop_footer
      %s23 = sadd.s32 1, %s19
    $region7: #{tpu_custom_call.1} parent=1 // loop_footer_branch
      %18 = sbr.rel target = $region3
    $region8: #{tpu_custom_call.1} parent=1 // loop_exit
      _
    %4257 = vsyncpa [#allocation4], 1
    %s4258 = scalar_lea.sflag [#allocation4], 1
    %4259 = vsyncpa %s4258, 1
    %4260 = vsyncpa [#allocation6], 1
    %s4261 = scalar_lea.sflag [#allocation6], 1
    %4262 = vsyncpa %s4261, 1

</llo_original>
